<compile_context>
chip_gen: v6e
topology: v6e:2x2x1
jax: 0.10.0
libtpu: 0.0.40
codegen_flags: <defaults>
</compile_context>

<pallas_src>
import jax
import jax.numpy as jnp
from jax.experimental import pallas as pl
from jax.experimental.pallas import tpu as pltpu

# ----------------------------- config (small, bert-mini-like) -----------------------------
B = 2            # batch
S = 8            # sequence length
H = 32           # hidden dim
NH = 2           # attention heads
DH = H // NH     # head dim
FF = 64          # FFN intermediate dim
V = 100          # vocab size
VPAD = 128       # vocab padded to a full lane group (lane-dense one-hot gather)
MAXP = 32        # max position embeddings
NTYPE = 2        # token type vocab
L = 2            # encoder layers
C = 3            # n_classes
CPAD = 128       # classifier output padded to a full lane group (lane-dense store)
EPS = 1e-12      # BERT LayerNorm eps
SCALE = 1.0 / (DH ** 0.5)


# ----------------------------- shared math helpers (kernel + reference) -----------------------------
def _layernorm(x, g, b):
    mu = jnp.mean(x, axis=-1, keepdims=True)
    var = jnp.mean((x - mu) ** 2, axis=-1, keepdims=True)
    return (x - mu) * jax.lax.rsqrt(var + EPS) * g + b


def _gelu(x):
    # tanh-approx GELU (EUP-friendly).  TODO(synk): HF default is exact erf-GELU.
    return 0.5 * x * (1.0 + jnp.tanh(0.7978845608028654 * (x + 0.044715 * x * x * x)))


def _mm(a, b):
    # bf16 at the MXU inputs, f32 accumulate (review: v6e/v7x MXU is bf16-native; elementwise
    # math around it stays f32 so v5e's f32-only VPU/EUP is unaffected).
    return jnp.dot(a.astype(jnp.bfloat16), b.astype(jnp.bfloat16),
                   preferred_element_type=jnp.float32)


def _qkt(a, b):
    # a @ b.T without materializing a transpose (MXU handles the transposed contraction).
    return jax.lax.dot_general(a.astype(jnp.bfloat16), b.astype(jnp.bfloat16),
                               dimension_numbers=(((1,), (1,)), ((), ())),
                               preferred_element_type=jnp.float32)


# ----------------------------- fused forward kernel (grid over layers) -----------------------------
def fused_bert_kernel(idx_ref, wemb_ref, stat_ref, eg_ref, eb_ref, mask_ref,
                      wq_ref, bq_ref, wk_ref, bk_ref, wv_ref, bv_ref, wo_ref, bo_ref,
                      ln1g_ref, ln1b_ref, w1_ref, b1_ref, w2_ref, b2_ref,
                      ln2g_ref, ln2b_ref,
                      pool_ref, wc1_ref, bc1_ref, wc2_ref, bc2_ref,
                      o_ref, x_ref):
    layer = pl.program_id(0)

    # --- first grid step: embedding lookup (one-hot matmul gather, exact in f32) + LayerNorm ---
    @pl.when(layer == 0)
    def _embed():
        ids = idx_ref[...]                                               # [B*S, 1] int32
        cols = jax.lax.broadcasted_iota(jnp.int32, (B * S, VPAD), 1)
        onehot = (ids == cols).astype(jnp.float32)                       # [B*S, VPAD], lane-dense
        emb = jnp.dot(onehot, wemb_ref[...],
                      preferred_element_type=jnp.float32) + stat_ref[...]
        x_ref[...] = _layernorm(emb, eg_ref[...], eb_ref[...])

    # --- every grid step: one encoder layer on the flattened [B*S, H] slab ---
    x = x_ref[...]                                                       # [B*S, H] f32
    am = mask_ref[...]                                                   # [B*S, B*S] additive mask
    xb = x.astype(jnp.bfloat16)

    attn = jnp.zeros((B * S, H), jnp.float32)
    for h in range(NH):                                                  # unrolled; pure MXU work,
        q = _mm(xb, wq_ref[h]) + bq_ref[h]                               # no lane slices/concats
        k = _mm(xb, wk_ref[h]) + bk_ref[h]
        v = _mm(xb, wv_ref[h]) + bv_ref[h]
        s = _qkt(q, k) * SCALE + am                                      # [B*S, B*S]
        s = s - jnp.max(s, axis=-1, keepdims=True)
        p = jnp.exp(s)
        p = p * pl.reciprocal(jnp.sum(p, axis=-1, keepdims=True), approx=True)
        attn = attn + _mm(_mm(p, v), wo_ref[h])                          # per-head output proj, accumulated
    x = _layernorm(x + attn + bo_ref[...], ln1g_ref[...], ln1b_ref[...])

    hid = _gelu(_mm(x, w1_ref[...]) + b1_ref[...])
    y = _mm(hid, w2_ref[...]) + b2_ref[...]
    x = _layernorm(x + y, ln2g_ref[...], ln2b_ref[...])
    x_ref[...] = x                                                       # carry to next layer step

    # --- last grid step: sum-pool via pooling matmul + classifier MLP (lane-dense padded output) ---
    @pl.when(layer == L - 1)
    def _classify():
        pooled = jnp.dot(pool_ref[...], x, preferred_element_type=jnp.float32)   # [B, H], exact sum
        z = jnp.tanh(_mm(pooled, wc1_ref[...]) + bc1_ref[...])
        o_ref[...] = _mm(z, wc2_ref[...]) + bc2_ref[...]                 # [B, 128] dense store


def _const_spec(shape):
    nd = len(shape)
    return pl.BlockSpec(tuple(shape), lambda l, _nd=nd: (0,) * _nd)


def _layer_spec(shape):
    nd = len(shape)
    return pl.BlockSpec((None,) + tuple(shape[1:]),
                        lambda l, _nd=nd: (l,) + (0,) * (_nd - 1))


def fused_forward_call(kp, idx_col, bigmask):
    in_specs = [
        _const_spec((B * S, 1)),                                   # token ids
        _const_spec((VPAD, H)),                                    # padded word embedding table
        _const_spec((B * S, H)),                                   # position + type embedding slab
        _const_spec((1, H)), _const_spec((1, H)),                  # embedding LayerNorm g, b
        _const_spec((B * S, B * S)),                               # block-diag + padding mask
        _layer_spec((L, NH, H, DH)), _layer_spec((L, NH, 1, DH)),  # wq, bq   (streamed per layer)
        _layer_spec((L, NH, H, DH)), _layer_spec((L, NH, 1, DH)),  # wk, bk
        _layer_spec((L, NH, H, DH)), _layer_spec((L, NH, 1, DH)),  # wv, bv
        _layer_spec((L, NH, DH, H)), _layer_spec((L, 1, H)),       # wo, bo
        _layer_spec((L, 1, H)), _layer_spec((L, 1, H)),            # ln1 g, b
        _layer_spec((L, H, FF)), _layer_spec((L, 1, FF)),          # w1, b1
        _layer_spec((L, FF, H)), _layer_spec((L, 1, H)),           # w2, b2
        _layer_spec((L, 1, H)), _layer_spec((L, 1, H)),            # ln2 g, b
        _const_spec((B, B * S)),                                   # pooling matrix
        _const_spec((H, H)), _const_spec((1, H)),                  # classifier wc1, bc1
        _const_spec((H, CPAD)), _const_spec((1, CPAD)),            # classifier wc2, bc2 (padded)
    ]
    return pl.pallas_call(
        fused_bert_kernel,
        out_shape=jax.ShapeDtypeStruct((B, CPAD), jnp.float32),
        grid_spec=pltpu.PrefetchScalarGridSpec(
            num_scalar_prefetch=0,
            grid=(L,),
            in_specs=in_specs,
            out_specs=pl.BlockSpec((B, CPAD), lambda l: (0, 0)),
            scratch_shapes=[pltpu.VMEM((B * S, H), jnp.float32)],   # activation carried across layers
        ),
        compiler_params=pltpu.CompilerParams(dimension_semantics=("arbitrary",)),
    )(idx_col, kp['word_emb_pad'], kp['static_emb'], kp['emb_ln_g'], kp['emb_ln_b'], bigmask,
      kp['wq'], kp['bq'], kp['wk'], kp['bk'], kp['wv'], kp['bv'], kp['wo'], kp['bo'],
      kp['ln1_g'], kp['ln1_b'], kp['w1'], kp['b1'], kp['w2'], kp['b2'], kp['ln2_g'], kp['ln2_b'],
      kp['pool'], kp['wc1'], kp['bc1'], kp['wc2_pad'], kp['bc2_pad'])


# ----------------------------- wrapper: all layout plumbing lives here -----------------------------
@jax.jit
def bert_classifier_forward(kparams, indices, mask):
    idx_col = indices.reshape(B * S, 1).astype(jnp.int32)
    # Block-diagonal (no cross-batch attention) + key-padding additive mask over the flattened slab.
    tok_batch = jnp.arange(B * S, dtype=jnp.int32) // S
    same_batch = (tok_batch[:, None] == tok_batch[None, :]).astype(jnp.float32)
    key_valid = mask.astype(jnp.float32).reshape(1, B * S)
    bigmask = (1.0 - same_batch * key_valid) * -1e9                        # [B*S, B*S]
    logits_pad = fused_forward_call(kparams, idx_col, bigmask)             # [B, 128]
    return logits_pad[:, :C]


def prepare_params(p):
    """Derive kernel-layout params (per-head leading axes, lane padding, bf16 weights)."""
    bf16 = jnp.bfloat16

    def per_head_w(w):       # [L, H, H] -> [L, NH, H, DH]
        return w.reshape(L, H, NH, DH).transpose(0, 2, 1, 3).astype(bf16)

    def per_head_b(b):       # [L, H] -> [L, NH, 1, DH]
        return b.reshape(L, NH, 1, DH)

    tok_batch = jnp.arange(B * S) // S
    pool = (tok_batch[None, :] == jnp.arange(B)[:, None]).astype(jnp.float32)      # [B, B*S]
    static_emb = jnp.tile(p['pos_emb'][:S] + p['type_emb'][0][None, :], (B, 1))    # [B*S, H]

    return dict(
        word_emb_pad=jnp.pad(p['word_emb'], ((0, VPAD - V), (0, 0))),              # f32: exact gather
        static_emb=static_emb,
        emb_ln_g=p['emb_ln_g'].reshape(1, H), emb_ln_b=p['emb_ln_b'].reshape(1, H),
        wq=per_head_w(p['wq']), bq=per_head_b(p['bq']),
        wk=per_head_w(p['wk']), bk=per_head_b(p['bk']),
        wv=per_head_w(p['wv']), bv=per_head_b(p['bv']),
        wo=p['wo'].reshape(L, NH, DH, H).astype(bf16), bo=p['bo'].reshape(L, 1, H),
        ln1_g=p['ln1_g'].reshape(L, 1, H), ln1_b=p['ln1_b'].reshape(L, 1, H),
        w1=p['w1'].astype(bf16), b1=p['b1'].reshape(L, 1, FF),
        w2=p['w2'].astype(bf16), b2=p['b2'].reshape(L, 1, H),
        ln2_g=p['ln2_g'].reshape(L, 1, H), ln2_b=p['ln2_b'].reshape(L, 1, H),
        pool=pool,
        wc1=p['wc1'].astype(bf16), bc1=p['bc1'].reshape(1, H),
        wc2_pad=jnp.pad(p['wc2'], ((0, 0), (0, CPAD - C))).astype(bf16),
        bc2_pad=jnp.pad(p['bc2'], (0, CPAD - C)).reshape(1, CPAD),
    )


# ----------------------------- pure-JAX reference (conventional formulation) -----------------------------
def bert_classifier_reference(p, indices, mask):
    emb = p['word_emb'][indices] + p['pos_emb'][:S][None, :, :] + p['type_emb'][0][None, None, :]
    x = _layernorm(emb, p['emb_ln_g'], p['emb_ln_b'])
    addmask = ((1.0 - mask.astype(jnp.float32)) * -1e9)[:, None, None, :]
    for l in range(L):
        q = (_mm(x, p['wq'][l]) + p['bq'][l]).reshape(B, S, NH, DH)
        k = (_mm(x, p['wk'][l]) + p['bk'][l]).reshape(B, S, NH, DH)
        v = (_mm(x, p['wv'][l]) + p['bv'][l]).reshape(B, S, NH, DH)
        s = jnp.einsum('bqhd,bkhd->bhqk', q.astype(jnp.bfloat16), k.astype(jnp.bfloat16),
                       preferred_element_type=jnp.float32) * SCALE + addmask
        pr = jax.nn.softmax(s, axis=-1)
        ctx = jnp.einsum('bhqk,bkhd->bqhd', pr.astype(jnp.bfloat16), v.astype(jnp.bfloat16),
                         preferred_element_type=jnp.float32).reshape(B, S, H)
        x = _layernorm(x + _mm(ctx, p['wo'][l]) + p['bo'][l], p['ln1_g'][l], p['ln1_b'][l])
        hid = _gelu(_mm(x, p['w1'][l]) + p['b1'][l])
        x = _layernorm(x + _mm(hid, p['w2'][l]) + p['b2'][l], p['ln2_g'][l], p['ln2_b'][l])
    pooled = jnp.sum(x, axis=1)
    z = jnp.tanh(_mm(pooled, p['wc1']) + p['bc1'])
    return _mm(z, p['wc2']) + p['bc2']


# ----------------------------- deterministic parameter init (logical layout) -----------------------------
def init_params(key):
    keys = iter(jax.random.split(key, 40))

    def nrm(shape):
        return 0.02 * jax.random.normal(next(keys), shape, jnp.float32)

    def nrm_stack(shape):
        return jnp.stack([nrm(shape) for _ in range(L)])

    return dict(
        word_emb=nrm((V, H)), pos_emb=nrm((MAXP, H)), type_emb=nrm((NTYPE, H)),
        emb_ln_g=jnp.ones((H,), jnp.float32), emb_ln_b=jnp.zeros((H,), jnp.float32),
        wq=nrm_stack((H, H)), bq=nrm_stack((H,)),
        wk=nrm_stack((H, H)), bk=nrm_stack((H,)),
        wv=nrm_stack((H, H)), bv=nrm_stack((H,)),
        wo=nrm_stack((H, H)), bo=nrm_stack((H,)),
        ln1_g=jnp.ones((L, H), jnp.float32), ln1_b=jnp.zeros((L, H), jnp.float32),
        w1=nrm_stack((H, FF)), b1=nrm_stack((FF,)),
        w2=nrm_stack((FF, H)), b2=nrm_stack((H,)),
        ln2_g=jnp.ones((L, H), jnp.float32), ln2_b=jnp.zeros((L, H), jnp.float32),
        wc1=nrm((H, H)), bc1=nrm((H,)),
        wc2=nrm((H, C)), bc2=nrm((C,)),
    )


# ----------------------------- main -----------------------------
if __name__ == "__main__":
    key = jax.random.PRNGKey(0)
    k_param, k_idx = jax.random.split(key)
    params = init_params(k_param)
    kparams = prepare_params(params)

    indices = jax.random.randint(k_idx, (B, S), 0, V, dtype=jnp.int32)
    mask = jnp.array([[1, 1, 1, 1, 1, 1, 1, 1],
                      [1, 1, 1, 1, 1, 0, 0, 0]], dtype=jnp.int32)

    logits = bert_classifier_forward(kparams, indices, mask)
    jax.block_until_ready(logits)

    ref = bert_classifier_reference(params, indices, mask)
    assert logits.shape == (B, C)
    # bf16-at-MXU + approx reciprocal in the kernel softmax -> allow a small tolerance.
    assert jnp.allclose(logits, ref, atol=2e-3, rtol=2e-2), (logits, ref)

    print("KERNEL_OK")
</pallas_src>

<mosaic_0001>
module attributes {stable_mosaic.version = 11 : i64} {
  func.func @fused_bert_kernel(%arg0: i32, %arg1: memref<16x1xi32, #tpu.memory_space<vmem>>, %arg2: memref<128x32xf32, #tpu.memory_space<vmem>>, %arg3: memref<16x32xf32, #tpu.memory_space<vmem>>, %arg4: memref<1x32xf32, #tpu.memory_space<vmem>>, %arg5: memref<1x32xf32, #tpu.memory_space<vmem>>, %arg6: memref<16x16xf32, #tpu.memory_space<vmem>>, %arg7: memref<1x2x32x16xbf16, #tpu.memory_space<vmem>>, %arg8: memref<1x2x1x16xf32, #tpu.memory_space<vmem>>, %arg9: memref<1x2x32x16xbf16, #tpu.memory_space<vmem>>, %arg10: memref<1x2x1x16xf32, #tpu.memory_space<vmem>>, %arg11: memref<1x2x32x16xbf16, #tpu.memory_space<vmem>>, %arg12: memref<1x2x1x16xf32, #tpu.memory_space<vmem>>, %arg13: memref<1x2x16x32xbf16, #tpu.memory_space<vmem>>, %arg14: memref<1x1x32xf32, #tpu.memory_space<vmem>>, %arg15: memref<1x1x32xf32, #tpu.memory_space<vmem>>, %arg16: memref<1x1x32xf32, #tpu.memory_space<vmem>>, %arg17: memref<1x32x64xbf16, #tpu.memory_space<vmem>>, %arg18: memref<1x1x64xf32, #tpu.memory_space<vmem>>, %arg19: memref<1x64x32xbf16, #tpu.memory_space<vmem>>, %arg20: memref<1x1x32xf32, #tpu.memory_space<vmem>>, %arg21: memref<1x1x32xf32, #tpu.memory_space<vmem>>, %arg22: memref<1x1x32xf32, #tpu.memory_space<vmem>>, %arg23: memref<2x16xf32, #tpu.memory_space<vmem>>, %arg24: memref<32x32xbf16, #tpu.memory_space<vmem>>, %arg25: memref<1x32xf32, #tpu.memory_space<vmem>>, %arg26: memref<32x128xbf16, #tpu.memory_space<vmem>>, %arg27: memref<1x128xf32, #tpu.memory_space<vmem>>, %arg28: memref<2x128xf32, #tpu.memory_space<vmem>>, %arg29: memref<16x32xf32, #tpu.memory_space<vmem>>) attributes {dimension_semantics = [#tpu.dimension_semantics<arbitrary>], iteration_bounds = array<i64: 2>, scalar_prefetch = 0 : i64, scratch_operands = 1 : i64, tpu.core_type = #tpu.core_type<tc>, window_params = [{pipeline_mode = #tpu.pipeline_mode<synchronous>, transform_indices = @transform_0, window_bounds = array<i64: 16, 1>}, {pipeline_mode = #tpu.pipeline_mode<synchronous>, transform_indices = @transform_1, window_bounds = array<i64: 128, 32>}, {pipeline_mode = #tpu.pipeline_mode<synchronous>, transform_indices = @transform_2, window_bounds = array<i64: 16, 32>}, {pipeline_mode = #tpu.pipeline_mode<synchronous>, transform_indices = @transform_3, window_bounds = array<i64: 1, 32>}, {pipeline_mode = #tpu.pipeline_mode<synchronous>, transform_indices = @transform_4, window_bounds = array<i64: 1, 32>}, {pipeline_mode = #tpu.pipeline_mode<synchronous>, transform_indices = @transform_5, window_bounds = array<i64: 16, 16>}, {transform_indices = @transform_6, window_bounds = array<i64: 1, 2, 32, 16>}, {transform_indices = @transform_7, window_bounds = array<i64: 1, 2, 1, 16>}, {transform_indices = @transform_8, window_bounds = array<i64: 1, 2, 32, 16>}, {transform_indices = @transform_9, window_bounds = array<i64: 1, 2, 1, 16>}, {transform_indices = @transform_10, window_bounds = array<i64: 1, 2, 32, 16>}, {transform_indices = @transform_11, window_bounds = array<i64: 1, 2, 1, 16>}, {transform_indices = @transform_12, window_bounds = array<i64: 1, 2, 16, 32>}, {transform_indices = @transform_13, window_bounds = array<i64: 1, 1, 32>}, {transform_indices = @transform_14, window_bounds = array<i64: 1, 1, 32>}, {transform_indices = @transform_15, window_bounds = array<i64: 1, 1, 32>}, {transform_indices = @transform_16, window_bounds = array<i64: 1, 32, 64>}, {transform_indices = @transform_17, window_bounds = array<i64: 1, 1, 64>}, {transform_indices = @transform_18, window_bounds = array<i64: 1, 64, 32>}, {transform_indices = @transform_19, window_bounds = array<i64: 1, 1, 32>}, {transform_indices = @transform_20, window_bounds = array<i64: 1, 1, 32>}, {transform_indices = @transform_21, window_bounds = array<i64: 1, 1, 32>}, {pipeline_mode = #tpu.pipeline_mode<synchronous>, transform_indices = @transform_22, window_bounds = array<i64: 2, 16>}, {pipeline_mode = #tpu.pipeline_mode<synchronous>, transform_indices = @transform_23, window_bounds = array<i64: 32, 32>}, {pipeline_mode = #tpu.pipeline_mode<synchronous>, transform_indices = @transform_24, window_bounds = array<i64: 1, 32>}, {pipeline_mode = #tpu.pipeline_mode<synchronous>, transform_indices = @transform_25, window_bounds = array<i64: 32, 128>}, {pipeline_mode = #tpu.pipeline_mode<synchronous>, transform_indices = @transform_26, window_bounds = array<i64: 1, 128>}, {pipeline_mode = #tpu.pipeline_mode<synchronous>, transform_indices = @transform_27, window_bounds = array<i64: 2, 128>}]} {
    %c0_i32 = arith.constant 0 : i32
    %0 = arith.cmpi eq, %arg0, %c0_i32 : i32
    %1 = arith.extui %0 : i1 to i32
    %c0_i32_0 = arith.constant 0 : i32
    %2 = arith.cmpi ne, %1, %c0_i32_0 : i32
    scf.if %2 {
      %c0_123 = arith.constant 0 : index
      %c0_124 = arith.constant 0 : index
      %188 = vector.load %arg1[%c0_123, %c0_124] : memref<16x1xi32, #tpu.memory_space<vmem>>, vector<16x1xi32>
      %189 = tpu.iota {dimensions = array<i32: 1>} : vector<16x128xi32>
      %190 = vector.broadcast %188 : vector<16x1xi32> to vector<16x128xi32>
      %191 = arith.cmpi eq, %190, %189 : vector<16x128xi32>
      %192 = arith.extui %191 : vector<16x128xi1> to vector<16x128xi32>
      %193 = arith.sitofp %192 : vector<16x128xi32> to vector<16x128xf32>
      %c0_125 = arith.constant 0 : index
      %c0_126 = arith.constant 0 : index
      %194 = vector.load %arg2[%c0_125, %c0_126] : memref<128x32xf32, #tpu.memory_space<vmem>>, vector<128x32xf32>
      %cst_127 = arith.constant dense<0.000000e+00> : vector<16x32xf32>
      %195 = tpu.matmul %193, %194, %cst_127 {dimension_numbers = #tpu.dot_dimension_numbers<[1], [0], [0], [1], [0, 0, 1, 1], [], []>} : vector<16x128xf32>, vector<128x32xf32>, vector<16x32xf32> -> vector<16x32xf32>
      %c0_128 = arith.constant 0 : index
      %c0_129 = arith.constant 0 : index
      %196 = vector.load %arg3[%c0_128, %c0_129] : memref<16x32xf32, #tpu.memory_space<vmem>>, vector<16x32xf32>
      %197 = arith.addf %195, %196 : vector<16x32xf32>
      %c0_130 = arith.constant 0 : index
      %c0_131 = arith.constant 0 : index
      %198 = vector.load %arg4[%c0_130, %c0_131] : memref<1x32xf32, #tpu.memory_space<vmem>>, vector<1x32xf32>
      %c0_132 = arith.constant 0 : index
      %c0_133 = arith.constant 0 : index
      %199 = vector.load %arg5[%c0_132, %c0_133] : memref<1x32xf32, #tpu.memory_space<vmem>>, vector<1x32xf32>
      %cst_134 = arith.constant dense<0.000000e+00> : vector<16xf32>
      %200 = vector.multi_reduction <add>, %197, %cst_134 [1] : vector<16x32xf32> to vector<16xf32>
      %201 = vector.shape_cast %200 : vector<16xf32> to vector<16x1xf32>
      %cst_135 = arith.constant 3.200000e+01 : f32
      %202 = vector.broadcast %cst_135 : f32 to vector<16x1xf32>
      %203 = arith.divf %201, %202 : vector<16x1xf32>
      %204 = vector.broadcast %203 : vector<16x1xf32> to vector<16x32xf32>
      %205 = arith.subf %197, %204 : vector<16x32xf32>
      %206 = arith.mulf %205, %205 : vector<16x32xf32>
      %cst_136 = arith.constant dense<0.000000e+00> : vector<16xf32>
      %207 = vector.multi_reduction <add>, %206, %cst_136 [1] : vector<16x32xf32> to vector<16xf32>
      %208 = vector.shape_cast %207 : vector<16xf32> to vector<16x1xf32>
      %cst_137 = arith.constant 3.200000e+01 : f32
      %209 = vector.broadcast %cst_137 : f32 to vector<16x1xf32>
      %210 = arith.divf %208, %209 : vector<16x1xf32>
      %211 = vector.broadcast %203 : vector<16x1xf32> to vector<16x32xf32>
      %212 = arith.subf %197, %211 : vector<16x32xf32>
      %cst_138 = arith.constant 9.99999996E-13 : f32
      %213 = vector.broadcast %cst_138 : f32 to vector<16x1xf32>
      %214 = arith.addf %210, %213 : vector<16x1xf32>
      %215 = math.rsqrt %214 : vector<16x1xf32>
      %216 = vector.broadcast %215 : vector<16x1xf32> to vector<16x32xf32>
      %217 = arith.mulf %212, %216 : vector<16x32xf32>
      %218 = vector.broadcast %198 : vector<1x32xf32> to vector<16x32xf32>
      %219 = arith.mulf %217, %218 : vector<16x32xf32>
      %220 = vector.broadcast %199 : vector<1x32xf32> to vector<16x32xf32>
      %221 = arith.addf %219, %220 : vector<16x32xf32>
      %c0_139 = arith.constant 0 : index
      %c0_140 = arith.constant 0 : index
      %222 = vector.load %arg29[%c0_139, %c0_140] : memref<16x32xf32, #tpu.memory_space<vmem>>, vector<16x32xf32>
      tpu.vector_store %arg29[%c0_139, %c0_140], %221 {strides = array<i32>} : memref<16x32xf32, #tpu.memory_space<vmem>>, vector<16x32xf32>,
    } else {
    }
    %c0 = arith.constant 0 : index
    %c0_1 = arith.constant 0 : index
    %3 = vector.load %arg29[%c0, %c0_1] : memref<16x32xf32, #tpu.memory_space<vmem>>, vector<16x32xf32>
    %c0_2 = arith.constant 0 : index
    %c0_3 = arith.constant 0 : index
    %4 = vector.load %arg6[%c0_2, %c0_3] : memref<16x16xf32, #tpu.memory_space<vmem>>, vector<16x16xf32>
    %5 = arith.truncf %3 : vector<16x32xf32> to vector<16x32xbf16>
    %cst = arith.constant 0.000000e+00 : f32
    %6 = vector.broadcast %cst : f32 to vector<16x32xf32>
    %c0_4 = arith.constant 0 : index
    %c0_5 = arith.constant 0 : index
    %c0_6 = arith.constant 0 : index
    %c0_7 = arith.constant 0 : index
    %7 = vector.load %arg7[%c0_4, %c0_5, %c0_6, %c0_7] : memref<1x2x32x16xbf16, #tpu.memory_space<vmem>>, vector<1x1x32x16xbf16>
    %8 = vector.shape_cast %7 : vector<1x1x32x16xbf16> to vector<32x16xbf16>
    %cst_8 = arith.constant dense<0.000000e+00> : vector<16x16xf32>
    %9 = tpu.matmul %5, %8, %cst_8 {dimension_numbers = #tpu.dot_dimension_numbers<[1], [0], [0], [1], [0, 0, 1, 1], [], []>} : vector<16x32xbf16>, vector<32x16xbf16>, vector<16x16xf32> -> vector<16x16xf32>
    %c0_9 = arith.constant 0 : index
    %c0_10 = arith.constant 0 : index
    %c0_11 = arith.constant 0 : index
    %c0_12 = arith.constant 0 : index
    %10 = vector.load %arg8[%c0_9, %c0_10, %c0_11, %c0_12] : memref<1x2x1x16xf32, #tpu.memory_space<vmem>>, vector<1x1x1x16xf32>
    %11 = vector.shape_cast %10 : vector<1x1x1x16xf32> to vector<1x16xf32>
    %12 = vector.broadcast %11 : vector<1x16xf32> to vector<16x16xf32>
    %13 = arith.addf %9, %12 : vector<16x16xf32>
    %c0_13 = arith.constant 0 : index
    %c0_14 = arith.constant 0 : index
    %c0_15 = arith.constant 0 : index
    %c0_16 = arith.constant 0 : index
    %14 = vector.load %arg9[%c0_13, %c0_14, %c0_15, %c0_16] : memref<1x2x32x16xbf16, #tpu.memory_space<vmem>>, vector<1x1x32x16xbf16>
    %15 = vector.shape_cast %14 : vector<1x1x32x16xbf16> to vector<32x16xbf16>
    %cst_17 = arith.constant dense<0.000000e+00> : vector<16x16xf32>
    %16 = tpu.matmul %5, %15, %cst_17 {dimension_numbers = #tpu.dot_dimension_numbers<[1], [0], [0], [1], [0, 0, 1, 1], [], []>} : vector<16x32xbf16>, vector<32x16xbf16>, vector<16x16xf32> -> vector<16x16xf32>
    %c0_18 = arith.constant 0 : index
    %c0_19 = arith.constant 0 : index
    %c0_20 = arith.constant 0 : index
    %c0_21 = arith.constant 0 : index
    %17 = vector.load %arg10[%c0_18, %c0_19, %c0_20, %c0_21] : memref<1x2x1x16xf32, #tpu.memory_space<vmem>>, vector<1x1x1x16xf32>
    %18 = vector.shape_cast %17 : vector<1x1x1x16xf32> to vector<1x16xf32>
    %19 = vector.broadcast %18 : vector<1x16xf32> to vector<16x16xf32>
    %20 = arith.addf %16, %19 : vector<16x16xf32>
    %c0_22 = arith.constant 0 : index
    %c0_23 = arith.constant 0 : index
    %c0_24 = arith.constant 0 : index
    %c0_25 = arith.constant 0 : index
    %21 = vector.load %arg11[%c0_22, %c0_23, %c0_24, %c0_25] : memref<1x2x32x16xbf16, #tpu.memory_space<vmem>>, vector<1x1x32x16xbf16>
    %22 = vector.shape_cast %21 : vector<1x1x32x16xbf16> to vector<32x16xbf16>
    %cst_26 = arith.constant dense<0.000000e+00> : vector<16x16xf32>
    %23 = tpu.matmul %5, %22, %cst_26 {dimension_numbers = #tpu.dot_dimension_numbers<[1], [0], [0], [1], [0, 0, 1, 1], [], []>} : vector<16x32xbf16>, vector<32x16xbf16>, vector<16x16xf32> -> vector<16x16xf32>
    %c0_27 = arith.constant 0 : index
    %c0_28 = arith.constant 0 : index
    %c0_29 = arith.constant 0 : index
    %c0_30 = arith.constant 0 : index
    %24 = vector.load %arg12[%c0_27, %c0_28, %c0_29, %c0_30] : memref<1x2x1x16xf32, #tpu.memory_space<vmem>>, vector<1x1x1x16xf32>
    %25 = vector.shape_cast %24 : vector<1x1x1x16xf32> to vector<1x16xf32>
    %26 = vector.broadcast %25 : vector<1x16xf32> to vector<16x16xf32>
    %27 = arith.addf %23, %26 : vector<16x16xf32>
    %28 = arith.truncf %13 : vector<16x16xf32> to vector<16x16xbf16>
    %29 = arith.truncf %20 : vector<16x16xf32> to vector<16x16xbf16>
    %cst_31 = arith.constant dense<0.000000e+00> : vector<16x16xf32>
    %30 = tpu.matmul %28, %29, %cst_31 {dimension_numbers = #tpu.dot_dimension_numbers<[1], [1], [0], [0], [0, 0, 1, 0], [], []>} : vector<16x16xbf16>, vector<16x16xbf16>, vector<16x16xf32> -> vector<16x16xf32>
    %cst_32 = arith.constant 2.500000e-01 : f32
    %31 = vector.broadcast %cst_32 : f32 to vector<16x16xf32>
    %32 = arith.mulf %30, %31 : vector<16x16xf32>
    %33 = arith.addf %32, %4 : vector<16x16xf32>
    %cst_33 = arith.constant dense<0xFF800000> : vector<16xf32>
    %34 = vector.multi_reduction <maximumf>, %33, %cst_33 [1] : vector<16x16xf32> to vector<16xf32>
    %35 = vector.shape_cast %34 : vector<16xf32> to vector<16x1xf32>
    %36 = vector.broadcast %35 : vector<16x1xf32> to vector<16x16xf32>
    %37 = arith.subf %33, %36 : vector<16x16xf32>
    %38 = math.exp %37 : vector<16x16xf32>
    %cst_34 = arith.constant dense<0.000000e+00> : vector<16xf32>
    %39 = vector.multi_reduction <add>, %38, %cst_34 [1] : vector<16x16xf32> to vector<16xf32>
    %40 = vector.shape_cast %39 : vector<16xf32> to vector<16x1xf32>
    %41 = tpu.reciprocal %40 {approx = true} : vector<16x1xf32> -> vector<16x1xf32>
    %42 = vector.broadcast %41 : vector<16x1xf32> to vector<16x16xf32>
    %43 = arith.mulf %38, %42 : vector<16x16xf32>
    %44 = arith.truncf %43 : vector<16x16xf32> to vector<16x16xbf16>
    %45 = arith.truncf %27 : vector<16x16xf32> to vector<16x16xbf16>
    %cst_35 = arith.constant dense<0.000000e+00> : vector<16x16xf32>
    %46 = tpu.matmul %44, %45, %cst_35 {dimension_numbers = #tpu.dot_dimension_numbers<[1], [0], [0], [1], [0, 0, 1, 1], [], []>} : vector<16x16xbf16>, vector<16x16xbf16>, vector<16x16xf32> -> vector<16x16xf32>
    %c0_36 = arith.constant 0 : index
    %c0_37 = arith.constant 0 : index
    %c0_38 = arith.constant 0 : index
    %c0_39 = arith.constant 0 : index
    %47 = vector.load %arg13[%c0_36, %c0_37, %c0_38, %c0_39] : memref<1x2x16x32xbf16, #tpu.memory_space<vmem>>, vector<1x1x16x32xbf16>
    %48 = vector.shape_cast %47 : vector<1x1x16x32xbf16> to vector<16x32xbf16>
    %49 = arith.truncf %46 : vector<16x16xf32> to vector<16x16xbf16>
    %cst_40 = arith.constant dense<0.000000e+00> : vector<16x32xf32>
    %50 = tpu.matmul %49, %48, %cst_40 {dimension_numbers = #tpu.dot_dimension_numbers<[1], [0], [0], [1], [0, 0, 1, 1], [], []>} : vector<16x16xbf16>, vector<16x32xbf16>, vector<16x32xf32> -> vector<16x32xf32>
    %51 = arith.addf %6, %50 : vector<16x32xf32>
    %c0_41 = arith.constant 0 : index
    %c1 = arith.constant 1 : index
    %c0_42 = arith.constant 0 : index
    %c0_43 = arith.constant 0 : index
    %52 = vector.load %arg7[%c0_41, %c1, %c0_42, %c0_43] : memref<1x2x32x16xbf16, #tpu.memory_space<vmem>>, vector<1x1x32x16xbf16>
    %53 = vector.shape_cast %52 : vector<1x1x32x16xbf16> to vector<32x16xbf16>
    %cst_44 = arith.constant dense<0.000000e+00> : vector<16x16xf32>
    %54 = tpu.matmul %5, %53, %cst_44 {dimension_numbers = #tpu.dot_dimension_numbers<[1], [0], [0], [1], [0, 0, 1, 1], [], []>} : vector<16x32xbf16>, vector<32x16xbf16>, vector<16x16xf32> -> vector<16x16xf32>
    %c0_45 = arith.constant 0 : index
    %c1_46 = arith.constant 1 : index
    %c0_47 = arith.constant 0 : index
    %c0_48 = arith.constant 0 : index
    %55 = vector.load %arg8[%c0_45, %c1_46, %c0_47, %c0_48] : memref<1x2x1x16xf32, #tpu.memory_space<vmem>>, vector<1x1x1x16xf32>
    %56 = vector.shape_cast %55 : vector<1x1x1x16xf32> to vector<1x16xf32>
    %57 = vector.broadcast %56 : vector<1x16xf32> to vector<16x16xf32>
    %58 = arith.addf %54, %57 : vector<16x16xf32>
    %c0_49 = arith.constant 0 : index
    %c1_50 = arith.constant 1 : index
    %c0_51 = arith.constant 0 : index
    %c0_52 = arith.constant 0 : index
    %59 = vector.load %arg9[%c0_49, %c1_50, %c0_51, %c0_52] : memref<1x2x32x16xbf16, #tpu.memory_space<vmem>>, vector<1x1x32x16xbf16>
    %60 = vector.shape_cast %59 : vector<1x1x32x16xbf16> to vector<32x16xbf16>
    %cst_53 = arith.constant dense<0.000000e+00> : vector<16x16xf32>
    %61 = tpu.matmul %5, %60, %cst_53 {dimension_numbers = #tpu.dot_dimension_numbers<[1], [0], [0], [1], [0, 0, 1, 1], [], []>} : vector<16x32xbf16>, vector<32x16xbf16>, vector<16x16xf32> -> vector<16x16xf32>
    %c0_54 = arith.constant 0 : index
    %c1_55 = arith.constant 1 : index
    %c0_56 = arith.constant 0 : index
    %c0_57 = arith.constant 0 : index
    %62 = vector.load %arg10[%c0_54, %c1_55, %c0_56, %c0_57] : memref<1x2x1x16xf32, #tpu.memory_space<vmem>>, vector<1x1x1x16xf32>
    %63 = vector.shape_cast %62 : vector<1x1x1x16xf32> to vector<1x16xf32>
    %64 = vector.broadcast %63 : vector<1x16xf32> to vector<16x16xf32>
    %65 = arith.addf %61, %64 : vector<16x16xf32>
    %c0_58 = arith.constant 0 : index
    %c1_59 = arith.constant 1 : index
    %c0_60 = arith.constant 0 : index
    %c0_61 = arith.constant 0 : index
    %66 = vector.load %arg11[%c0_58, %c1_59, %c0_60, %c0_61] : memref<1x2x32x16xbf16, #tpu.memory_space<vmem>>, vector<1x1x32x16xbf16>
    %67 = vector.shape_cast %66 : vector<1x1x32x16xbf16> to vector<32x16xbf16>
    %cst_62 = arith.constant dense<0.000000e+00> : vector<16x16xf32>
    %68 = tpu.matmul %5, %67, %cst_62 {dimension_numbers = #tpu.dot_dimension_numbers<[1], [0], [0], [1], [0, 0, 1, 1], [], []>} : vector<16x32xbf16>, vector<32x16xbf16>, vector<16x16xf32> -> vector<16x16xf32>
    %c0_63 = arith.constant 0 : index
    %c1_64 = arith.constant 1 : index
    %c0_65 = arith.constant 0 : index
    %c0_66 = arith.constant 0 : index
    %69 = vector.load %arg12[%c0_63, %c1_64, %c0_65, %c0_66] : memref<1x2x1x16xf32, #tpu.memory_space<vmem>>, vector<1x1x1x16xf32>
    %70 = vector.shape_cast %69 : vector<1x1x1x16xf32> to vector<1x16xf32>
    %71 = vector.broadcast %70 : vector<1x16xf32> to vector<16x16xf32>
    %72 = arith.addf %68, %71 : vector<16x16xf32>
    %73 = arith.truncf %58 : vector<16x16xf32> to vector<16x16xbf16>
    %74 = arith.truncf %65 : vector<16x16xf32> to vector<16x16xbf16>
    %cst_67 = arith.constant dense<0.000000e+00> : vector<16x16xf32>
    %75 = tpu.matmul %73, %74, %cst_67 {dimension_numbers = #tpu.dot_dimension_numbers<[1], [1], [0], [0], [0, 0, 1, 0], [], []>} : vector<16x16xbf16>, vector<16x16xbf16>, vector<16x16xf32> -> vector<16x16xf32>
    %cst_68 = arith.constant 2.500000e-01 : f32
    %76 = vector.broadcast %cst_68 : f32 to vector<16x16xf32>
    %77 = arith.mulf %75, %76 : vector<16x16xf32>
    %78 = arith.addf %77, %4 : vector<16x16xf32>
    %cst_69 = arith.constant dense<0xFF800000> : vector<16xf32>
    %79 = vector.multi_reduction <maximumf>, %78, %cst_69 [1] : vector<16x16xf32> to vector<16xf32>
    %80 = vector.shape_cast %79 : vector<16xf32> to vector<16x1xf32>
    %81 = vector.broadcast %80 : vector<16x1xf32> to vector<16x16xf32>
    %82 = arith.subf %78, %81 : vector<16x16xf32>
    %83 = math.exp %82 : vector<16x16xf32>
    %cst_70 = arith.constant dense<0.000000e+00> : vector<16xf32>
    %84 = vector.multi_reduction <add>, %83, %cst_70 [1] : vector<16x16xf32> to vector<16xf32>
    %85 = vector.shape_cast %84 : vector<16xf32> to vector<16x1xf32>
    %86 = tpu.reciprocal %85 {approx = true} : vector<16x1xf32> -> vector<16x1xf32>
    %87 = vector.broadcast %86 : vector<16x1xf32> to vector<16x16xf32>
    %88 = arith.mulf %83, %87 : vector<16x16xf32>
    %89 = arith.truncf %88 : vector<16x16xf32> to vector<16x16xbf16>
    %90 = arith.truncf %72 : vector<16x16xf32> to vector<16x16xbf16>
    %cst_71 = arith.constant dense<0.000000e+00> : vector<16x16xf32>
    %91 = tpu.matmul %89, %90, %cst_71 {dimension_numbers = #tpu.dot_dimension_numbers<[1], [0], [0], [1], [0, 0, 1, 1], [], []>} : vector<16x16xbf16>, vector<16x16xbf16>, vector<16x16xf32> -> vector<16x16xf32>
    %c0_72 = arith.constant 0 : index
    %c1_73 = arith.constant 1 : index
    %c0_74 = arith.constant 0 : index
    %c0_75 = arith.constant 0 : index
    %92 = vector.load %arg13[%c0_72, %c1_73, %c0_74, %c0_75] : memref<1x2x16x32xbf16, #tpu.memory_space<vmem>>, vector<1x1x16x32xbf16>
    %93 = vector.shape_cast %92 : vector<1x1x16x32xbf16> to vector<16x32xbf16>
    %94 = arith.truncf %91 : vector<16x16xf32> to vector<16x16xbf16>
    %cst_76 = arith.constant dense<0.000000e+00> : vector<16x32xf32>
    %95 = tpu.matmul %94, %93, %cst_76 {dimension_numbers = #tpu.dot_dimension_numbers<[1], [0], [0], [1], [0, 0, 1, 1], [], []>} : vector<16x16xbf16>, vector<16x32xbf16>, vector<16x32xf32> -> vector<16x32xf32>
    %96 = arith.addf %51, %95 : vector<16x32xf32>
    %97 = arith.addf %3, %96 : vector<16x32xf32>
    %c0_77 = arith.constant 0 : index
    %c0_78 = arith.constant 0 : index
    %c0_79 = arith.constant 0 : index
    %98 = vector.load %arg14[%c0_77, %c0_78, %c0_79] : memref<1x1x32xf32, #tpu.memory_space<vmem>>, vector<1x1x32xf32>
    %99 = vector.shape_cast %98 : vector<1x1x32xf32> to vector<1x32xf32>
    %100 = vector.broadcast %99 : vector<1x32xf32> to vector<16x32xf32>
    %101 = arith.addf %97, %100 : vector<16x32xf32>
    %c0_80 = arith.constant 0 : index
    %c0_81 = arith.constant 0 : index
    %c0_82 = arith.constant 0 : index
    %102 = vector.load %arg15[%c0_80, %c0_81, %c0_82] : memref<1x1x32xf32, #tpu.memory_space<vmem>>, vector<1x1x32xf32>
    %103 = vector.shape_cast %102 : vector<1x1x32xf32> to vector<1x32xf32>
    %c0_83 = arith.constant 0 : index
    %c0_84 = arith.constant 0 : index
    %c0_85 = arith.constant 0 : index
    %104 = vector.load %arg16[%c0_83, %c0_84, %c0_85] : memref<1x1x32xf32, #tpu.memory_space<vmem>>, vector<1x1x32xf32>
    %105 = vector.shape_cast %104 : vector<1x1x32xf32> to vector<1x32xf32>
    %cst_86 = arith.constant dense<0.000000e+00> : vector<16xf32>
    %106 = vector.multi_reduction <add>, %101, %cst_86 [1] : vector<16x32xf32> to vector<16xf32>
    %107 = vector.shape_cast %106 : vector<16xf32> to vector<16x1xf32>
    %cst_87 = arith.constant 3.200000e+01 : f32
    %108 = vector.broadcast %cst_87 : f32 to vector<16x1xf32>
    %109 = arith.divf %107, %108 : vector<16x1xf32>
    %110 = vector.broadcast %109 : vector<16x1xf32> to vector<16x32xf32>
    %111 = arith.subf %101, %110 : vector<16x32xf32>
    %112 = arith.mulf %111, %111 : vector<16x32xf32>
    %cst_88 = arith.constant dense<0.000000e+00> : vector<16xf32>
    %113 = vector.multi_reduction <add>, %112, %cst_88 [1] : vector<16x32xf32> to vector<16xf32>
    %114 = vector.shape_cast %113 : vector<16xf32> to vector<16x1xf32>
    %cst_89 = arith.constant 3.200000e+01 : f32
    %115 = vector.broadcast %cst_89 : f32 to vector<16x1xf32>
    %116 = arith.divf %114, %115 : vector<16x1xf32>
    %117 = vector.broadcast %109 : vector<16x1xf32> to vector<16x32xf32>
    %118 = arith.subf %101, %117 : vector<16x32xf32>
    %cst_90 = arith.constant 9.99999996E-13 : f32
    %119 = vector.broadcast %cst_90 : f32 to vector<16x1xf32>
    %120 = arith.addf %116, %119 : vector<16x1xf32>
    %121 = math.rsqrt %120 : vector<16x1xf32>
    %122 = vector.broadcast %121 : vector<16x1xf32> to vector<16x32xf32>
    %123 = arith.mulf %118, %122 : vector<16x32xf32>
    %124 = vector.broadcast %103 : vector<1x32xf32> to vector<16x32xf32>
    %125 = arith.mulf %123, %124 : vector<16x32xf32>
    %126 = vector.broadcast %105 : vector<1x32xf32> to vector<16x32xf32>
    %127 = arith.addf %125, %126 : vector<16x32xf32>
    %c0_91 = arith.constant 0 : index
    %c0_92 = arith.constant 0 : index
    %c0_93 = arith.constant 0 : index
    %128 = vector.load %arg17[%c0_91, %c0_92, %c0_93] : memref<1x32x64xbf16, #tpu.memory_space<vmem>>, vector<1x32x64xbf16>
    %129 = vector.shape_cast %128 : vector<1x32x64xbf16> to vector<32x64xbf16>
    %130 = arith.truncf %127 : vector<16x32xf32> to vector<16x32xbf16>
    %cst_94 = arith.constant dense<0.000000e+00> : vector<16x64xf32>
    %131 = tpu.matmul %130, %129, %cst_94 {dimension_numbers = #tpu.dot_dimension_numbers<[1], [0], [0], [1], [0, 0, 1, 1], [], []>} : vector<16x32xbf16>, vector<32x64xbf16>, vector<16x64xf32> -> vector<16x64xf32>
    %c0_95 = arith.constant 0 : index
    %c0_96 = arith.constant 0 : index
    %c0_97 = arith.constant 0 : index
    %132 = vector.load %arg18[%c0_95, %c0_96, %c0_97] : memref<1x1x64xf32, #tpu.memory_space<vmem>>, vector<1x1x64xf32>
    %133 = vector.shape_cast %132 : vector<1x1x64xf32> to vector<1x64xf32>
    %134 = vector.broadcast %133 : vector<1x64xf32> to vector<16x64xf32>
    %135 = arith.addf %131, %134 : vector<16x64xf32>
    %cst_98 = arith.constant 5.000000e-01 : f32
    %136 = vector.broadcast %cst_98 : f32 to vector<16x64xf32>
    %137 = arith.mulf %136, %135 : vector<16x64xf32>
    %cst_99 = arith.constant 4.471500e-02 : f32
    %138 = vector.broadcast %cst_99 : f32 to vector<16x64xf32>
    %139 = arith.mulf %138, %135 : vector<16x64xf32>
    %140 = arith.mulf %139, %135 : vector<16x64xf32>
    %141 = arith.mulf %140, %135 : vector<16x64xf32>
    %142 = arith.addf %135, %141 : vector<16x64xf32>
    %cst_100 = arith.constant 0.797884583 : f32
    %143 = vector.broadcast %cst_100 : f32 to vector<16x64xf32>
    %144 = arith.mulf %143, %142 : vector<16x64xf32>
    %145 = math.tanh %144 : vector<16x64xf32>
    %cst_101 = arith.constant 1.000000e+00 : f32
    %146 = vector.broadcast %cst_101 : f32 to vector<16x64xf32>
    %147 = arith.addf %146, %145 : vector<16x64xf32>
    %148 = arith.mulf %137, %147 : vector<16x64xf32>
    %c0_102 = arith.constant 0 : index
    %c0_103 = arith.constant 0 : index
    %c0_104 = arith.constant 0 : index
    %149 = vector.load %arg19[%c0_102, %c0_103, %c0_104] : memref<1x64x32xbf16, #tpu.memory_space<vmem>>, vector<1x64x32xbf16>
    %150 = vector.shape_cast %149 : vector<1x64x32xbf16> to vector<64x32xbf16>
    %151 = arith.truncf %148 : vector<16x64xf32> to vector<16x64xbf16>
    %cst_105 = arith.constant dense<0.000000e+00> : vector<16x32xf32>
    %152 = tpu.matmul %151, %150, %cst_105 {dimension_numbers = #tpu.dot_dimension_numbers<[1], [0], [0], [1], [0, 0, 1, 1], [], []>} : vector<16x64xbf16>, vector<64x32xbf16>, vector<16x32xf32> -> vector<16x32xf32>
    %c0_106 = arith.constant 0 : index
    %c0_107 = arith.constant 0 : index
    %c0_108 = arith.constant 0 : index
    %153 = vector.load %arg20[%c0_106, %c0_107, %c0_108] : memref<1x1x32xf32, #tpu.memory_space<vmem>>, vector<1x1x32xf32>
    %154 = vector.shape_cast %153 : vector<1x1x32xf32> to vector<1x32xf32>
    %155 = vector.broadcast %154 : vector<1x32xf32> to vector<16x32xf32>
    %156 = arith.addf %152, %155 : vector<16x32xf32>
    %157 = arith.addf %127, %156 : vector<16x32xf32>
    %c0_109 = arith.constant 0 : index
    %c0_110 = arith.constant 0 : index
    %c0_111 = arith.constant 0 : index
    %158 = vector.load %arg21[%c0_109, %c0_110, %c0_111] : memref<1x1x32xf32, #tpu.memory_space<vmem>>, vector<1x1x32xf32>
    %159 = vector.shape_cast %158 : vector<1x1x32xf32> to vector<1x32xf32>
    %c0_112 = arith.constant 0 : index
    %c0_113 = arith.constant 0 : index
    %c0_114 = arith.constant 0 : index
    %160 = vector.load %arg22[%c0_112, %c0_113, %c0_114] : memref<1x1x32xf32, #tpu.memory_space<vmem>>, vector<1x1x32xf32>
    %161 = vector.shape_cast %160 : vector<1x1x32xf32> to vector<1x32xf32>
    %cst_115 = arith.constant dense<0.000000e+00> : vector<16xf32>
    %162 = vector.multi_reduction <add>, %157, %cst_115 [1] : vector<16x32xf32> to vector<16xf32>
    %163 = vector.shape_cast %162 : vector<16xf32> to vector<16x1xf32>
    %cst_116 = arith.constant 3.200000e+01 : f32
    %164 = vector.broadcast %cst_116 : f32 to vector<16x1xf32>
    %165 = arith.divf %163, %164 : vector<16x1xf32>
    %166 = vector.broadcast %165 : vector<16x1xf32> to vector<16x32xf32>
    %167 = arith.subf %157, %166 : vector<16x32xf32>
    %168 = arith.mulf %167, %167 : vector<16x32xf32>
    %cst_117 = arith.constant dense<0.000000e+00> : vector<16xf32>
    %169 = vector.multi_reduction <add>, %168, %cst_117 [1] : vector<16x32xf32> to vector<16xf32>
    %170 = vector.shape_cast %169 : vector<16xf32> to vector<16x1xf32>
    %cst_118 = arith.constant 3.200000e+01 : f32
    %171 = vector.broadcast %cst_118 : f32 to vector<16x1xf32>
    %172 = arith.divf %170, %171 : vector<16x1xf32>
    %173 = vector.broadcast %165 : vector<16x1xf32> to vector<16x32xf32>
    %174 = arith.subf %157, %173 : vector<16x32xf32>
    %cst_119 = arith.constant 9.99999996E-13 : f32
    %175 = vector.broadcast %cst_119 : f32 to vector<16x1xf32>
    %176 = arith.addf %172, %175 : vector<16x1xf32>
    %177 = math.rsqrt %176 : vector<16x1xf32>
    %178 = vector.broadcast %177 : vector<16x1xf32> to vector<16x32xf32>
    %179 = arith.mulf %174, %178 : vector<16x32xf32>
    %180 = vector.broadcast %159 : vector<1x32xf32> to vector<16x32xf32>
    %181 = arith.mulf %179, %180 : vector<16x32xf32>
    %182 = vector.broadcast %161 : vector<1x32xf32> to vector<16x32xf32>
    %183 = arith.addf %181, %182 : vector<16x32xf32>
    %c0_120 = arith.constant 0 : index
    %c0_121 = arith.constant 0 : index
    %184 = vector.load %arg29[%c0_120, %c0_121] : memref<16x32xf32, #tpu.memory_space<vmem>>, vector<16x32xf32>
    tpu.vector_store %arg29[%c0_120, %c0_121], %183 {strides = array<i32>} : memref<16x32xf32, #tpu.memory_space<vmem>>, vector<16x32xf32>,
    %c1_i32 = arith.constant 1 : i32
    %185 = arith.cmpi eq, %arg0, %c1_i32 : i32
    %186 = arith.extui %185 : i1 to i32
    %c0_i32_122 = arith.constant 0 : i32
    %187 = arith.cmpi ne, %186, %c0_i32_122 : i32
    scf.if %187 {
      %c0_123 = arith.constant 0 : index
      %c0_124 = arith.constant 0 : index
      %188 = vector.load %arg23[%c0_123, %c0_124] : memref<2x16xf32, #tpu.memory_space<vmem>>, vector<2x16xf32>
      %cst_125 = arith.constant dense<0.000000e+00> : vector<2x32xf32>
      %189 = tpu.matmul %188, %183, %cst_125 {dimension_numbers = #tpu.dot_dimension_numbers<[1], [0], [0], [1], [0, 0, 1, 1], [], []>} : vector<2x16xf32>, vector<16x32xf32>, vector<2x32xf32> -> vector<2x32xf32>
      %c0_126 = arith.constant 0 : index
      %c0_127 = arith.constant 0 : index
      %190 = vector.load %arg24[%c0_126, %c0_127] : memref<32x32xbf16, #tpu.memory_space<vmem>>, vector<32x32xbf16>
      %191 = arith.truncf %189 : vector<2x32xf32> to vector<2x32xbf16>
      %cst_128 = arith.constant dense<0.000000e+00> : vector<2x32xf32>
      %192 = tpu.matmul %191, %190, %cst_128 {dimension_numbers = #tpu.dot_dimension_numbers<[1], [0], [0], [1], [0, 0, 1, 1], [], []>} : vector<2x32xbf16>, vector<32x32xbf16>, vector<2x32xf32> -> vector<2x32xf32>
      %c0_129 = arith.constant 0 : index
      %c0_130 = arith.constant 0 : index
      %193 = vector.load %arg25[%c0_129, %c0_130] : memref<1x32xf32, #tpu.memory_space<vmem>>, vector<1x32xf32>
      %194 = vector.broadcast %193 : vector<1x32xf32> to vector<2x32xf32>
      %195 = arith.addf %192, %194 : vector<2x32xf32>
      %196 = math.tanh %195 : vector<2x32xf32>
      %c0_131 = arith.constant 0 : index
      %c0_132 = arith.constant 0 : index
      %197 = vector.load %arg26[%c0_131, %c0_132] : memref<32x128xbf16, #tpu.memory_space<vmem>>, vector<32x128xbf16>
      %198 = arith.truncf %196 : vector<2x32xf32> to vector<2x32xbf16>
      %cst_133 = arith.constant dense<0.000000e+00> : vector<2x128xf32>
      %199 = tpu.matmul %198, %197, %cst_133 {dimension_numbers = #tpu.dot_dimension_numbers<[1], [0], [0], [1], [0, 0, 1, 1], [], []>} : vector<2x32xbf16>, vector<32x128xbf16>, vector<2x128xf32> -> vector<2x128xf32>
      %c0_134 = arith.constant 0 : index
      %c0_135 = arith.constant 0 : index
      %200 = vector.load %arg27[%c0_134, %c0_135] : memref<1x128xf32, #tpu.memory_space<vmem>>, vector<1x128xf32>
      %201 = vector.broadcast %200 : vector<1x128xf32> to vector<2x128xf32>
      %202 = arith.addf %199, %201 : vector<2x128xf32>
      %c0_136 = arith.constant 0 : index
      %c0_137 = arith.constant 0 : index
      %203 = vector.load %arg28[%c0_136, %c0_137] : memref<2x128xf32, #tpu.memory_space<vmem>>, vector<2x128xf32>
      tpu.vector_store %arg28[%c0_136, %c0_137], %202 {strides = array<i32>} : memref<2x128xf32, #tpu.memory_space<vmem>>, vector<2x128xf32>,
    } else {
    }
    return
  }
  func.func @transform_0(%arg0: i32) -> (i32, i32) {
    %c0_i32 = arith.constant 0 : i32
    %c0_i32_0 = arith.constant 0 : i32
    %c0_i32_1 = arith.constant 0 : i32
    return %c0_i32, %c0_i32_0 : i32, i32
  }
  func.func @transform_1(%arg0: i32) -> (i32, i32) {
    %c0_i32 = arith.constant 0 : i32
    %c0_i32_0 = arith.constant 0 : i32
    %c0_i32_1 = arith.constant 0 : i32
    return %c0_i32, %c0_i32_0 : i32, i32
  }
  func.func @transform_2(%arg0: i32) -> (i32, i32) {
    %c0_i32 = arith.constant 0 : i32
    %c0_i32_0 = arith.constant 0 : i32
    %c0_i32_1 = arith.constant 0 : i32
    return %c0_i32, %c0_i32_0 : i32, i32
  }
  func.func @transform_3(%arg0: i32) -> (i32, i32) {
    %c0_i32 = arith.constant 0 : i32
    %c0_i32_0 = arith.constant 0 : i32
    %c0_i32_1 = arith.constant 0 : i32
    return %c0_i32, %c0_i32_0 : i32, i32
  }
  func.func @transform_4(%arg0: i32) -> (i32, i32) {
    %c0_i32 = arith.constant 0 : i32
    %c0_i32_0 = arith.constant 0 : i32
    %c0_i32_1 = arith.constant 0 : i32
    return %c0_i32, %c0_i32_0 : i32, i32
  }
  func.func @transform_5(%arg0: i32) -> (i32, i32) {
    %c0_i32 = arith.constant 0 : i32
    %c0_i32_0 = arith.constant 0 : i32
    %c0_i32_1 = arith.constant 0 : i32
    return %c0_i32, %c0_i32_0 : i32, i32
  }
  func.func @transform_6(%arg0: i32) -> (i32, i32, i32, i32) {
    %c0_i32 = arith.constant 0 : i32
    %c0_i32_0 = arith.constant 0 : i32
    %c0_i32_1 = arith.constant 0 : i32
    %c0_i32_2 = arith.constant 0 : i32
    return %arg0, %c0_i32, %c0_i32_0, %c0_i32_1 : i32, i32, i32, i32
  }
  func.func @transform_7(%arg0: i32) -> (i32, i32, i32, i32) {
    %c0_i32 = arith.constant 0 : i32
    %c0_i32_0 = arith.constant 0 : i32
    %c0_i32_1 = arith.constant 0 : i32
    %c0_i32_2 = arith.constant 0 : i32
    return %arg0, %c0_i32, %c0_i32_0, %c0_i32_1 : i32, i32, i32, i32
  }
  func.func @transform_8(%arg0: i32) -> (i32, i32, i32, i32) {
    %c0_i32 = arith.constant 0 : i32
    %c0_i32_0 = arith.constant 0 : i32
    %c0_i32_1 = arith.constant 0 : i32
    %c0_i32_2 = arith.constant 0 : i32
    return %arg0, %c0_i32, %c0_i32_0, %c0_i32_1 : i32, i32, i32, i32
  }
  func.func @transform_9(%arg0: i32) -> (i32, i32, i32, i32) {
    %c0_i32 = arith.constant 0 : i32
    %c0_i32_0 = arith.constant 0 : i32
    %c0_i32_1 = arith.constant 0 : i32
    %c0_i32_2 = arith.constant 0 : i32
    return %arg0, %c0_i32, %c0_i32_0, %c0_i32_1 : i32, i32, i32, i32
  }
  func.func @transform_10(%arg0: i32) -> (i32, i32, i32, i32) {
    %c0_i32 = arith.constant 0 : i32
    %c0_i32_0 = arith.constant 0 : i32
    %c0_i32_1 = arith.constant 0 : i32
    %c0_i32_2 = arith.constant 0 : i32
    return %arg0, %c0_i32, %c0_i32_0, %c0_i32_1 : i32, i32, i32, i32
  }
  func.func @transform_11(%arg0: i32) -> (i32, i32, i32, i32) {
    %c0_i32 = arith.constant 0 : i32
    %c0_i32_0 = arith.constant 0 : i32
    %c0_i32_1 = arith.constant 0 : i32
    %c0_i32_2 = arith.constant 0 : i32
    return %arg0, %c0_i32, %c0_i32_0, %c0_i32_1 : i32, i32, i32, i32
  }
  func.func @transform_12(%arg0: i32) -> (i32, i32, i32, i32) {
    %c0_i32 = arith.constant 0 : i32
    %c0_i32_0 = arith.constant 0 : i32
    %c0_i32_1 = arith.constant 0 : i32
    %c0_i32_2 = arith.constant 0 : i32
    return %arg0, %c0_i32, %c0_i32_0, %c0_i32_1 : i32, i32, i32, i32
  }
  func.func @transform_13(%arg0: i32) -> (i32, i32, i32) {
    %c0_i32 = arith.constant 0 : i32
    %c0_i32_0 = arith.constant 0 : i32
    %c0_i32_1 = arith.constant 0 : i32
    return %arg0, %c0_i32, %c0_i32_0 : i32, i32, i32
  }
  func.func @transform_14(%arg0: i32) -> (i32, i32, i32) {
    %c0_i32 = arith.constant 0 : i32
    %c0_i32_0 = arith.constant 0 : i32
    %c0_i32_1 = arith.constant 0 : i32
    return %arg0, %c0_i32, %c0_i32_0 : i32, i32, i32
  }
  func.func @transform_15(%arg0: i32) -> (i32, i32, i32) {
    %c0_i32 = arith.constant 0 : i32
    %c0_i32_0 = arith.constant 0 : i32
    %c0_i32_1 = arith.constant 0 : i32
    return %arg0, %c0_i32, %c0_i32_0 : i32, i32, i32
  }
  func.func @transform_16(%arg0: i32) -> (i32, i32, i32) {
    %c0_i32 = arith.constant 0 : i32
    %c0_i32_0 = arith.constant 0 : i32
    %c0_i32_1 = arith.constant 0 : i32
    return %arg0, %c0_i32, %c0_i32_0 : i32, i32, i32
  }
  func.func @transform_17(%arg0: i32) -> (i32, i32, i32) {
    %c0_i32 = arith.constant 0 : i32
    %c0_i32_0 = arith.constant 0 : i32
    %c0_i32_1 = arith.constant 0 : i32
    return %arg0, %c0_i32, %c0_i32_0 : i32, i32, i32
  }
  func.func @transform_18(%arg0: i32) -> (i32, i32, i32) {
    %c0_i32 = arith.constant 0 : i32
    %c0_i32_0 = arith.constant 0 : i32
    %c0_i32_1 = arith.constant 0 : i32
    return %arg0, %c0_i32, %c0_i32_0 : i32, i32, i32
  }
  func.func @transform_19(%arg0: i32) -> (i32, i32, i32) {
    %c0_i32 = arith.constant 0 : i32
    %c0_i32_0 = arith.constant 0 : i32
    %c0_i32_1 = arith.constant 0 : i32
    return %arg0, %c0_i32, %c0_i32_0 : i32, i32, i32
  }
  func.func @transform_20(%arg0: i32) -> (i32, i32, i32) {
    %c0_i32 = arith.constant 0 : i32
    %c0_i32_0 = arith.constant 0 : i32
    %c0_i32_1 = arith.constant 0 : i32
    return %arg0, %c0_i32, %c0_i32_0 : i32, i32, i32
  }
  func.func @transform_21(%arg0: i32) -> (i32, i32, i32) {
    %c0_i32 = arith.constant 0 : i32
    %c0_i32_0 = arith.constant 0 : i32
    %c0_i32_1 = arith.constant 0 : i32
    return %arg0, %c0_i32, %c0_i32_0 : i32, i32, i32
  }
  func.func @transform_22(%arg0: i32) -> (i32, i32) {
    %c0_i32 = arith.constant 0 : i32
    %c0_i32_0 = arith.constant 0 : i32
    %c0_i32_1 = arith.constant 0 : i32
    return %c0_i32, %c0_i32_0 : i32, i32
  }
  func.func @transform_23(%arg0: i32) -> (i32, i32) {
    %c0_i32 = arith.constant 0 : i32
    %c0_i32_0 = arith.constant 0 : i32
    %c0_i32_1 = arith.constant 0 : i32
    return %c0_i32, %c0_i32_0 : i32, i32
  }
  func.func @transform_24(%arg0: i32) -> (i32, i32) {
    %c0_i32 = arith.constant 0 : i32
    %c0_i32_0 = arith.constant 0 : i32
    %c0_i32_1 = arith.constant 0 : i32
    return %c0_i32, %c0_i32_0 : i32, i32
  }
  func.func @transform_25(%arg0: i32) -> (i32, i32) {
    %c0_i32 = arith.constant 0 : i32
    %c0_i32_0 = arith.constant 0 : i32
    %c0_i32_1 = arith.constant 0 : i32
    return %c0_i32, %c0_i32_0 : i32, i32
  }
  func.func @transform_26(%arg0: i32) -> (i32, i32) {
    %c0_i32 = arith.constant 0 : i32
    %c0_i32_0 = arith.constant 0 : i32
    %c0_i32_1 = arith.constant 0 : i32
    return %c0_i32, %c0_i32_0 : i32, i32
  }
  func.func @transform_27(%arg0: i32) -> (i32, i32) {
    %c0_i32 = arith.constant 0 : i32
    %c0_i32_0 = arith.constant 0 : i32
    %c0_i32_1 = arith.constant 0 : i32
    return %c0_i32, %c0_i32_0 : i32, i32
  }
}

</mosaic_0001>

<llo_original>
// kernel: mul.8
$region0: #{mul.8}
  %s0 = inlined_call_operand.vmem [shape: f32[2,8], index: 0, kind: input, shape index: {}]
  %s1 = inlined_call_operand.vmem [shape: f32[16], index: 1, kind: output, shape index: {}]
  $region1: #{mul.8} parent=0
    #allocation0 [shape = 'u8[4096]{0}', space=vmem, size = 0x1000, scoped, tag = 'scoped mem for output reshape']
    #allocation1 [shape = 'u8[4096]{0}', space=vmem, size = 0x1000, scoped, tag = 'scoped mem for input reshape']
    %s3 = sshll.u32 1, 2
    %s4 = ssub.s32 %s3, 1
    %v5 = vld [vmem:[%s0] sm:%s4]
    %6 = vst [vmem:[#allocation1] sm:%s4] %v5
    %v7 = vld [vmem:[#allocation1] sm:$0x1]
    %vm8 = vcmask 64512
    %9 = vst.msk [vmem:[#allocation0] sm:$0x1] %vm8, %v7
    %s10 = scalar_lea.vmem [#allocation1], 1
    %v11 = vld [vmem:[%s10] sm:$0x1]
    %12 = vrot.lane.b32.xlu0 %v11, 8
    %v13 = vpop.permute.xlu0 %12
    %vm14 = vcmask 130112
    %15 = vst.msk [vmem:[#allocation0] sm:$0x1] %vm14, %v13
    %s17 = sshll.u32 1, 1
    %s18 = ssub.s32 %s17, 1
    %v20 = vld [vmem:[#allocation0] sm:%s18]
    %s21 = sshll.u32 1, 1
    %s22 = ssub.s32 %s21, 1
    %23 = vst [vmem:[%s1] sm:%s22] %v20

// kernel: bert_classifier_forward.1
$region0: #{bert_classifier_forward.1}
  #allocation0 [shape = 'u32[]', space=smem, size = 0x4, offset = 0x4, fixed_abs, tag = 'smem constant byte address 0x4 - core index']
  #allocation1 [shape = 'u32[144,128]{1,0:T(1,128)}', space=vmem, size = 0x12000, scoped, tag = 'internal scratch']
  #allocation2 [shape = 'f32[16,32]{1,0:T(8,128)}', space=vmem, size = 0x2000, scoped, tag = 'scratch operand']
  %s0 = inlined_call_operand.vmem [shape: s32[16,1], index: 0, kind: input, shape index: {}]
  %s1 = inlined_call_operand.vmem [shape: f32[128,32], index: 1, kind: input, shape index: {}]
  %s2 = inlined_call_operand.vmem [shape: f32[16,32], index: 2, kind: input, shape index: {}]
  %s3 = inlined_call_operand.vmem [shape: f32[1,32], index: 3, kind: input, shape index: {}]
  %s4 = inlined_call_operand.vmem [shape: f32[1,32], index: 4, kind: input, shape index: {}]
  %s5 = inlined_call_operand.vmem [shape: f32[16,16], index: 5, kind: input, shape index: {}]
  %s6 = inlined_call_operand.vmem [shape: bf16[2,2,32,16], index: 6, kind: input, shape index: {}]
  %s7 = inlined_call_operand.vmem [shape: f32[2,2,1,16], index: 7, kind: input, shape index: {}]
  %s8 = inlined_call_operand.vmem [shape: bf16[2,2,32,16], index: 8, kind: input, shape index: {}]
  %s9 = inlined_call_operand.vmem [shape: f32[2,2,1,16], index: 9, kind: input, shape index: {}]
  %s10 = inlined_call_operand.vmem [shape: bf16[2,2,32,16], index: 10, kind: input, shape index: {}]
  %s11 = inlined_call_operand.vmem [shape: f32[2,2,1,16], index: 11, kind: input, shape index: {}]
  %s12 = inlined_call_operand.vmem [shape: bf16[2,2,16,32], index: 12, kind: input, shape index: {}]
  %s13 = inlined_call_operand.vmem [shape: f32[2,1,32], index: 13, kind: input, shape index: {}]
  %s14 = inlined_call_operand.vmem [shape: f32[2,1,32], index: 14, kind: input, shape index: {}]
  %s15 = inlined_call_operand.vmem [shape: f32[2,1,32], index: 15, kind: input, shape index: {}]
  %s16 = inlined_call_operand.vmem [shape: bf16[2,32,64], index: 16, kind: input, shape index: {}]
  %s17 = inlined_call_operand.vmem [shape: f32[2,1,64], index: 17, kind: input, shape index: {}]
  %s18 = inlined_call_operand.vmem [shape: bf16[2,64,32], index: 18, kind: input, shape index: {}]
  %s19 = inlined_call_operand.vmem [shape: f32[2,1,32], index: 19, kind: input, shape index: {}]
  %s20 = inlined_call_operand.vmem [shape: f32[2,1,32], index: 20, kind: input, shape index: {}]
  %s21 = inlined_call_operand.vmem [shape: f32[2,1,32], index: 21, kind: input, shape index: {}]
  %s22 = inlined_call_operand.vmem [shape: f32[2,16], index: 22, kind: input, shape index: {}]
  %s23 = inlined_call_operand.vmem [shape: bf16[32,32], index: 23, kind: input, shape index: {}]
  %s24 = inlined_call_operand.vmem [shape: f32[1,32], index: 24, kind: input, shape index: {}]
  %s25 = inlined_call_operand.vmem [shape: bf16[32,128], index: 25, kind: input, shape index: {}]
  %s26 = inlined_call_operand.vmem [shape: f32[1,128], index: 26, kind: input, shape index: {}]
  %s27 = inlined_call_operand.hbm [shape: f32[2,128], index: 27, kind: output, shape index: {}]
  %s28 = sld [smem:[#allocation0]]
  $region149: #{bert_classifier_forward.1} parent=0
    _
  %s30 = ssub.s32 1, %s28
  %s31 = scalar_select 0, %s30, %s28
  $region1: #{bert_classifier_forward.1} parent=0
    #allocation3 [shape = 'u8[1024]{0}', space=vmem, size = 0x400, scoped, tag = 'output window, operand 0, single buffered']
    #allocation4 [shape = 's32[2]{0}', space=sflag, size = 0x8, scoped, tag = 'scoped memory for bert_classifier_forward.1']
    %32 = vsyncpa [#allocation4], 0
    loop: start=0, step=1, limit=4
    $region2: #{bert_classifier_forward.1} parent=1 // loop_pre_header
      _
    $region3: #{bert_classifier_forward.1} parent=1 // loop_header
      %s34 = sphi 0, %s38
      %p35 = scmp.ge.s32.totalorder %s34, 4
      %s42 = sphi 0, %s42
      %s44 = sphi 0, %s42
      %s45 = sphi 0, %s44
      %s59 = sphi 0, %s45
      %s63 = sphi 0, %s63
      %s65 = sphi 0, %s63
      %s66 = sphi 0, %s65
      %s80 = sphi 0, %s66
      %s84 = sphi 0, %s84
      %s86 = sphi 0, %s84
      %s87 = sphi 0, %s86
      %s101 = sphi 0, %s87
      %s105 = sphi 0, %s105
      %s107 = sphi 0, %s105
      %s108 = sphi 0, %s107
      %s122 = sphi 0, %s108
      %s126 = sphi 0, %s126
      %s128 = sphi 0, %s126
      %s129 = sphi 0, %s128
      %s143 = sphi 0, %s129
      %s147 = sphi 0, %s147
      %s149 = sphi 0, %s147
      %s150 = sphi 0, %s149
      %s164 = sphi 0, %s150
      %s170 = sphi 0, %s172
      %s173 = sphi 0, %s170
      %s174 = sphi 0, %s173
      %s190 = sphi 0, %s174
      %s196 = sphi 0, %s198
      %s199 = sphi 0, %s196
      %s200 = sphi 0, %s199
      %s216 = sphi 0, %s200
      %s222 = sphi 0, %s224
      %s225 = sphi 0, %s222
      %s226 = sphi 0, %s225
      %s242 = sphi 0, %s226
      %s248 = sphi 0, %s250
      %s251 = sphi 0, %s248
      %s252 = sphi 0, %s251
      %s268 = sphi 0, %s252
      %s274 = sphi 0, %s276
      %s277 = sphi 0, %s274
      %s278 = sphi 0, %s277
      %s294 = sphi 0, %s278
      %s300 = sphi 0, %s302
      %s303 = sphi 0, %s300
      %s304 = sphi 0, %s303
      %s320 = sphi 0, %s304
      %s326 = sphi 0, %s328
      %s329 = sphi 0, %s326
      %s330 = sphi 0, %s329
      %s346 = sphi 0, %s330
      %s352 = sphi 0, %s354
      %s355 = sphi 0, %s352
      %s356 = sphi 0, %s355
      %s372 = sphi 0, %s356
      %s378 = sphi 0, %s380
      %s381 = sphi 0, %s378
      %s382 = sphi 0, %s381
      %s398 = sphi 0, %s382
      %s404 = sphi 0, %s406
      %s407 = sphi 0, %s404
      %s408 = sphi 0, %s407
      %s424 = sphi 0, %s408
      %s430 = sphi 0, %s432
      %s433 = sphi 0, %s430
      %s434 = sphi 0, %s433
      %s450 = sphi 0, %s434
      %s456 = sphi 0, %s458
      %s459 = sphi 0, %s456
      %s460 = sphi 0, %s459
      %s476 = sphi 0, %s460
      %s482 = sphi 0, %s484
      %s485 = sphi 0, %s482
      %s486 = sphi 0, %s485
      %s502 = sphi 0, %s486
      %s508 = sphi 0, %s510
      %s511 = sphi 0, %s508
      %s512 = sphi 0, %s511
      %s528 = sphi 0, %s512
      %s534 = sphi 0, %s536
      %s537 = sphi 0, %s534
      %s538 = sphi 0, %s537
      %s554 = sphi 0, %s538
      %s560 = sphi 0, %s562
      %s563 = sphi 0, %s560
      %s564 = sphi 0, %s563
      %s580 = sphi 0, %s564
      %s584 = sphi 0, %s584
      %s586 = sphi 0, %s584
      %s587 = sphi 0, %s586
      %s601 = sphi 0, %s587
      %s605 = sphi 0, %s605
      %s607 = sphi 0, %s605
      %s608 = sphi 0, %s607
      %s622 = sphi 0, %s608
      %s626 = sphi 0, %s626
      %s628 = sphi 0, %s626
      %s629 = sphi 0, %s628
      %s643 = sphi 0, %s629
      %s647 = sphi 0, %s647
      %s649 = sphi 0, %s647
      %s650 = sphi 0, %s649
      %s664 = sphi 0, %s650
      %s668 = sphi 0, %s668
      %s670 = sphi 0, %s668
      %s671 = sphi 0, %s670
      %s685 = sphi 0, %s671
      %s689 = sphi 0, %s689
      %s691 = sphi 0, %s689
      %s692 = sphi 0, %s691
      %s706 = sphi 0, %s692
    $region4: #{bert_classifier_forward.1} parent=1 // loop_header_branch
      %37 = sbr.rel (%p35) target = $region8
    $region5: #{bert_classifier_forward.1} parent=1 // loop_body
      %s39 = ssub.s32 %s34, 1
      %s40 = ssub.s32 %s34, 2
      %s41 = sadd.s32 %s34, 1
      %s43 = sadd.s32 %s42, 1
      %p46 = scmp.eq.s32.totalorder %s34, 1
      %p47 = scmp.ne.s32.totalorder %s42, %s44
      %p48 = scmp.eq.s32.totalorder %s34, 0
      %p49 = por %p47, %p48
      %p50 = scmp.ne.s32.totalorder %s42, %s44
      %p51 = scmp.eq.s32.totalorder %s39, 1
      %p52 = por %p50, %p51
      %p53 = scmp.ne.s32.totalorder %s44, %s45
      %p54 = scmp.eq.s32.totalorder %s39, 0
      %p55 = por %p53, %p54
      %p56 = scmp.ne.s32.totalorder %s44, %s45
      %p57 = scmp.eq.s32.totalorder %s40, 1
      %p58 = por %p56, %p57
      %p60 = scmp.ne.s32.totalorder %s45, %s59
      %p61 = scmp.eq.s32.totalorder %s40, 0
      %p62 = por %p60, %p61
      %s64 = sadd.s32 %s63, 1
      %p67 = scmp.eq.s32.totalorder %s34, 1
      %p68 = scmp.ne.s32.totalorder %s63, %s65
      %p69 = scmp.eq.s32.totalorder %s34, 0
      %p70 = por %p68, %p69
      %p71 = scmp.ne.s32.totalorder %s63, %s65
      %p72 = scmp.eq.s32.totalorder %s39, 1
      %p73 = por %p71, %p72
      %p74 = scmp.ne.s32.totalorder %s65, %s66
      %p75 = scmp.eq.s32.totalorder %s39, 0
      %p76 = por %p74, %p75
      %p77 = scmp.ne.s32.totalorder %s65, %s66
      %p78 = scmp.eq.s32.totalorder %s40, 1
      %p79 = por %p77, %p78
      %p81 = scmp.ne.s32.totalorder %s66, %s80
      %p82 = scmp.eq.s32.totalorder %s40, 0
      %p83 = por %p81, %p82
      %s85 = sadd.s32 %s84, 1
      %p88 = scmp.eq.s32.totalorder %s34, 1
      %p89 = scmp.ne.s32.totalorder %s84, %s86
      %p90 = scmp.eq.s32.totalorder %s34, 0
      %p91 = por %p89, %p90
      %p92 = scmp.ne.s32.totalorder %s84, %s86
      %p93 = scmp.eq.s32.totalorder %s39, 1
      %p94 = por %p92, %p93
      %p95 = scmp.ne.s32.totalorder %s86, %s87
      %p96 = scmp.eq.s32.totalorder %s39, 0
      %p97 = por %p95, %p96
      %p98 = scmp.ne.s32.totalorder %s86, %s87
      %p99 = scmp.eq.s32.totalorder %s40, 1
      %p100 = por %p98, %p99
      %p102 = scmp.ne.s32.totalorder %s87, %s101
      %p103 = scmp.eq.s32.totalorder %s40, 0
      %p104 = por %p102, %p103
      %s106 = sadd.s32 %s105, 1
      %p109 = scmp.eq.s32.totalorder %s34, 1
      %p110 = scmp.ne.s32.totalorder %s105, %s107
      %p111 = scmp.eq.s32.totalorder %s34, 0
      %p112 = por %p110, %p111
      %p113 = scmp.ne.s32.totalorder %s105, %s107
      %p114 = scmp.eq.s32.totalorder %s39, 1
      %p115 = por %p113, %p114
      %p116 = scmp.ne.s32.totalorder %s107, %s108
      %p117 = scmp.eq.s32.totalorder %s39, 0
      %p118 = por %p116, %p117
      %p119 = scmp.ne.s32.totalorder %s107, %s108
      %p120 = scmp.eq.s32.totalorder %s40, 1
      %p121 = por %p119, %p120
      %p123 = scmp.ne.s32.totalorder %s108, %s122
      %p124 = scmp.eq.s32.totalorder %s40, 0
      %p125 = por %p123, %p124
      %s127 = sadd.s32 %s126, 1
      %p130 = scmp.eq.s32.totalorder %s34, 1
      %p131 = scmp.ne.s32.totalorder %s126, %s128
      %p132 = scmp.eq.s32.totalorder %s34, 0
      %p133 = por %p131, %p132
      %p134 = scmp.ne.s32.totalorder %s126, %s128
      %p135 = scmp.eq.s32.totalorder %s39, 1
      %p136 = por %p134, %p135
      %p137 = scmp.ne.s32.totalorder %s128, %s129
      %p138 = scmp.eq.s32.totalorder %s39, 0
      %p139 = por %p137, %p138
      %p140 = scmp.ne.s32.totalorder %s128, %s129
      %p141 = scmp.eq.s32.totalorder %s40, 1
      %p142 = por %p140, %p141
      %p144 = scmp.ne.s32.totalorder %s129, %s143
      %p145 = scmp.eq.s32.totalorder %s40, 0
      %p146 = por %p144, %p145
      %s148 = sadd.s32 %s147, 1
      %p151 = scmp.eq.s32.totalorder %s34, 1
      %p152 = scmp.ne.s32.totalorder %s147, %s149
      %p153 = scmp.eq.s32.totalorder %s34, 0
      %p154 = por %p152, %p153
      %p155 = scmp.ne.s32.totalorder %s147, %s149
      %p156 = scmp.eq.s32.totalorder %s39, 1
      %p157 = por %p155, %p156
      %p158 = scmp.ne.s32.totalorder %s149, %s150
      %p159 = scmp.eq.s32.totalorder %s39, 0
      %p160 = por %p158, %p159
      %p161 = scmp.ne.s32.totalorder %s149, %s150
      %p162 = scmp.eq.s32.totalorder %s40, 1
      %p163 = por %p161, %p162
      %p165 = scmp.ne.s32.totalorder %s150, %s164
      %p166 = scmp.eq.s32.totalorder %s40, 0
      %p167 = por %p165, %p166
      %s168 = ssub.s32 %s34, %s41
      %p169 = scmp.eq.s32.totalorder %s168, 0
      %s171 = sadd.s32 %s170, 1
      %s172 = scalar_select %p169, %s170, %s171
      %p175 = pneg %p169
      %p176 = scmp.eq.s32.totalorder %s34, 1
      %p177 = por %p175, %p176
      %p178 = scmp.ne.s32.totalorder %s170, %s173
      %p179 = scmp.eq.s32.totalorder %s34, 0
      %p180 = por %p178, %p179
      %p181 = scmp.ne.s32.totalorder %s170, %s173
      %p182 = scmp.eq.s32.totalorder %s39, 1
      %p183 = por %p181, %p182
      %p184 = scmp.ne.s32.totalorder %s173, %s174
      %p185 = scmp.eq.s32.totalorder %s39, 0
      %p186 = por %p184, %p185
      %p187 = scmp.ne.s32.totalorder %s173, %s174
      %p188 = scmp.eq.s32.totalorder %s40, 1
      %p189 = por %p187, %p188
      %p191 = scmp.ne.s32.totalorder %s174, %s190
      %p192 = scmp.eq.s32.totalorder %s40, 0
      %p193 = por %p191, %p192
      %s194 = ssub.s32 %s34, %s41
      %p195 = scmp.eq.s32.totalorder %s194, 0
      %s197 = sadd.s32 %s196, 1
      %s198 = scalar_select %p195, %s196, %s197
      %p201 = pneg %p195
      %p202 = scmp.eq.s32.totalorder %s34, 1
      %p203 = por %p201, %p202
      %p204 = scmp.ne.s32.totalorder %s196, %s199
      %p205 = scmp.eq.s32.totalorder %s34, 0
      %p206 = por %p204, %p205
      %p207 = scmp.ne.s32.totalorder %s196, %s199
      %p208 = scmp.eq.s32.totalorder %s39, 1
      %p209 = por %p207, %p208
      %p210 = scmp.ne.s32.totalorder %s199, %s200
      %p211 = scmp.eq.s32.totalorder %s39, 0
      %p212 = por %p210, %p211
      %p213 = scmp.ne.s32.totalorder %s199, %s200
      %p214 = scmp.eq.s32.totalorder %s40, 1
      %p215 = por %p213, %p214
      %p217 = scmp.ne.s32.totalorder %s200, %s216
      %p218 = scmp.eq.s32.totalorder %s40, 0
      %p219 = por %p217, %p218
      %s220 = ssub.s32 %s34, %s41
      %p221 = scmp.eq.s32.totalorder %s220, 0
      %s223 = sadd.s32 %s222, 1
      %s224 = scalar_select %p221, %s222, %s223
      %p227 = pneg %p221
      %p228 = scmp.eq.s32.totalorder %s34, 1
      %p229 = por %p227, %p228
      %p230 = scmp.ne.s32.totalorder %s222, %s225
      %p231 = scmp.eq.s32.totalorder %s34, 0
      %p232 = por %p230, %p231
      %p233 = scmp.ne.s32.totalorder %s222, %s225
      %p234 = scmp.eq.s32.totalorder %s39, 1
      %p235 = por %p233, %p234
      %p236 = scmp.ne.s32.totalorder %s225, %s226
      %p237 = scmp.eq.s32.totalorder %s39, 0
      %p238 = por %p236, %p237
      %p239 = scmp.ne.s32.totalorder %s225, %s226
      %p240 = scmp.eq.s32.totalorder %s40, 1
      %p241 = por %p239, %p240
      %p243 = scmp.ne.s32.totalorder %s226, %s242
      %p244 = scmp.eq.s32.totalorder %s40, 0
      %p245 = por %p243, %p244
      %s246 = ssub.s32 %s34, %s41
      %p247 = scmp.eq.s32.totalorder %s246, 0
      %s249 = sadd.s32 %s248, 1
      %s250 = scalar_select %p247, %s248, %s249
      %p253 = pneg %p247
      %p254 = scmp.eq.s32.totalorder %s34, 1
      %p255 = por %p253, %p254
      %p256 = scmp.ne.s32.totalorder %s248, %s251
      %p257 = scmp.eq.s32.totalorder %s34, 0
      %p258 = por %p256, %p257
      %p259 = scmp.ne.s32.totalorder %s248, %s251
      %p260 = scmp.eq.s32.totalorder %s39, 1
      %p261 = por %p259, %p260
      %p262 = scmp.ne.s32.totalorder %s251, %s252
      %p263 = scmp.eq.s32.totalorder %s39, 0
      %p264 = por %p262, %p263
      %p265 = scmp.ne.s32.totalorder %s251, %s252
      %p266 = scmp.eq.s32.totalorder %s40, 1
      %p267 = por %p265, %p266
      %p269 = scmp.ne.s32.totalorder %s252, %s268
      %p270 = scmp.eq.s32.totalorder %s40, 0
      %p271 = por %p269, %p270
      %s272 = ssub.s32 %s34, %s41
      %p273 = scmp.eq.s32.totalorder %s272, 0
      %s275 = sadd.s32 %s274, 1
      %s276 = scalar_select %p273, %s274, %s275
      %p279 = pneg %p273
      %p280 = scmp.eq.s32.totalorder %s34, 1
      %p281 = por %p279, %p280
      %p282 = scmp.ne.s32.totalorder %s274, %s277
      %p283 = scmp.eq.s32.totalorder %s34, 0
      %p284 = por %p282, %p283
      %p285 = scmp.ne.s32.totalorder %s274, %s277
      %p286 = scmp.eq.s32.totalorder %s39, 1
      %p287 = por %p285, %p286
      %p288 = scmp.ne.s32.totalorder %s277, %s278
      %p289 = scmp.eq.s32.totalorder %s39, 0
      %p290 = por %p288, %p289
      %p291 = scmp.ne.s32.totalorder %s277, %s278
      %p292 = scmp.eq.s32.totalorder %s40, 1
      %p293 = por %p291, %p292
      %p295 = scmp.ne.s32.totalorder %s278, %s294
      %p296 = scmp.eq.s32.totalorder %s40, 0
      %p297 = por %p295, %p296
      %s298 = ssub.s32 %s34, %s41
      %p299 = scmp.eq.s32.totalorder %s298, 0
      %s301 = sadd.s32 %s300, 1
      %s302 = scalar_select %p299, %s300, %s301
      %p305 = pneg %p299
      %p306 = scmp.eq.s32.totalorder %s34, 1
      %p307 = por %p305, %p306
      %p308 = scmp.ne.s32.totalorder %s300, %s303
      %p309 = scmp.eq.s32.totalorder %s34, 0
      %p310 = por %p308, %p309
      %p311 = scmp.ne.s32.totalorder %s300, %s303
      %p312 = scmp.eq.s32.totalorder %s39, 1
      %p313 = por %p311, %p312
      %p314 = scmp.ne.s32.totalorder %s303, %s304
      %p315 = scmp.eq.s32.totalorder %s39, 0
      %p316 = por %p314, %p315
      %p317 = scmp.ne.s32.totalorder %s303, %s304
      %p318 = scmp.eq.s32.totalorder %s40, 1
      %p319 = por %p317, %p318
      %p321 = scmp.ne.s32.totalorder %s304, %s320
      %p322 = scmp.eq.s32.totalorder %s40, 0
      %p323 = por %p321, %p322
      %s324 = ssub.s32 %s34, %s41
      %p325 = scmp.eq.s32.totalorder %s324, 0
      %s327 = sadd.s32 %s326, 1
      %s328 = scalar_select %p325, %s326, %s327
      %p331 = pneg %p325
      %p332 = scmp.eq.s32.totalorder %s34, 1
      %p333 = por %p331, %p332
      %p334 = scmp.ne.s32.totalorder %s326, %s329
      %p335 = scmp.eq.s32.totalorder %s34, 0
      %p336 = por %p334, %p335
      %p337 = scmp.ne.s32.totalorder %s326, %s329
      %p338 = scmp.eq.s32.totalorder %s39, 1
      %p339 = por %p337, %p338
      %p340 = scmp.ne.s32.totalorder %s329, %s330
      %p341 = scmp.eq.s32.totalorder %s39, 0
      %p342 = por %p340, %p341
      %p343 = scmp.ne.s32.totalorder %s329, %s330
      %p344 = scmp.eq.s32.totalorder %s40, 1
      %p345 = por %p343, %p344
      %p347 = scmp.ne.s32.totalorder %s330, %s346
      %p348 = scmp.eq.s32.totalorder %s40, 0
      %p349 = por %p347, %p348
      %s350 = ssub.s32 %s34, %s41
      %p351 = scmp.eq.s32.totalorder %s350, 0
      %s353 = sadd.s32 %s352, 1
      %s354 = scalar_select %p351, %s352, %s353
      %p357 = pneg %p351
      %p358 = scmp.eq.s32.totalorder %s34, 1
      %p359 = por %p357, %p358
      %p360 = scmp.ne.s32.totalorder %s352, %s355
      %p361 = scmp.eq.s32.totalorder %s34, 0
      %p362 = por %p360, %p361
      %p363 = scmp.ne.s32.totalorder %s352, %s355
      %p364 = scmp.eq.s32.totalorder %s39, 1
      %p365 = por %p363, %p364
      %p366 = scmp.ne.s32.totalorder %s355, %s356
      %p367 = scmp.eq.s32.totalorder %s39, 0
      %p368 = por %p366, %p367
      %p369 = scmp.ne.s32.totalorder %s355, %s356
      %p370 = scmp.eq.s32.totalorder %s40, 1
      %p371 = por %p369, %p370
      %p373 = scmp.ne.s32.totalorder %s356, %s372
      %p374 = scmp.eq.s32.totalorder %s40, 0
      %p375 = por %p373, %p374
      %s376 = ssub.s32 %s34, %s41
      %p377 = scmp.eq.s32.totalorder %s376, 0
      %s379 = sadd.s32 %s378, 1
      %s380 = scalar_select %p377, %s378, %s379
      %p383 = pneg %p377
      %p384 = scmp.eq.s32.totalorder %s34, 1
      %p385 = por %p383, %p384
      %p386 = scmp.ne.s32.totalorder %s378, %s381
      %p387 = scmp.eq.s32.totalorder %s34, 0
      %p388 = por %p386, %p387
      %p389 = scmp.ne.s32.totalorder %s378, %s381
      %p390 = scmp.eq.s32.totalorder %s39, 1
      %p391 = por %p389, %p390
      %p392 = scmp.ne.s32.totalorder %s381, %s382
      %p393 = scmp.eq.s32.totalorder %s39, 0
      %p394 = por %p392, %p393
      %p395 = scmp.ne.s32.totalorder %s381, %s382
      %p396 = scmp.eq.s32.totalorder %s40, 1
      %p397 = por %p395, %p396
      %p399 = scmp.ne.s32.totalorder %s382, %s398
      %p400 = scmp.eq.s32.totalorder %s40, 0
      %p401 = por %p399, %p400
      %s402 = ssub.s32 %s34, %s41
      %p403 = scmp.eq.s32.totalorder %s402, 0
      %s405 = sadd.s32 %s404, 1
      %s406 = scalar_select %p403, %s404, %s405
      %p409 = pneg %p403
      %p410 = scmp.eq.s32.totalorder %s34, 1
      %p411 = por %p409, %p410
      %p412 = scmp.ne.s32.totalorder %s404, %s407
      %p413 = scmp.eq.s32.totalorder %s34, 0
      %p414 = por %p412, %p413
      %p415 = scmp.ne.s32.totalorder %s404, %s407
      %p416 = scmp.eq.s32.totalorder %s39, 1
      %p417 = por %p415, %p416
      %p418 = scmp.ne.s32.totalorder %s407, %s408
      %p419 = scmp.eq.s32.totalorder %s39, 0
      %p420 = por %p418, %p419
      %p421 = scmp.ne.s32.totalorder %s407, %s408
      %p422 = scmp.eq.s32.totalorder %s40, 1
      %p423 = por %p421, %p422
      %p425 = scmp.ne.s32.totalorder %s408, %s424
      %p426 = scmp.eq.s32.totalorder %s40, 0
      %p427 = por %p425, %p426
      %s428 = ssub.s32 %s34, %s41
      %p429 = scmp.eq.s32.totalorder %s428, 0
      %s431 = sadd.s32 %s430, 1
      %s432 = scalar_select %p429, %s430, %s431
      %p435 = pneg %p429
      %p436 = scmp.eq.s32.totalorder %s34, 1
      %p437 = por %p435, %p436
      %p438 = scmp.ne.s32.totalorder %s430, %s433
      %p439 = scmp.eq.s32.totalorder %s34, 0
      %p440 = por %p438, %p439
      %p441 = scmp.ne.s32.totalorder %s430, %s433
      %p442 = scmp.eq.s32.totalorder %s39, 1
      %p443 = por %p441, %p442
      %p444 = scmp.ne.s32.totalorder %s433, %s434
      %p445 = scmp.eq.s32.totalorder %s39, 0
      %p446 = por %p444, %p445
      %p447 = scmp.ne.s32.totalorder %s433, %s434
      %p448 = scmp.eq.s32.totalorder %s40, 1
      %p449 = por %p447, %p448
      %p451 = scmp.ne.s32.totalorder %s434, %s450
      %p452 = scmp.eq.s32.totalorder %s40, 0
      %p453 = por %p451, %p452
      %s454 = ssub.s32 %s34, %s41
      %p455 = scmp.eq.s32.totalorder %s454, 0
      %s457 = sadd.s32 %s456, 1
      %s458 = scalar_select %p455, %s456, %s457
      %p461 = pneg %p455
      %p462 = scmp.eq.s32.totalorder %s34, 1
      %p463 = por %p461, %p462
      %p464 = scmp.ne.s32.totalorder %s456, %s459
      %p465 = scmp.eq.s32.totalorder %s34, 0
      %p466 = por %p464, %p465
      %p467 = scmp.ne.s32.totalorder %s456, %s459
      %p468 = scmp.eq.s32.totalorder %s39, 1
      %p469 = por %p467, %p468
      %p470 = scmp.ne.s32.totalorder %s459, %s460
      %p471 = scmp.eq.s32.totalorder %s39, 0
      %p472 = por %p470, %p471
      %p473 = scmp.ne.s32.totalorder %s459, %s460
      %p474 = scmp.eq.s32.totalorder %s40, 1
      %p475 = por %p473, %p474
      %p477 = scmp.ne.s32.totalorder %s460, %s476
      %p478 = scmp.eq.s32.totalorder %s40, 0
      %p479 = por %p477, %p478
      %s480 = ssub.s32 %s34, %s41
      %p481 = scmp.eq.s32.totalorder %s480, 0
      %s483 = sadd.s32 %s482, 1
      %s484 = scalar_select %p481, %s482, %s483
      %p487 = pneg %p481
      %p488 = scmp.eq.s32.totalorder %s34, 1
      %p489 = por %p487, %p488
      %p490 = scmp.ne.s32.totalorder %s482, %s485
      %p491 = scmp.eq.s32.totalorder %s34, 0
      %p492 = por %p490, %p491
      %p493 = scmp.ne.s32.totalorder %s482, %s485
      %p494 = scmp.eq.s32.totalorder %s39, 1
      %p495 = por %p493, %p494
      %p496 = scmp.ne.s32.totalorder %s485, %s486
      %p497 = scmp.eq.s32.totalorder %s39, 0
      %p498 = por %p496, %p497
      %p499 = scmp.ne.s32.totalorder %s485, %s486
      %p500 = scmp.eq.s32.totalorder %s40, 1
      %p501 = por %p499, %p500
      %p503 = scmp.ne.s32.totalorder %s486, %s502
      %p504 = scmp.eq.s32.totalorder %s40, 0
      %p505 = por %p503, %p504
      %s506 = ssub.s32 %s34, %s41
      %p507 = scmp.eq.s32.totalorder %s506, 0
      %s509 = sadd.s32 %s508, 1
      %s510 = scalar_select %p507, %s508, %s509
      %p513 = pneg %p507
      %p514 = scmp.eq.s32.totalorder %s34, 1
      %p515 = por %p513, %p514
      %p516 = scmp.ne.s32.totalorder %s508, %s511
      %p517 = scmp.eq.s32.totalorder %s34, 0
      %p518 = por %p516, %p517
      %p519 = scmp.ne.s32.totalorder %s508, %s511
      %p520 = scmp.eq.s32.totalorder %s39, 1
      %p521 = por %p519, %p520
      %p522 = scmp.ne.s32.totalorder %s511, %s512
      %p523 = scmp.eq.s32.totalorder %s39, 0
      %p524 = por %p522, %p523
      %p525 = scmp.ne.s32.totalorder %s511, %s512
      %p526 = scmp.eq.s32.totalorder %s40, 1
      %p527 = por %p525, %p526
      %p529 = scmp.ne.s32.totalorder %s512, %s528
      %p530 = scmp.eq.s32.totalorder %s40, 0
      %p531 = por %p529, %p530
      %s532 = ssub.s32 %s34, %s41
      %p533 = scmp.eq.s32.totalorder %s532, 0
      %s535 = sadd.s32 %s534, 1
      %s536 = scalar_select %p533, %s534, %s535
      %p539 = pneg %p533
      %p540 = scmp.eq.s32.totalorder %s34, 1
      %p541 = por %p539, %p540
      %p542 = scmp.ne.s32.totalorder %s534, %s537
      %p543 = scmp.eq.s32.totalorder %s34, 0
      %p544 = por %p542, %p543
      %p545 = scmp.ne.s32.totalorder %s534, %s537
      %p546 = scmp.eq.s32.totalorder %s39, 1
      %p547 = por %p545, %p546
      %p548 = scmp.ne.s32.totalorder %s537, %s538
      %p549 = scmp.eq.s32.totalorder %s39, 0
      %p550 = por %p548, %p549
      %p551 = scmp.ne.s32.totalorder %s537, %s538
      %p552 = scmp.eq.s32.totalorder %s40, 1
      %p553 = por %p551, %p552
      %p555 = scmp.ne.s32.totalorder %s538, %s554
      %p556 = scmp.eq.s32.totalorder %s40, 0
      %p557 = por %p555, %p556
      %s558 = ssub.s32 %s34, %s41
      %p559 = scmp.eq.s32.totalorder %s558, 0
      %s561 = sadd.s32 %s560, 1
      %s562 = scalar_select %p559, %s560, %s561
      %p565 = pneg %p559
      %p566 = scmp.eq.s32.totalorder %s34, 1
      %p567 = por %p565, %p566
      %p568 = scmp.ne.s32.totalorder %s560, %s563
      %p569 = scmp.eq.s32.totalorder %s34, 0
      %p570 = por %p568, %p569
      %p571 = scmp.ne.s32.totalorder %s560, %s563
      %p572 = scmp.eq.s32.totalorder %s39, 1
      %p573 = por %p571, %p572
      %p574 = scmp.ne.s32.totalorder %s563, %s564
      %p575 = scmp.eq.s32.totalorder %s39, 0
      %p576 = por %p574, %p575
      %p577 = scmp.ne.s32.totalorder %s563, %s564
      %p578 = scmp.eq.s32.totalorder %s40, 1
      %p579 = por %p577, %p578
      %p581 = scmp.ne.s32.totalorder %s564, %s580
      %p582 = scmp.eq.s32.totalorder %s40, 0
      %p583 = por %p581, %p582
      %s585 = sadd.s32 %s584, 1
      %p588 = scmp.eq.s32.totalorder %s34, 1
      %p589 = scmp.ne.s32.totalorder %s584, %s586
      %p590 = scmp.eq.s32.totalorder %s34, 0
      %p591 = por %p589, %p590
      %p592 = scmp.ne.s32.totalorder %s584, %s586
      %p593 = scmp.eq.s32.totalorder %s39, 1
      %p594 = por %p592, %p593
      %p595 = scmp.ne.s32.totalorder %s586, %s587
      %p596 = scmp.eq.s32.totalorder %s39, 0
      %p597 = por %p595, %p596
      %p598 = scmp.ne.s32.totalorder %s586, %s587
      %p599 = scmp.eq.s32.totalorder %s40, 1
      %p600 = por %p598, %p599
      %p602 = scmp.ne.s32.totalorder %s587, %s601
      %p603 = scmp.eq.s32.totalorder %s40, 0
      %p604 = por %p602, %p603
      %s606 = sadd.s32 %s605, 1
      %p609 = scmp.eq.s32.totalorder %s34, 1
      %p610 = scmp.ne.s32.totalorder %s605, %s607
      %p611 = scmp.eq.s32.totalorder %s34, 0
      %p612 = por %p610, %p611
      %p613 = scmp.ne.s32.totalorder %s605, %s607
      %p614 = scmp.eq.s32.totalorder %s39, 1
      %p615 = por %p613, %p614
      %p616 = scmp.ne.s32.totalorder %s607, %s608
      %p617 = scmp.eq.s32.totalorder %s39, 0
      %p618 = por %p616, %p617
      %p619 = scmp.ne.s32.totalorder %s607, %s608
      %p620 = scmp.eq.s32.totalorder %s40, 1
      %p621 = por %p619, %p620
      %p623 = scmp.ne.s32.totalorder %s608, %s622
      %p624 = scmp.eq.s32.totalorder %s40, 0
      %p625 = por %p623, %p624
      %s627 = sadd.s32 %s626, 1
      %p630 = scmp.eq.s32.totalorder %s34, 1
      %p631 = scmp.ne.s32.totalorder %s626, %s628
      %p632 = scmp.eq.s32.totalorder %s34, 0
      %p633 = por %p631, %p632
      %p634 = scmp.ne.s32.totalorder %s626, %s628
      %p635 = scmp.eq.s32.totalorder %s39, 1
      %p636 = por %p634, %p635
      %p637 = scmp.ne.s32.totalorder %s628, %s629
      %p638 = scmp.eq.s32.totalorder %s39, 0
      %p639 = por %p637, %p638
      %p640 = scmp.ne.s32.totalorder %s628, %s629
      %p641 = scmp.eq.s32.totalorder %s40, 1
      %p642 = por %p640, %p641
      %p644 = scmp.ne.s32.totalorder %s629, %s643
      %p645 = scmp.eq.s32.totalorder %s40, 0
      %p646 = por %p644, %p645
      %s648 = sadd.s32 %s647, 1
      %p651 = scmp.eq.s32.totalorder %s34, 1
      %p652 = scmp.ne.s32.totalorder %s647, %s649
      %p653 = scmp.eq.s32.totalorder %s34, 0
      %p654 = por %p652, %p653
      %p655 = scmp.ne.s32.totalorder %s647, %s649
      %p656 = scmp.eq.s32.totalorder %s39, 1
      %p657 = por %p655, %p656
      %p658 = scmp.ne.s32.totalorder %s649, %s650
      %p659 = scmp.eq.s32.totalorder %s39, 0
      %p660 = por %p658, %p659
      %p661 = scmp.ne.s32.totalorder %s649, %s650
      %p662 = scmp.eq.s32.totalorder %s40, 1
      %p663 = por %p661, %p662
      %p665 = scmp.ne.s32.totalorder %s650, %s664
      %p666 = scmp.eq.s32.totalorder %s40, 0
      %p667 = por %p665, %p666
      %s669 = sadd.s32 %s668, 1
      %p672 = scmp.eq.s32.totalorder %s34, 1
      %p673 = scmp.ne.s32.totalorder %s668, %s670
      %p674 = scmp.eq.s32.totalorder %s34, 0
      %p675 = por %p673, %p674
      %p676 = scmp.ne.s32.totalorder %s668, %s670
      %p677 = scmp.eq.s32.totalorder %s39, 1
      %p678 = por %p676, %p677
      %p679 = scmp.ne.s32.totalorder %s670, %s671
      %p680 = scmp.eq.s32.totalorder %s39, 0
      %p681 = por %p679, %p680
      %p682 = scmp.ne.s32.totalorder %s670, %s671
      %p683 = scmp.eq.s32.totalorder %s40, 1
      %p684 = por %p682, %p683
      %p686 = scmp.ne.s32.totalorder %s671, %s685
      %p687 = scmp.eq.s32.totalorder %s40, 0
      %p688 = por %p686, %p687
      %s690 = sadd.s32 %s689, 1
      %p693 = scmp.eq.s32.totalorder %s34, 1
      %p694 = scmp.ne.s32.totalorder %s689, %s691
      %p695 = scmp.eq.s32.totalorder %s34, 0
      %p696 = por %p694, %p695
      %p697 = scmp.ne.s32.totalorder %s689, %s691
      %p698 = scmp.eq.s32.totalorder %s39, 1
      %p699 = por %p697, %p698
      %p700 = scmp.ne.s32.totalorder %s691, %s692
      %p701 = scmp.eq.s32.totalorder %s39, 0
      %p702 = por %p700, %p701
      %p703 = scmp.ne.s32.totalorder %s691, %s692
      %p704 = scmp.eq.s32.totalorder %s40, 1
      %p705 = por %p703, %p704
      %p707 = scmp.ne.s32.totalorder %s692, %s706
      %p708 = scmp.eq.s32.totalorder %s40, 0
      %p709 = por %p707, %p708
      %p710 = scmp.le.s32.totalorder 1, %s34
      %p711 = scmp.lt.s32.totalorder %s34, 3
      %p712 = pnand %p710, %p711
      %p713 = pneg %p712
      // Predicated region
      $region9: #{bert_classifier_forward.1} parent=5 // pred_check
        _
      $region10: #{bert_classifier_forward.1} parent=5 // pred_check_branch
        %715 = sbr.rel (%p712) target = $region12
      $region11: #{bert_classifier_forward.1} parent=5 // pred_region
        %s716 = ssub.s32 %s34, 1
        // Predicated region
        $region13: #{bert_classifier_forward.1} parent=11 // pred_check
          %p717 = pneg %p55
        $region14: #{bert_classifier_forward.1} parent=11 // pred_check_branch
          %719 = sbr.rel (%p717) target = $region16
        $region15: #{bert_classifier_forward.1} parent=11 // pred_region
          _
        $region16: #{bert_classifier_forward.1} parent=11 // pred_fallthru
          _
        // Predicated region
        $region17: #{bert_classifier_forward.1} parent=11 // pred_check
          %p720 = pneg %p76
        $region18: #{bert_classifier_forward.1} parent=11 // pred_check_branch
          %722 = sbr.rel (%p720) target = $region20
        $region19: #{bert_classifier_forward.1} parent=11 // pred_region
          _
        $region20: #{bert_classifier_forward.1} parent=11 // pred_fallthru
          _
        // Predicated region
        $region21: #{bert_classifier_forward.1} parent=11 // pred_check
          %p723 = pneg %p97
        $region22: #{bert_classifier_forward.1} parent=11 // pred_check_branch
          %725 = sbr.rel (%p723) target = $region24
        $region23: #{bert_classifier_forward.1} parent=11 // pred_region
          _
        $region24: #{bert_classifier_forward.1} parent=11 // pred_fallthru
          _
        // Predicated region
        $region25: #{bert_classifier_forward.1} parent=11 // pred_check
          %p726 = pneg %p118
        $region26: #{bert_classifier_forward.1} parent=11 // pred_check_branch
          %728 = sbr.rel (%p726) target = $region28
        $region27: #{bert_classifier_forward.1} parent=11 // pred_region
          _
        $region28: #{bert_classifier_forward.1} parent=11 // pred_fallthru
          _
        // Predicated region
        $region29: #{bert_classifier_forward.1} parent=11 // pred_check
          %p729 = pneg %p139
        $region30: #{bert_classifier_forward.1} parent=11 // pred_check_branch
          %731 = sbr.rel (%p729) target = $region32
        $region31: #{bert_classifier_forward.1} parent=11 // pred_region
          _
        $region32: #{bert_classifier_forward.1} parent=11 // pred_fallthru
          _
        // Predicated region
        $region33: #{bert_classifier_forward.1} parent=11 // pred_check
          %p732 = pneg %p160
        $region34: #{bert_classifier_forward.1} parent=11 // pred_check_branch
          %734 = sbr.rel (%p732) target = $region36
        $region35: #{bert_classifier_forward.1} parent=11 // pred_region
          _
        $region36: #{bert_classifier_forward.1} parent=11 // pred_fallthru
          _
        // Predicated region
        $region37: #{bert_classifier_forward.1} parent=11 // pred_check
          %p735 = pneg %p597
        $region38: #{bert_classifier_forward.1} parent=11 // pred_check_branch
          %737 = sbr.rel (%p735) target = $region40
        $region39: #{bert_classifier_forward.1} parent=11 // pred_region
          _
        $region40: #{bert_classifier_forward.1} parent=11 // pred_fallthru
          _
        // Predicated region
        $region41: #{bert_classifier_forward.1} parent=11 // pred_check
          %p738 = pneg %p618
        $region42: #{bert_classifier_forward.1} parent=11 // pred_check_branch
          %740 = sbr.rel (%p738) target = $region44
        $region43: #{bert_classifier_forward.1} parent=11 // pred_region
          _
        $region44: #{bert_classifier_forward.1} parent=11 // pred_fallthru
          _
        // Predicated region
        $region45: #{bert_classifier_forward.1} parent=11 // pred_check
          %p741 = pneg %p639
        $region46: #{bert_classifier_forward.1} parent=11 // pred_check_branch
          %743 = sbr.rel (%p741) target = $region48
        $region47: #{bert_classifier_forward.1} parent=11 // pred_region
          _
        $region48: #{bert_classifier_forward.1} parent=11 // pred_fallthru
          _
        // Predicated region
        $region49: #{bert_classifier_forward.1} parent=11 // pred_check
          %p744 = pneg %p660
        $region50: #{bert_classifier_forward.1} parent=11 // pred_check_branch
          %746 = sbr.rel (%p744) target = $region52
        $region51: #{bert_classifier_forward.1} parent=11 // pred_region
          _
        $region52: #{bert_classifier_forward.1} parent=11 // pred_fallthru
          _
        // Predicated region
        $region53: #{bert_classifier_forward.1} parent=11 // pred_check
          %p747 = pneg %p681
        $region54: #{bert_classifier_forward.1} parent=11 // pred_check_branch
          %749 = sbr.rel (%p747) target = $region56
        $region55: #{bert_classifier_forward.1} parent=11 // pred_region
          _
        $region56: #{bert_classifier_forward.1} parent=11 // pred_fallthru
          _
      $region12: #{bert_classifier_forward.1} parent=5 // pred_fallthru
        _
      %p750 = scmp.lt.s32.totalorder %s34, 2
      // Predicated region
      $region57: #{bert_classifier_forward.1} parent=5 // pred_check
        %p751 = pneg %p750
      $region58: #{bert_classifier_forward.1} parent=5 // pred_check_branch
        %753 = sbr.rel (%p751) target = $region60
      $region59: #{bert_classifier_forward.1} parent=5 // pred_region
        // Predicated region
        $region61: #{bert_classifier_forward.1} parent=59 // pred_check
          %p754 = pneg %p180
        $region62: #{bert_classifier_forward.1} parent=59 // pred_check_branch
          %756 = sbr.rel (%p754) target = $region64
        $region63: #{bert_classifier_forward.1} parent=59 // pred_region
          %p757 = scmp.lt.s32.totalorder %s34, 1
          %s758 = scalar_select %p757, %s34, 1
          %s759 = smul.addr %s758, 8
          %s760 = smul.addr %s759, 4
          %s761 = scalar_lea.vmem %s6, %s760
        $region64: #{bert_classifier_forward.1} parent=59 // pred_fallthru
          _
        // Predicated region
        $region65: #{bert_classifier_forward.1} parent=59 // pred_check
          %p762 = pneg %p206
        $region66: #{bert_classifier_forward.1} parent=59 // pred_check_branch
          %764 = sbr.rel (%p762) target = $region68
        $region67: #{bert_classifier_forward.1} parent=59 // pred_region
          %p765 = scmp.lt.s32.totalorder %s34, 1
          %s766 = scalar_select %p765, %s34, 1
          %s767 = smul.addr %s766, 2
          %s768 = scalar_lea.vmem %s7, %s767
        $region68: #{bert_classifier_forward.1} parent=59 // pred_fallthru
          _
        // Predicated region
        $region69: #{bert_classifier_forward.1} parent=59 // pred_check
          %p769 = pneg %p232
        $region70: #{bert_classifier_forward.1} parent=59 // pred_check_branch
          %771 = sbr.rel (%p769) target = $region72
        $region71: #{bert_classifier_forward.1} parent=59 // pred_region
          %p772 = scmp.lt.s32.totalorder %s34, 1
          %s773 = scalar_select %p772, %s34, 1
          %s774 = smul.addr %s773, 8
          %s775 = smul.addr %s774, 4
          %s776 = scalar_lea.vmem %s8, %s775
        $region72: #{bert_classifier_forward.1} parent=59 // pred_fallthru
          _
        // Predicated region
        $region73: #{bert_classifier_forward.1} parent=59 // pred_check
          %p777 = pneg %p258
        $region74: #{bert_classifier_forward.1} parent=59 // pred_check_branch
          %779 = sbr.rel (%p777) target = $region76
        $region75: #{bert_classifier_forward.1} parent=59 // pred_region
          %p780 = scmp.lt.s32.totalorder %s34, 1
          %s781 = scalar_select %p780, %s34, 1
          %s782 = smul.addr %s781, 2
          %s783 = scalar_lea.vmem %s9, %s782
        $region76: #{bert_classifier_forward.1} parent=59 // pred_fallthru
          _
        // Predicated region
        $region77: #{bert_classifier_forward.1} parent=59 // pred_check
          %p784 = pneg %p284
        $region78: #{bert_classifier_forward.1} parent=59 // pred_check_branch
          %786 = sbr.rel (%p784) target = $region80
        $region79: #{bert_classifier_forward.1} parent=59 // pred_region
          %p787 = scmp.lt.s32.totalorder %s34, 1
          %s788 = scalar_select %p787, %s34, 1
          %s789 = smul.addr %s788, 8
          %s790 = smul.addr %s789, 4
          %s791 = scalar_lea.vmem %s10, %s790
        $region80: #{bert_classifier_forward.1} parent=59 // pred_fallthru
          _
        // Predicated region
        $region81: #{bert_classifier_forward.1} parent=59 // pred_check
          %p792 = pneg %p310
        $region82: #{bert_classifier_forward.1} parent=59 // pred_check_branch
          %794 = sbr.rel (%p792) target = $region84
        $region83: #{bert_classifier_forward.1} parent=59 // pred_region
          %p795 = scmp.lt.s32.totalorder %s34, 1
          %s796 = scalar_select %p795, %s34, 1
          %s797 = smul.addr %s796, 2
          %s798 = scalar_lea.vmem %s11, %s797
        $region84: #{bert_classifier_forward.1} parent=59 // pred_fallthru
          _
        // Predicated region
        $region85: #{bert_classifier_forward.1} parent=59 // pred_check
          %p799 = pneg %p336
        $region86: #{bert_classifier_forward.1} parent=59 // pred_check_branch
          %801 = sbr.rel (%p799) target = $region88
        $region87: #{bert_classifier_forward.1} parent=59 // pred_region
          %p802 = scmp.lt.s32.totalorder %s34, 1
          %s803 = scalar_select %p802, %s34, 1
          %s804 = smul.addr %s803, 4
          %s805 = smul.addr %s804, 4
          %s806 = scalar_lea.vmem %s12, %s805
        $region88: #{bert_classifier_forward.1} parent=59 // pred_fallthru
          _
        // Predicated region
        $region89: #{bert_classifier_forward.1} parent=59 // pred_check
          %p807 = pneg %p362
        $region90: #{bert_classifier_forward.1} parent=59 // pred_check_branch
          %809 = sbr.rel (%p807) target = $region92
        $region91: #{bert_classifier_forward.1} parent=59 // pred_region
          %p810 = scmp.lt.s32.totalorder %s34, 1
          %s811 = scalar_select %p810, %s34, 1
          %s812 = scalar_lea.vmem %s13, %s811
        $region92: #{bert_classifier_forward.1} parent=59 // pred_fallthru
          _
        // Predicated region
        $region93: #{bert_classifier_forward.1} parent=59 // pred_check
          %p813 = pneg %p388
        $region94: #{bert_classifier_forward.1} parent=59 // pred_check_branch
          %815 = sbr.rel (%p813) target = $region96
        $region95: #{bert_classifier_forward.1} parent=59 // pred_region
          %p816 = scmp.lt.s32.totalorder %s34, 1
          %s817 = scalar_select %p816, %s34, 1
          %s818 = scalar_lea.vmem %s14, %s817
        $region96: #{bert_classifier_forward.1} parent=59 // pred_fallthru
          _
        // Predicated region
        $region97: #{bert_classifier_forward.1} parent=59 // pred_check
          %p819 = pneg %p414
        $region98: #{bert_classifier_forward.1} parent=59 // pred_check_branch
          %821 = sbr.rel (%p819) target = $region100
        $region99: #{bert_classifier_forward.1} parent=59 // pred_region
          %p822 = scmp.lt.s32.totalorder %s34, 1
          %s823 = scalar_select %p822, %s34, 1
          %s824 = scalar_lea.vmem %s15, %s823
        $region100: #{bert_classifier_forward.1} parent=59 // pred_fallthru
          _
        // Predicated region
        $region101: #{bert_classifier_forward.1} parent=59 // pred_check
          %p825 = pneg %p440
        $region102: #{bert_classifier_forward.1} parent=59 // pred_check_branch
          %827 = sbr.rel (%p825) target = $region104
        $region103: #{bert_classifier_forward.1} parent=59 // pred_region
          %p828 = scmp.lt.s32.totalorder %s34, 1
          %s829 = scalar_select %p828, %s34, 1
          %s830 = smul.addr %s829, 4
          %s831 = smul.addr %s830, 4
          %s832 = scalar_lea.vmem %s16, %s831
        $region104: #{bert_classifier_forward.1} parent=59 // pred_fallthru
          _
        // Predicated region
        $region105: #{bert_classifier_forward.1} parent=59 // pred_check
          %p833 = pneg %p466
        $region106: #{bert_classifier_forward.1} parent=59 // pred_check_branch
          %835 = sbr.rel (%p833) target = $region108
        $region107: #{bert_classifier_forward.1} parent=59 // pred_region
          %p836 = scmp.lt.s32.totalorder %s34, 1
          %s837 = scalar_select %p836, %s34, 1
          %s838 = scalar_lea.vmem %s17, %s837
        $region108: #{bert_classifier_forward.1} parent=59 // pred_fallthru
          _
        // Predicated region
        $region109: #{bert_classifier_forward.1} parent=59 // pred_check
          %p839 = pneg %p492
        $region110: #{bert_classifier_forward.1} parent=59 // pred_check_branch
          %841 = sbr.rel (%p839) target = $region112
        $region111: #{bert_classifier_forward.1} parent=59 // pred_region
          %p842 = scmp.lt.s32.totalorder %s34, 1
          %s843 = scalar_select %p842, %s34, 1
          %s844 = smul.addr %s843, 8
          %s845 = smul.addr %s844, 4
          %s846 = scalar_lea.vmem %s18, %s845
        $region112: #{bert_classifier_forward.1} parent=59 // pred_fallthru
          _
        // Predicated region
        $region113: #{bert_classifier_forward.1} parent=59 // pred_check
          %p847 = pneg %p518
        $region114: #{bert_classifier_forward.1} parent=59 // pred_check_branch
          %849 = sbr.rel (%p847) target = $region116
        $region115: #{bert_classifier_forward.1} parent=59 // pred_region
          %p850 = scmp.lt.s32.totalorder %s34, 1
          %s851 = scalar_select %p850, %s34, 1
          %s852 = scalar_lea.vmem %s19, %s851
        $region116: #{bert_classifier_forward.1} parent=59 // pred_fallthru
          _
        // Predicated region
        $region117: #{bert_classifier_forward.1} parent=59 // pred_check
          %p853 = pneg %p544
        $region118: #{bert_classifier_forward.1} parent=59 // pred_check_branch
          %855 = sbr.rel (%p853) target = $region120
        $region119: #{bert_classifier_forward.1} parent=59 // pred_region
          %p856 = scmp.lt.s32.totalorder %s34, 1
          %s857 = scalar_select %p856, %s34, 1
          %s858 = scalar_lea.vmem %s20, %s857
        $region120: #{bert_classifier_forward.1} parent=59 // pred_fallthru
          _
        // Predicated region
        $region121: #{bert_classifier_forward.1} parent=59 // pred_check
          %p859 = pneg %p570
        $region122: #{bert_classifier_forward.1} parent=59 // pred_check_branch
          %861 = sbr.rel (%p859) target = $region124
        $region123: #{bert_classifier_forward.1} parent=59 // pred_region
          %p862 = scmp.lt.s32.totalorder %s34, 1
          %s863 = scalar_select %p862, %s34, 1
          %s864 = scalar_lea.vmem %s21, %s863
        $region124: #{bert_classifier_forward.1} parent=59 // pred_fallthru
          _
      $region60: #{bert_classifier_forward.1} parent=5 // pred_fallthru
        _
      %p865 = scmp.le.s32.totalorder 1, %s34
      %p866 = scmp.lt.s32.totalorder %s34, 3
      %p867 = pnand %p865, %p866
      %p868 = pneg %p867
      // Predicated region
      $region125: #{bert_classifier_forward.1} parent=5 // pred_check
        _
      $region126: #{bert_classifier_forward.1} parent=5 // pred_check_branch
        %870 = sbr.rel (%p867) target = $region128
      $region127: #{bert_classifier_forward.1} parent=5 // pred_region
        %s871 = ssub.s32 %s34, 1
        %p872 = pneg %p55
        %p873 = pneg %p52
        %p874 = pneg %p76
        %p875 = pneg %p73
        %p876 = pneg %p97
        %p877 = pneg %p94
        %p878 = pneg %p118
        %p879 = pneg %p115
        %p880 = pneg %p139
        %p881 = pneg %p136
        %p882 = pneg %p160
        %p883 = pneg %p157
        %p884 = scmp.lt.s32.totalorder %s39, 1
        %s885 = scalar_select %p884, %s39, 1
        %s886 = smul.addr %s885, 8
        %s887 = smul.addr %s886, 4
        %s888 = scalar_lea.vmem %s6, %s887
        %p889 = pneg %p186
        %p890 = pneg %p183
        %p891 = scmp.lt.s32.totalorder %s39, 1
        %s892 = scalar_select %p891, %s39, 1
        %s893 = smul.addr %s892, 2
        %s894 = scalar_lea.vmem %s7, %s893
        %p895 = pneg %p212
        %p896 = pneg %p209
        %p897 = scmp.lt.s32.totalorder %s39, 1
        %s898 = scalar_select %p897, %s39, 1
        %s899 = smul.addr %s898, 8
        %s900 = smul.addr %s899, 4
        %s901 = scalar_lea.vmem %s8, %s900
        %p902 = pneg %p238
        %p903 = pneg %p235
        %p904 = scmp.lt.s32.totalorder %s39, 1
        %s905 = scalar_select %p904, %s39, 1
        %s906 = smul.addr %s905, 2
        %s907 = scalar_lea.vmem %s9, %s906
        %p908 = pneg %p264
        %p909 = pneg %p261
        %p910 = scmp.lt.s32.totalorder %s39, 1
        %s911 = scalar_select %p910, %s39, 1
        %s912 = smul.addr %s911, 8
        %s913 = smul.addr %s912, 4
        %s914 = scalar_lea.vmem %s10, %s913
        %p915 = pneg %p290
        %p916 = pneg %p287
        %p917 = scmp.lt.s32.totalorder %s39, 1
        %s918 = scalar_select %p917, %s39, 1
        %s919 = smul.addr %s918, 2
        %s920 = scalar_lea.vmem %s11, %s919
        %p921 = pneg %p316
        %p922 = pneg %p313
        %p923 = scmp.lt.s32.totalorder %s39, 1
        %s924 = scalar_select %p923, %s39, 1
        %s925 = smul.addr %s924, 4
        %s926 = smul.addr %s925, 4
        %s927 = scalar_lea.vmem %s12, %s926
        %p928 = pneg %p342
        %p929 = pneg %p339
        %p930 = scmp.lt.s32.totalorder %s39, 1
        %s931 = scalar_select %p930, %s39, 1
        %s932 = scalar_lea.vmem %s13, %s931
        %p933 = pneg %p368
        %p934 = pneg %p365
        %p935 = scmp.lt.s32.totalorder %s39, 1
        %s936 = scalar_select %p935, %s39, 1
        %s937 = scalar_lea.vmem %s14, %s936
        %p938 = pneg %p394
        %p939 = pneg %p391
        %p940 = scmp.lt.s32.totalorder %s39, 1
        %s941 = scalar_select %p940, %s39, 1
        %s942 = scalar_lea.vmem %s15, %s941
        %p943 = pneg %p420
        %p944 = pneg %p417
        %p945 = scmp.lt.s32.totalorder %s39, 1
        %s946 = scalar_select %p945, %s39, 1
        %s947 = smul.addr %s946, 4
        %s948 = smul.addr %s947, 4
        %s949 = scalar_lea.vmem %s16, %s948
        %p950 = pneg %p446
        %p951 = pneg %p443
        %p952 = scmp.lt.s32.totalorder %s39, 1
        %s953 = scalar_select %p952, %s39, 1
        %s954 = scalar_lea.vmem %s17, %s953
        %p955 = pneg %p472
        %p956 = pneg %p469
        %p957 = scmp.lt.s32.totalorder %s39, 1
        %s958 = scalar_select %p957, %s39, 1
        %s959 = smul.addr %s958, 8
        %s960 = smul.addr %s959, 4
        %s961 = scalar_lea.vmem %s18, %s960
        %p962 = pneg %p498
        %p963 = pneg %p495
        %p964 = scmp.lt.s32.totalorder %s39, 1
        %s965 = scalar_select %p964, %s39, 1
        %s966 = scalar_lea.vmem %s19, %s965
        %p967 = pneg %p524
        %p968 = pneg %p521
        %p969 = scmp.lt.s32.totalorder %s39, 1
        %s970 = scalar_select %p969, %s39, 1
        %s971 = scalar_lea.vmem %s20, %s970
        %p972 = pneg %p550
        %p973 = pneg %p547
        %p974 = scmp.lt.s32.totalorder %s39, 1
        %s975 = scalar_select %p974, %s39, 1
        %s976 = scalar_lea.vmem %s21, %s975
        %p977 = pneg %p576
        %p978 = pneg %p573
        %p979 = pneg %p597
        %p980 = pneg %p594
        %p981 = pneg %p618
        %p982 = pneg %p615
        %p983 = pneg %p639
        %p984 = pneg %p636
        %p985 = pneg %p660
        %p986 = pneg %p657
        %p987 = pneg %p681
        %p988 = pneg %p678
        %p989 = pneg %p702
        %p990 = pneg %p699
        %p991 = scmp.lt.s32.totalorder %s39, 1
        %s992 = scalar_select %p991, %s39, 1
        %s993 = smul.addr %s992, 8
        %s994 = smul.addr %s993, 4
        %s995 = scalar_lea.vmem %s6, %s994
        %p996 = scmp.lt.s32.totalorder %s39, 1
        %s997 = scalar_select %p996, %s39, 1
        %s998 = smul.addr %s997, 2
        %s999 = scalar_lea.vmem %s7, %s998
        %p1000 = scmp.lt.s32.totalorder %s39, 1
        %s1001 = scalar_select %p1000, %s39, 1
        %s1002 = smul.addr %s1001, 8
        %s1003 = smul.addr %s1002, 4
        %s1004 = scalar_lea.vmem %s8, %s1003
        %p1005 = scmp.lt.s32.totalorder %s39, 1
        %s1006 = scalar_select %p1005, %s39, 1
        %s1007 = smul.addr %s1006, 2
        %s1008 = scalar_lea.vmem %s9, %s1007
        %p1009 = scmp.lt.s32.totalorder %s39, 1
        %s1010 = scalar_select %p1009, %s39, 1
        %s1011 = smul.addr %s1010, 8
        %s1012 = smul.addr %s1011, 4
        %s1013 = scalar_lea.vmem %s10, %s1012
        %p1014 = scmp.lt.s32.totalorder %s39, 1
        %s1015 = scalar_select %p1014, %s39, 1
        %s1016 = smul.addr %s1015, 2
        %s1017 = scalar_lea.vmem %s11, %s1016
        %p1018 = scmp.lt.s32.totalorder %s39, 1
        %s1019 = scalar_select %p1018, %s39, 1
        %s1020 = smul.addr %s1019, 4
        %s1021 = smul.addr %s1020, 4
        %s1022 = scalar_lea.vmem %s12, %s1021
        %p1023 = scmp.lt.s32.totalorder %s39, 1
        %s1024 = scalar_select %p1023, %s39, 1
        %s1025 = scalar_lea.vmem %s13, %s1024
        %p1026 = scmp.lt.s32.totalorder %s39, 1
        %s1027 = scalar_select %p1026, %s39, 1
        %s1028 = scalar_lea.vmem %s14, %s1027
        %p1029 = scmp.lt.s32.totalorder %s39, 1
        %s1030 = scalar_select %p1029, %s39, 1
        %s1031 = scalar_lea.vmem %s15, %s1030
        %p1032 = scmp.lt.s32.totalorder %s39, 1
        %s1033 = scalar_select %p1032, %s39, 1
        %s1034 = smul.addr %s1033, 4
        %s1035 = smul.addr %s1034, 4
        %s1036 = scalar_lea.vmem %s16, %s1035
        %p1037 = scmp.lt.s32.totalorder %s39, 1
        %s1038 = scalar_select %p1037, %s39, 1
        %s1039 = scalar_lea.vmem %s17, %s1038
        %p1040 = scmp.lt.s32.totalorder %s39, 1
        %s1041 = scalar_select %p1040, %s39, 1
        %s1042 = smul.addr %s1041, 8
        %s1043 = smul.addr %s1042, 4
        %s1044 = scalar_lea.vmem %s18, %s1043
        %p1045 = scmp.lt.s32.totalorder %s39, 1
        %s1046 = scalar_select %p1045, %s39, 1
        %s1047 = scalar_lea.vmem %s19, %s1046
        %p1048 = scmp.lt.s32.totalorder %s39, 1
        %s1049 = scalar_select %p1048, %s39, 1
        %s1050 = scalar_lea.vmem %s20, %s1049
        %p1051 = scmp.lt.s32.totalorder %s39, 1
        %s1052 = scalar_select %p1051, %s39, 1
        %s1053 = scalar_lea.vmem %s21, %s1052
        %p1055 = scmp.eq.s32.totalorder %s39, 0
        // Predicated region
        $region129: #{bert_classifier_forward.1} parent=127 // pred_check
          %p1056 = pneg %p1055
        $region130: #{bert_classifier_forward.1} parent=127 // pred_check_branch
          %1058 = sbr.rel (%p1056) target = $region132
        $region131: #{bert_classifier_forward.1} parent=127 // pred_region
          %v1059 = vld [vmem:[%s0] sm:$0xff]
          %v1060 = vld [vmem:[%s0 + $0x8] sm:$0xff]
          %v1061 = vlaneseq
          %v1062 = vand.u32 %v1061, 127
          %1063 = vset.pattern.permute.xlu0 0
          %1064 = vperm.xlu0 %1063, %v1059
          %v1065 = vpop.permute.xlu0 %1064
          %1066 = vset.pattern.permute.xlu0 0
          %1067 = vperm.xlu0 %1066, %v1060
          %v1068 = vpop.permute.xlu0 %1067
          %vm1069 = vcmp.eq.s32.totalorder %v1065, %v1062
          %vm1070 = vcmp.eq.s32.totalorder %v1068, %v1062
          %v1071 = vsel %vm1069, 1, 0
          %v1072 = vsel %vm1070, 1, 0
          %v1073 = vcvt.s32.f32 %v1071
          %v1074 = vcvt.s32.f32 %v1072
          %v1075 = vld [vmem:[%s1] sm:$0xff]
          %v1076 = vld [vmem:[%s1 + $0x8] sm:$0xff]
          %v1077 = vld [vmem:[%s1 + $0x10] sm:$0xff]
          %v1078 = vld [vmem:[%s1 + $0x18] sm:$0xff]
          %v1079 = vld [vmem:[%s1 + $0x20] sm:$0xff]
          %v1080 = vld [vmem:[%s1 + $0x28] sm:$0xff]
          %v1081 = vld [vmem:[%s1 + $0x30] sm:$0xff]
          %v1082 = vld [vmem:[%s1 + $0x38] sm:$0xff]
          %v1083 = vld [vmem:[%s1 + $0x40] sm:$0xff]
          %v1084 = vld [vmem:[%s1 + $0x48] sm:$0xff]
          %v1085 = vld [vmem:[%s1 + $0x50] sm:$0xff]
          %v1086 = vld [vmem:[%s1 + $0x58] sm:$0xff]
          %v1087 = vld [vmem:[%s1 + $0x60] sm:$0xff]
          %v1088 = vld [vmem:[%s1 + $0x68] sm:$0xff]
          %v1089 = vld [vmem:[%s1 + $0x70] sm:$0xff]
          %v1090 = vld [vmem:[%s1 + $0x78] sm:$0xff]
          %v1091 = vld [vmem:[%s2] sm:$0xff]
          %v1092 = vld [vmem:[%s2 + $0x8] sm:$0xff]
          %1093 = vmatprep.subr.mxu0 0.0
          %1094 = vmatpush1.msra.mxu0 %v1090
          %1095 = vmatprep.subr.mxu0 0.0
          %1096 = vmatpush1.msra.mxu0 %v1089
          %1097 = vmatprep.subr.mxu0 0.0
          %1098 = vmatpush1.msra.mxu0 %v1088
          %1099 = vmatprep.subr.mxu0 0.0
          %1100 = vmatpush1.msra.mxu0 %v1087
          %1101 = vmatprep.subr.mxu0 0.0
          %1102 = vmatpush1.msra.mxu0 %v1086
          %1103 = vmatprep.subr.mxu0 0.0
          %1104 = vmatpush1.msra.mxu0 %v1085
          %1105 = vmatprep.subr.mxu0 0.0
          %1106 = vmatpush1.msra.mxu0 %v1084
          %1107 = vmatprep.subr.mxu0 0.0
          %1108 = vmatpush1.msra.mxu0 %v1083
          %1109 = vmatprep.subr.mxu0 0.0
          %1110 = vmatpush1.msra.mxu0 %v1082
          %1111 = vmatprep.subr.mxu0 0.0
          %1112 = vmatpush1.msra.mxu0 %v1081
          %1113 = vmatprep.subr.mxu0 0.0
          %1114 = vmatpush1.msra.mxu0 %v1080
          %1115 = vmatprep.subr.mxu0 0.0
          %1116 = vmatpush1.msra.mxu0 %v1079
          %1117 = vmatprep.subr.mxu0 0.0
          %1118 = vmatpush1.msra.mxu0 %v1078
          %1119 = vmatprep.subr.mxu0 0.0
          %1120 = vmatpush1.msra.mxu0 %v1077
          %1121 = vmatprep.subr.mxu0 0.0
          %1122 = vmatpush1.msra.mxu0 %v1076
          %1123 = vmatprep.subr.mxu0 0.0
          %1124 = vmatpush1.msra.mxu0 %v1075
          %1125 = vmatprep.subr.mxu0 0.0
          %1126 = vmatpush2.msra.mxu0 0.0
          %1127 = vmatprep.subr.mxu0 0.0
          %1128 = vmatpush2.msra.mxu0 0.0
          %1129 = vmatprep.subr.mxu0 0.0
          %1130 = vmatpush2.msra.mxu0 0.0
          %1131 = vmatprep.subr.mxu0 0.0
          %1132 = vmatpush2.msra.mxu0 0.0
          %1133 = vmatprep.subr.mxu0 0.0
          %1134 = vmatpush2.msra.mxu0 0.0
          %1135 = vmatprep.subr.mxu0 0.0
          %1136 = vmatpush2.msra.mxu0 0.0
          %1137 = vmatprep.subr.mxu0 0.0
          %1138 = vmatpush2.msra.mxu0 0.0
          %1139 = vmatprep.subr.mxu0 0.0
          %1140 = vmatpush2.msra.mxu0 0.0
          %1141 = vmatprep.subr.mxu0 0.0
          %1142 = vmatpush2.msra.mxu0 0.0
          %1143 = vmatprep.subr.mxu0 0.0
          %1144 = vmatpush2.msra.mxu0 0.0
          %1145 = vmatprep.subr.mxu0 0.0
          %1146 = vmatpush2.msra.mxu0 0.0
          %1147 = vmatprep.subr.mxu0 0.0
          %1148 = vmatpush2.msra.mxu0 0.0
          %1149 = vmatprep.subr.mxu0 0.0
          %1150 = vmatpush2.msra.mxu0 0.0
          %1151 = vmatprep.subr.mxu0 0.0
          %1152 = vmatpush2.msra.mxu0 0.0
          %1153 = vmatprep.subr.mxu0 0.0
          %1154 = vmatpush2.msra.mxu0 0.0
          %1155 = vmatprep.subr.mxu0 0.0
          %1156 = vmatpush2.msra.mxu0 0.0
          %1157 = vmatprep.mubr.f32.mxu0 0.0
          %1158 = vmatmul.mubr.f32.gmra.mxu0 %v1073
          %v1159 = vpop.f32.mrf.mxu0
          %v1160 = vadd.f32 %v1091, %v1159
          %v1161 = vpop.f32.mrf.mxu0
          %1162 = vmatprep.mubr.f32.mxu0 0.0
          %1163 = vmatmul.mubr.f32.gmra.mxu0 %v1074
          %v1164 = vpop.f32.mrf.mxu0
          %v1165 = vadd.f32 %v1092, %v1164
          %v1166 = vpop.f32.mrf.mxu0
          %1167 = vdwg.mxu0
          %v1168 = vld [vmem:[%s3] sm:$0x1]
          %v1169 = vld [vmem:[%s4] sm:$0x1]
          %vm1170 = vcmask 261120
          %v1171 = vsel %vm1170, %v1160, 0.0
          %1172 = vadd.xlane.f32.xlu0 %v1171
          %v1173 = vpop.xlane.xlu0 %1172
          %v1174 = vsel %vm1170, %v1165, 0.0
          %1175 = vadd.xlane.f32.xlu0 %v1174
          %v1176 = vpop.xlane.xlu0 %1175
          %v1177 = vrcp.pop 32.0
          %v1178 = vmul.f32 %v1173, %v1177
          %v1179 = vmul.f32 %v1176, %v1177
          %v1180 = vsub.f32 %v1160, %v1178
          %v1181 = vsub.f32 %v1165, %v1179
          %v1182 = vmul.f32 %v1180, %v1180
          %v1183 = vmul.f32 %v1181, %v1181
          %v1184 = vsel %vm1170, %v1182, 0.0
          %1185 = vadd.xlane.f32.xlu0 %v1184
          %v1186 = vpop.xlane.xlu0 %1185
          %v1187 = vsel %vm1170, %v1183, 0.0
          %1188 = vadd.xlane.f32.xlu0 %v1187
          %v1189 = vpop.xlane.xlu0 %1188
          %v1190 = vmul.f32 %v1186, %v1177
          %v1191 = vmul.f32 %v1189, %v1177
          %v1192 = vadd.f32 %v1190, 1e-12
          %v1193 = vadd.f32 %v1191, 1e-12
          %v1194 = vrsqrt.pop %v1192
          %v1195 = vrsqrt.pop %v1193
          %v1196 = vmul.f32 %v1180, %v1194
          %v1197 = vmul.f32 %v1181, %v1195
          %v1199 = vlaneseq
          %v1200 = vshrl.u32 %v1199, 7
          %v1201 = vsub.s32 0, %v1200
          %v1202 = vrot.slane %v1168, %v1201
          %v1204 = vmul.f32 %v1196, %v1202
          %v1205 = vmul.f32 %v1197, %v1202
          %v1207 = vlaneseq
          %v1208 = vshrl.u32 %v1207, 7
          %v1209 = vsub.s32 0, %v1208
          %v1210 = vrot.slane %v1169, %v1209
          %v1212 = vadd.f32 %v1204, %v1210
          %v1213 = vadd.f32 %v1205, %v1210
          %1214 = vst.msk [vmem:[#allocation2] sm:$0xff] %vm1170, %v1212
          %1215 = vst.msk [vmem:[#allocation2 + $0x8] sm:$0xff] %vm1170, %v1213
        $region132: #{bert_classifier_forward.1} parent=127 // pred_fallthru
          _
        %v1216 = vld [vmem:[#allocation2] sm:$0xff]
        %v1217 = vld [vmem:[#allocation2 + $0x8] sm:$0xff]
        %v1218 = vld [vmem:[%s5] sm:$0xff]
        %v1219 = vld [vmem:[%s5 + $0x8] sm:$0xff]
        %v1220 = vpack.c.bf16 %v1217, %v1216
        %v1221 = vld [vmem:[%s995] sm:$0xf]
        %v1222 = vld [vmem:[%s995 + $0x4] sm:$0xf]
        %v1223 = vld [vmem:[%s995 + $0x8] sm:$0xf]
        %v1224 = vld [vmem:[%s995 + $0xc] sm:$0xf]
        %v1225 = vld [vmem:[%s999] sm:$0x1]
        %v1227 = vlaneseq
        %v1228 = vshrl.u32 %v1227, 7
        %v1229 = vsub.s32 0, %v1228
        %v1230 = vrot.slane %v1225, %v1229
        %v1236 = vunpack.c.l.b16 %v1221
        %v1237 = vunpack.c.l.b16 %v1222
        %v1238 = vunpack.c.l.b16 %v1223
        %v1239 = vunpack.c.l.b16 %v1224
        %v1240 = vpack.c.b16 %v1237, %v1236
        %v1241 = vpack.c.b16 %v1239, %v1238
        %vm1244 = vcmask 261120
        %v1246 = vsel %vm1244, %v1220, 0
        %1248 = vmatprep.subr.bf16.mxu0 0
        %1249 = vmatpush1.bf16.msra.mxu0 0
        %1250 = vmatprep.subr.bf16.mxu0 0
        %1251 = vmatpush1.bf16.msra.mxu0 0
        %1252 = vmatprep.subr.bf16.mxu0 0
        %1253 = vmatpush1.bf16.msra.mxu0 0
        %1254 = vmatprep.subr.bf16.mxu0 0
        %1255 = vmatpush1.bf16.msra.mxu0 0
        %1256 = vmatprep.subr.bf16.mxu0 0
        %1257 = vmatpush1.bf16.msra.mxu0 0
        %1258 = vmatprep.subr.bf16.mxu0 0
        %1259 = vmatpush1.bf16.msra.mxu0 0
        %1260 = vmatprep.subr.bf16.mxu0 0
        %1261 = vmatpush1.bf16.msra.mxu0 %v1241
        %1262 = vmatprep.subr.bf16.mxu0 0
        %1263 = vmatpush1.bf16.msra.mxu0 %v1240
        %1264 = vmatprep.subr.bf16.mxu0 0
        %1265 = vmatpush2.bf16.msra.mxu0 0
        %1266 = vmatprep.subr.bf16.mxu0 0
        %1267 = vmatpush2.bf16.msra.mxu0 0
        %1268 = vmatprep.subr.bf16.mxu0 0
        %1269 = vmatpush2.bf16.msra.mxu0 0
        %1270 = vmatprep.subr.bf16.mxu0 0
        %1271 = vmatpush2.bf16.msra.mxu0 0
        %1272 = vmatprep.subr.bf16.mxu0 0
        %1273 = vmatpush2.bf16.msra.mxu0 0
        %1274 = vmatprep.subr.bf16.mxu0 0
        %1275 = vmatpush2.bf16.msra.mxu0 0
        %1276 = vmatprep.subr.bf16.mxu0 0
        %1277 = vmatpush2.bf16.msra.mxu0 0
        %1278 = vmatprep.subr.bf16.mxu0 0
        %1279 = vmatpush2.bf16.msra.mxu0 0
        %1280 = vmatprep.mubr.bf16.mxu0 0
        %1281 = vmatmul.mubr.bf16.gmra.mxu0 %v1246
        %v1282 = vpop.f32.mrf.mxu0
        %v1283 = vadd.f32 %v1230, %v1282
        %v1284 = vpop.f32.mrf.mxu0
        %v1285 = vpop.f32.mrf.mxu0
        %v1286 = vadd.f32 %v1230, %v1285
        %v1287 = vpop.f32.mrf.mxu0
        %1288 = vdwg.mxu0
        %v1289 = vld [vmem:[%s1004] sm:$0xf]
        %v1290 = vld [vmem:[%s1004 + $0x4] sm:$0xf]
        %v1291 = vld [vmem:[%s1004 + $0x8] sm:$0xf]
        %v1292 = vld [vmem:[%s1004 + $0xc] sm:$0xf]
        %v1293 = vld [vmem:[%s1008] sm:$0x1]
        %v1295 = vlaneseq
        %v1296 = vshrl.u32 %v1295, 7
        %v1297 = vsub.s32 0, %v1296
        %v1298 = vrot.slane %v1293, %v1297
        %v1304 = vunpack.c.l.b16 %v1289
        %v1305 = vunpack.c.l.b16 %v1290
        %v1306 = vunpack.c.l.b16 %v1291
        %v1307 = vunpack.c.l.b16 %v1292
        %v1308 = vpack.c.b16 %v1305, %v1304
        %v1309 = vpack.c.b16 %v1307, %v1306
        %1312 = vmatprep.subr.bf16.mxu0 0
        %1313 = vmatpush1.bf16.msra.mxu0 0
        %1314 = vmatprep.subr.bf16.mxu0 0
        %1315 = vmatpush1.bf16.msra.mxu0 0
        %1316 = vmatprep.subr.bf16.mxu0 0
        %1317 = vmatpush1.bf16.msra.mxu0 0
        %1318 = vmatprep.subr.bf16.mxu0 0
        %1319 = vmatpush1.bf16.msra.mxu0 0
        %1320 = vmatprep.subr.bf16.mxu0 0
        %1321 = vmatpush1.bf16.msra.mxu0 0
        %1322 = vmatprep.subr.bf16.mxu0 0
        %1323 = vmatpush1.bf16.msra.mxu0 0
        %1324 = vmatprep.subr.bf16.mxu0 0
        %1325 = vmatpush1.bf16.msra.mxu0 %v1309
        %1326 = vmatprep.subr.bf16.mxu0 0
        %1327 = vmatpush1.bf16.msra.mxu0 %v1308
        %1328 = vmatprep.subr.bf16.mxu0 0
        %1329 = vmatpush2.bf16.msra.mxu0 0
        %1330 = vmatprep.subr.bf16.mxu0 0
        %1331 = vmatpush2.bf16.msra.mxu0 0
        %1332 = vmatprep.subr.bf16.mxu0 0
        %1333 = vmatpush2.bf16.msra.mxu0 0
        %1334 = vmatprep.subr.bf16.mxu0 0
        %1335 = vmatpush2.bf16.msra.mxu0 0
        %1336 = vmatprep.subr.bf16.mxu0 0
        %1337 = vmatpush2.bf16.msra.mxu0 0
        %1338 = vmatprep.subr.bf16.mxu0 0
        %1339 = vmatpush2.bf16.msra.mxu0 0
        %1340 = vmatprep.subr.bf16.mxu0 0
        %1341 = vmatpush2.bf16.msra.mxu0 0
        %1342 = vmatprep.subr.bf16.mxu0 0
        %1343 = vmatpush2.bf16.msra.mxu0 0
        %1344 = vmatprep.mubr.bf16.mxu0 0
        %1345 = vmatmul.mubr.bf16.gmra.mxu0 %v1246
        %v1346 = vpop.f32.mrf.mxu0
        %v1347 = vadd.f32 %v1298, %v1346
        %v1348 = vpop.f32.mrf.mxu0
        %v1349 = vpop.f32.mrf.mxu0
        %v1350 = vadd.f32 %v1298, %v1349
        %v1351 = vpop.f32.mrf.mxu0
        %1352 = vdwg.mxu0
        %v1353 = vld [vmem:[%s1013] sm:$0xf]
        %v1354 = vld [vmem:[%s1013 + $0x4] sm:$0xf]
        %v1355 = vld [vmem:[%s1013 + $0x8] sm:$0xf]
        %v1356 = vld [vmem:[%s1013 + $0xc] sm:$0xf]
        %v1357 = vld [vmem:[%s1017] sm:$0x1]
        %v1359 = vlaneseq
        %v1360 = vshrl.u32 %v1359, 7
        %v1361 = vsub.s32 0, %v1360
        %v1362 = vrot.slane %v1357, %v1361
        %v1368 = vunpack.c.l.b16 %v1353
        %v1369 = vunpack.c.l.b16 %v1354
        %v1370 = vunpack.c.l.b16 %v1355
        %v1371 = vunpack.c.l.b16 %v1356
        %v1372 = vpack.c.b16 %v1369, %v1368
        %v1373 = vpack.c.b16 %v1371, %v1370
        %1376 = vmatprep.subr.bf16.mxu0 0
        %1377 = vmatpush1.bf16.msra.mxu0 0
        %1378 = vmatprep.subr.bf16.mxu0 0
        %1379 = vmatpush1.bf16.msra.mxu0 0
        %1380 = vmatprep.subr.bf16.mxu0 0
        %1381 = vmatpush1.bf16.msra.mxu0 0
        %1382 = vmatprep.subr.bf16.mxu0 0
        %1383 = vmatpush1.bf16.msra.mxu0 0
        %1384 = vmatprep.subr.bf16.mxu0 0
        %1385 = vmatpush1.bf16.msra.mxu0 0
        %1386 = vmatprep.subr.bf16.mxu0 0
        %1387 = vmatpush1.bf16.msra.mxu0 0
        %1388 = vmatprep.subr.bf16.mxu0 0
        %1389 = vmatpush1.bf16.msra.mxu0 %v1373
        %1390 = vmatprep.subr.bf16.mxu0 0
        %1391 = vmatpush1.bf16.msra.mxu0 %v1372
        %1392 = vmatprep.subr.bf16.mxu0 0
        %1393 = vmatpush2.bf16.msra.mxu0 0
        %1394 = vmatprep.subr.bf16.mxu0 0
        %1395 = vmatpush2.bf16.msra.mxu0 0
        %1396 = vmatprep.subr.bf16.mxu0 0
        %1397 = vmatpush2.bf16.msra.mxu0 0
        %1398 = vmatprep.subr.bf16.mxu0 0
        %1399 = vmatpush2.bf16.msra.mxu0 0
        %1400 = vmatprep.subr.bf16.mxu0 0
        %1401 = vmatpush2.bf16.msra.mxu0 0
        %1402 = vmatprep.subr.bf16.mxu0 0
        %1403 = vmatpush2.bf16.msra.mxu0 0
        %1404 = vmatprep.subr.bf16.mxu0 0
        %1405 = vmatpush2.bf16.msra.mxu0 0
        %1406 = vmatprep.subr.bf16.mxu0 0
        %1407 = vmatpush2.bf16.msra.mxu0 0
        %1408 = vmatprep.mubr.bf16.mxu0 0
        %1409 = vmatmul.mubr.bf16.gmra.mxu0 %v1246
        %v1410 = vpop.f32.mrf.mxu0
        %v1411 = vadd.f32 %v1362, %v1410
        %v1412 = vpop.f32.mrf.mxu0
        %v1413 = vpop.f32.mrf.mxu0
        %v1414 = vadd.f32 %v1362, %v1413
        %v1415 = vpop.f32.mrf.mxu0
        %1416 = vdwg.mxu0
        %v1417 = vpack.c.bf16 %v1286, %v1283
        %v1418 = vpack.c.bf16 %v1350, %v1347
        %vm1419 = vcmask 130048
        %v1421 = vsel %vm1419, %v1417, 0
        %v1424 = vsel %vm1419, %v1418, 0
        %1426 = vmatprep.subr.bf16.mxu0 0
        %1427 = vmatpush1.bf16.xpose.msra.mxu0 0
        %1428 = vmatprep.subr.bf16.mxu0 0
        %1429 = vmatpush1.bf16.xpose.msra.mxu0 0
        %1430 = vmatprep.subr.bf16.mxu0 0
        %1431 = vmatpush1.bf16.xpose.msra.mxu0 0
        %1432 = vmatprep.subr.bf16.mxu0 0
        %1433 = vmatpush1.bf16.xpose.msra.mxu0 0
        %1434 = vmatprep.subr.bf16.mxu0 0
        %1435 = vmatpush1.bf16.xpose.msra.mxu0 0
        %1436 = vmatprep.subr.bf16.mxu0 0
        %1437 = vmatpush1.bf16.xpose.msra.mxu0 0
        %1438 = vmatprep.subr.bf16.mxu0 0
        %1439 = vmatpush1.bf16.xpose.msra.mxu0 0
        %1440 = vmatprep.subr.bf16.mxu0 0
        %1441 = vmatpush1.bf16.xpose.msra.mxu0 %v1424
        %1442 = vmatprep.subr.bf16.mxu0 0
        %1443 = vmatpush2.bf16.xpose.msra.mxu0 0
        %1444 = vmatprep.subr.bf16.mxu0 0
        %1445 = vmatpush2.bf16.xpose.msra.mxu0 0
        %1446 = vmatprep.subr.bf16.mxu0 0
        %1447 = vmatpush2.bf16.xpose.msra.mxu0 0
        %1448 = vmatprep.subr.bf16.mxu0 0
        %1449 = vmatpush2.bf16.xpose.msra.mxu0 0
        %1450 = vmatprep.subr.bf16.mxu0 0
        %1451 = vmatpush2.bf16.xpose.msra.mxu0 0
        %1452 = vmatprep.subr.bf16.mxu0 0
        %1453 = vmatpush2.bf16.xpose.msra.mxu0 0
        %1454 = vmatprep.subr.bf16.mxu0 0
        %1455 = vmatpush2.bf16.xpose.msra.mxu0 0
        %1456 = vmatprep.subr.bf16.mxu0 0
        %1457 = vmatpush2.bf16.xpose.msra.mxu0 0
        %1458 = vmatprep.mubr.bf16.mxu0 0
        %1459 = vmatmul.mubr.bf16.gmra.mxu0 %v1421
        %v1460 = vpop.f32.mrf.mxu0
        %v1461 = vadd.f32 0.0, %v1460
        %v1462 = vpop.f32.mrf.mxu0
        %v1463 = vpop.f32.mrf.mxu0
        %v1464 = vadd.f32 0.0, %v1463
        %v1465 = vpop.f32.mrf.mxu0
        %1466 = vdwg.mxu0
        %v1467 = vmul.f32 %v1461, 0.25
        %v1468 = vmul.f32 %v1464, 0.25
        %v1469 = vadd.f32 %v1467, %v1218
        %v1470 = vadd.f32 %v1468, %v1219
        %v1471 = vsel %vm1419, %v1469, -inf
        %1472 = vmax.xlane.f32.xlu0 %v1471
        %v1473 = vpop.xlane.xlu0 %1472
        %v1474 = vsel %vm1419, %v1470, -inf
        %1475 = vmax.xlane.f32.xlu0 %v1474
        %v1476 = vpop.xlane.xlu0 %1475
        %v1477 = vsub.f32 %v1469, %v1473
        %v1478 = vsub.f32 %v1470, %v1476
        %v1479 = vmul.f32 %v1477, 1.442695
        %v1480 = vpow.pop %v1479
        %v1481 = vmul.f32 %v1478, 1.442695
        %v1482 = vpow.pop %v1481
        %v1483 = vsel %vm1419, %v1480, 0.0
        %1484 = vadd.xlane.f32.xlu0 %v1483
        %v1485 = vpop.xlane.xlu0 %1484
        %v1486 = vsel %vm1419, %v1482, 0.0
        %1487 = vadd.xlane.f32.xlu0 %v1486
        %v1488 = vpop.xlane.xlu0 %1487
        %v1489 = vrcp.pop %v1485
        %v1490 = vrcp.pop %v1488
        %v1491 = vmul.f32 %v1480, %v1489
        %v1492 = vmul.f32 %v1482, %v1490
        %v1493 = vpack.c.bf16 %v1492, %v1491
        %v1494 = vpack.c.bf16 %v1414, %v1411
        %v1496 = vsel %vm1419, %v1493, 0
        %1498 = vmatprep.subr.bf16.mxu0 0
        %1499 = vmatpush1.bf16.msra.mxu0 0
        %1500 = vmatprep.subr.bf16.mxu0 0
        %1501 = vmatpush1.bf16.msra.mxu0 0
        %1502 = vmatprep.subr.bf16.mxu0 0
        %1503 = vmatpush1.bf16.msra.mxu0 0
        %1504 = vmatprep.subr.bf16.mxu0 0
        %1505 = vmatpush1.bf16.msra.mxu0 0
        %1506 = vmatprep.subr.bf16.mxu0 0
        %1507 = vmatpush1.bf16.msra.mxu0 0
        %1508 = vmatprep.subr.bf16.mxu0 0
        %1509 = vmatpush1.bf16.msra.mxu0 0
        %1510 = vmatprep.subr.bf16.mxu0 0
        %1511 = vmatpush1.bf16.msra.mxu0 0
        %1512 = vmatprep.subr.bf16.mxu0 0
        %1513 = vmatpush1.bf16.msra.mxu0 %v1494
        %1514 = vmatprep.subr.bf16.mxu0 0
        %1515 = vmatpush2.bf16.msra.mxu0 0
        %1516 = vmatprep.subr.bf16.mxu0 0
        %1517 = vmatpush2.bf16.msra.mxu0 0
        %1518 = vmatprep.subr.bf16.mxu0 0
        %1519 = vmatpush2.bf16.msra.mxu0 0
        %1520 = vmatprep.subr.bf16.mxu0 0
        %1521 = vmatpush2.bf16.msra.mxu0 0
        %1522 = vmatprep.subr.bf16.mxu0 0
        %1523 = vmatpush2.bf16.msra.mxu0 0
        %1524 = vmatprep.subr.bf16.mxu0 0
        %1525 = vmatpush2.bf16.msra.mxu0 0
        %1526 = vmatprep.subr.bf16.mxu0 0
        %1527 = vmatpush2.bf16.msra.mxu0 0
        %1528 = vmatprep.subr.bf16.mxu0 0
        %1529 = vmatpush2.bf16.msra.mxu0 0
        %1530 = vmatprep.mubr.bf16.mxu0 0
        %1531 = vmatmul.mubr.bf16.gmra.mxu0 %v1496
        %v1532 = vpop.f32.mrf.mxu0
        %v1533 = vadd.f32 0.0, %v1532
        %v1534 = vpop.f32.mrf.mxu0
        %v1535 = vpop.f32.mrf.mxu0
        %v1536 = vadd.f32 0.0, %v1535
        %v1537 = vpop.f32.mrf.mxu0
        %1538 = vdwg.mxu0
        %v1539 = vld [vmem:[%s1022] sm:$0xf]
        %v1540 = vld [vmem:[%s1022 + $0x4] sm:$0xf]
        %v1541 = vpack.c.bf16 %v1536, %v1533
        %s1542 = scalar_lea.vmem %s995, 16
        %v1543 = vld [vmem:[%s1542] sm:$0xf]
        %v1544 = vld [vmem:[%s1542 + $0x4] sm:$0xf]
        %v1545 = vld [vmem:[%s1542 + $0x8] sm:$0xf]
        %v1546 = vld [vmem:[%s1542 + $0xc] sm:$0xf]
        %s1547 = scalar_lea.vmem %s999, 1
        %v1548 = vld [vmem:[%s1547] sm:$0x1]
        %v1550 = vlaneseq
        %v1551 = vshrl.u32 %v1550, 7
        %v1552 = vsub.s32 0, %v1551
        %v1553 = vrot.slane %v1548, %v1552
        %v1559 = vunpack.c.l.b16 %v1543
        %v1560 = vunpack.c.l.b16 %v1544
        %v1561 = vunpack.c.l.b16 %v1545
        %v1562 = vunpack.c.l.b16 %v1546
        %v1563 = vpack.c.b16 %v1560, %v1559
        %v1564 = vpack.c.b16 %v1562, %v1561
        %1567 = vmatprep.subr.bf16.mxu0 0
        %1568 = vmatpush1.bf16.msra.mxu0 0
        %1569 = vmatprep.subr.bf16.mxu0 0
        %1570 = vmatpush1.bf16.msra.mxu0 0
        %1571 = vmatprep.subr.bf16.mxu0 0
        %1572 = vmatpush1.bf16.msra.mxu0 0
        %1573 = vmatprep.subr.bf16.mxu0 0
        %1574 = vmatpush1.bf16.msra.mxu0 0
        %1575 = vmatprep.subr.bf16.mxu0 0
        %1576 = vmatpush1.bf16.msra.mxu0 0
        %1577 = vmatprep.subr.bf16.mxu0 0
        %1578 = vmatpush1.bf16.msra.mxu0 0
        %1579 = vmatprep.subr.bf16.mxu0 0
        %1580 = vmatpush1.bf16.msra.mxu0 %v1564
        %1581 = vmatprep.subr.bf16.mxu0 0
        %1582 = vmatpush1.bf16.msra.mxu0 %v1563
        %1583 = vmatprep.subr.bf16.mxu0 0
        %1584 = vmatpush2.bf16.msra.mxu0 0
        %1585 = vmatprep.subr.bf16.mxu0 0
        %1586 = vmatpush2.bf16.msra.mxu0 0
        %1587 = vmatprep.subr.bf16.mxu0 0
        %1588 = vmatpush2.bf16.msra.mxu0 0
        %1589 = vmatprep.subr.bf16.mxu0 0
        %1590 = vmatpush2.bf16.msra.mxu0 0
        %1591 = vmatprep.subr.bf16.mxu0 0
        %1592 = vmatpush2.bf16.msra.mxu0 0
        %1593 = vmatprep.subr.bf16.mxu0 0
        %1594 = vmatpush2.bf16.msra.mxu0 0
        %1595 = vmatprep.subr.bf16.mxu0 0
        %1596 = vmatpush2.bf16.msra.mxu0 0
        %1597 = vmatprep.subr.bf16.mxu0 0
        %1598 = vmatpush2.bf16.msra.mxu0 0
        %1599 = vmatprep.mubr.bf16.mxu0 0
        %1600 = vmatmul.mubr.bf16.gmra.mxu0 %v1246
        %v1601 = vpop.f32.mrf.mxu0
        %v1602 = vadd.f32 %v1553, %v1601
        %v1603 = vpop.f32.mrf.mxu0
        %v1604 = vpop.f32.mrf.mxu0
        %v1605 = vadd.f32 %v1553, %v1604
        %v1606 = vpop.f32.mrf.mxu0
        %1607 = vdwg.mxu0
        %s1608 = scalar_lea.vmem %s1004, 16
        %v1609 = vld [vmem:[%s1608] sm:$0xf]
        %v1610 = vld [vmem:[%s1608 + $0x4] sm:$0xf]
        %v1611 = vld [vmem:[%s1608 + $0x8] sm:$0xf]
        %v1612 = vld [vmem:[%s1608 + $0xc] sm:$0xf]
        %s1613 = scalar_lea.vmem %s1008, 1
        %v1614 = vld [vmem:[%s1613] sm:$0x1]
        %v1616 = vlaneseq
        %v1617 = vshrl.u32 %v1616, 7
        %v1618 = vsub.s32 0, %v1617
        %v1619 = vrot.slane %v1614, %v1618
        %v1625 = vunpack.c.l.b16 %v1609
        %v1626 = vunpack.c.l.b16 %v1610
        %v1627 = vunpack.c.l.b16 %v1611
        %v1628 = vunpack.c.l.b16 %v1612
        %v1629 = vpack.c.b16 %v1626, %v1625
        %v1630 = vpack.c.b16 %v1628, %v1627
        %1633 = vmatprep.subr.bf16.mxu0 0
        %1634 = vmatpush1.bf16.msra.mxu0 0
        %1635 = vmatprep.subr.bf16.mxu0 0
        %1636 = vmatpush1.bf16.msra.mxu0 0
        %1637 = vmatprep.subr.bf16.mxu0 0
        %1638 = vmatpush1.bf16.msra.mxu0 0
        %1639 = vmatprep.subr.bf16.mxu0 0
        %1640 = vmatpush1.bf16.msra.mxu0 0
        %1641 = vmatprep.subr.bf16.mxu0 0
        %1642 = vmatpush1.bf16.msra.mxu0 0
        %1643 = vmatprep.subr.bf16.mxu0 0
        %1644 = vmatpush1.bf16.msra.mxu0 0
        %1645 = vmatprep.subr.bf16.mxu0 0
        %1646 = vmatpush1.bf16.msra.mxu0 %v1630
        %1647 = vmatprep.subr.bf16.mxu0 0
        %1648 = vmatpush1.bf16.msra.mxu0 %v1629
        %1649 = vmatprep.subr.bf16.mxu0 0
        %1650 = vmatpush2.bf16.msra.mxu0 0
        %1651 = vmatprep.subr.bf16.mxu0 0
        %1652 = vmatpush2.bf16.msra.mxu0 0
        %1653 = vmatprep.subr.bf16.mxu0 0
        %1654 = vmatpush2.bf16.msra.mxu0 0
        %1655 = vmatprep.subr.bf16.mxu0 0
        %1656 = vmatpush2.bf16.msra.mxu0 0
        %1657 = vmatprep.subr.bf16.mxu0 0
        %1658 = vmatpush2.bf16.msra.mxu0 0
        %1659 = vmatprep.subr.bf16.mxu0 0
        %1660 = vmatpush2.bf16.msra.mxu0 0
        %1661 = vmatprep.subr.bf16.mxu0 0
        %1662 = vmatpush2.bf16.msra.mxu0 0
        %1663 = vmatprep.subr.bf16.mxu0 0
        %1664 = vmatpush2.bf16.msra.mxu0 0
        %1665 = vmatprep.mubr.bf16.mxu0 0
        %1666 = vmatmul.mubr.bf16.gmra.mxu0 %v1246
        %v1667 = vpop.f32.mrf.mxu0
        %v1668 = vadd.f32 %v1619, %v1667
        %v1669 = vpop.f32.mrf.mxu0
        %v1670 = vpop.f32.mrf.mxu0
        %v1671 = vadd.f32 %v1619, %v1670
        %v1672 = vpop.f32.mrf.mxu0
        %1673 = vdwg.mxu0
        %s1674 = scalar_lea.vmem %s1013, 16
        %v1675 = vld [vmem:[%s1674] sm:$0xf]
        %v1676 = vld [vmem:[%s1674 + $0x4] sm:$0xf]
        %v1677 = vld [vmem:[%s1674 + $0x8] sm:$0xf]
        %v1678 = vld [vmem:[%s1674 + $0xc] sm:$0xf]
        %s1679 = scalar_lea.vmem %s1017, 1
        %v1680 = vld [vmem:[%s1679] sm:$0x1]
        %v1682 = vlaneseq
        %v1683 = vshrl.u32 %v1682, 7
        %v1684 = vsub.s32 0, %v1683
        %v1685 = vrot.slane %v1680, %v1684
        %v1691 = vunpack.c.l.b16 %v1675
        %v1692 = vunpack.c.l.b16 %v1676
        %v1693 = vunpack.c.l.b16 %v1677
        %v1694 = vunpack.c.l.b16 %v1678
        %v1695 = vpack.c.b16 %v1692, %v1691
        %v1696 = vpack.c.b16 %v1694, %v1693
        %1699 = vmatprep.subr.bf16.mxu0 0
        %1700 = vmatpush1.bf16.msra.mxu0 0
        %1701 = vmatprep.subr.bf16.mxu0 0
        %1702 = vmatpush1.bf16.msra.mxu0 0
        %1703 = vmatprep.subr.bf16.mxu0 0
        %1704 = vmatpush1.bf16.msra.mxu0 0
        %1705 = vmatprep.subr.bf16.mxu0 0
        %1706 = vmatpush1.bf16.msra.mxu0 0
        %1707 = vmatprep.subr.bf16.mxu0 0
        %1708 = vmatpush1.bf16.msra.mxu0 0
        %1709 = vmatprep.subr.bf16.mxu0 0
        %1710 = vmatpush1.bf16.msra.mxu0 0
        %1711 = vmatprep.subr.bf16.mxu0 0
        %1712 = vmatpush1.bf16.msra.mxu0 %v1696
        %1713 = vmatprep.subr.bf16.mxu0 0
        %1714 = vmatpush1.bf16.msra.mxu0 %v1695
        %1715 = vmatprep.subr.bf16.mxu0 0
        %1716 = vmatpush2.bf16.msra.mxu0 0
        %1717 = vmatprep.subr.bf16.mxu0 0
        %1718 = vmatpush2.bf16.msra.mxu0 0
        %1719 = vmatprep.subr.bf16.mxu0 0
        %1720 = vmatpush2.bf16.msra.mxu0 0
        %1721 = vmatprep.subr.bf16.mxu0 0
        %1722 = vmatpush2.bf16.msra.mxu0 0
        %1723 = vmatprep.subr.bf16.mxu0 0
        %1724 = vmatpush2.bf16.msra.mxu0 0
        %1725 = vmatprep.subr.bf16.mxu0 0
        %1726 = vmatpush2.bf16.msra.mxu0 0
        %1727 = vmatprep.subr.bf16.mxu0 0
        %1728 = vmatpush2.bf16.msra.mxu0 0
        %1729 = vmatprep.subr.bf16.mxu0 0
        %1730 = vmatpush2.bf16.msra.mxu0 0
        %1731 = vmatprep.mubr.bf16.mxu0 0
        %1732 = vmatmul.mubr.bf16.gmra.mxu0 %v1246
        %v1733 = vpop.f32.mrf.mxu0
        %v1734 = vadd.f32 %v1685, %v1733
        %v1735 = vpop.f32.mrf.mxu0
        %v1736 = vpop.f32.mrf.mxu0
        %v1737 = vadd.f32 %v1685, %v1736
        %v1738 = vpop.f32.mrf.mxu0
        %1739 = vdwg.mxu0
        %v1740 = vpack.c.bf16 %v1605, %v1602
        %v1741 = vpack.c.bf16 %v1671, %v1668
        %v1743 = vsel %vm1419, %v1740, 0
        %v1746 = vsel %vm1419, %v1741, 0
        %1748 = vmatprep.subr.bf16.mxu0 0
        %1749 = vmatpush1.bf16.xpose.msra.mxu0 0
        %1750 = vmatprep.subr.bf16.mxu0 0
        %1751 = vmatpush1.bf16.xpose.msra.mxu0 0
        %1752 = vmatprep.subr.bf16.mxu0 0
        %1753 = vmatpush1.bf16.xpose.msra.mxu0 0
        %1754 = vmatprep.subr.bf16.mxu0 0
        %1755 = vmatpush1.bf16.xpose.msra.mxu0 0
        %1756 = vmatprep.subr.bf16.mxu0 0
        %1757 = vmatpush1.bf16.xpose.msra.mxu0 0
        %1758 = vmatprep.subr.bf16.mxu0 0
        %1759 = vmatpush1.bf16.xpose.msra.mxu0 0
        %1760 = vmatprep.subr.bf16.mxu0 0
        %1761 = vmatpush1.bf16.xpose.msra.mxu0 0
        %1762 = vmatprep.subr.bf16.mxu0 0
        %1763 = vmatpush1.bf16.xpose.msra.mxu0 %v1746
        %1764 = vmatprep.subr.bf16.mxu0 0
        %1765 = vmatpush2.bf16.xpose.msra.mxu0 0
        %1766 = vmatprep.subr.bf16.mxu0 0
        %1767 = vmatpush2.bf16.xpose.msra.mxu0 0
        %1768 = vmatprep.subr.bf16.mxu0 0
        %1769 = vmatpush2.bf16.xpose.msra.mxu0 0
        %1770 = vmatprep.subr.bf16.mxu0 0
        %1771 = vmatpush2.bf16.xpose.msra.mxu0 0
        %1772 = vmatprep.subr.bf16.mxu0 0
        %1773 = vmatpush2.bf16.xpose.msra.mxu0 0
        %1774 = vmatprep.subr.bf16.mxu0 0
        %1775 = vmatpush2.bf16.xpose.msra.mxu0 0
        %1776 = vmatprep.subr.bf16.mxu0 0
        %1777 = vmatpush2.bf16.xpose.msra.mxu0 0
        %1778 = vmatprep.subr.bf16.mxu0 0
        %1779 = vmatpush2.bf16.xpose.msra.mxu0 0
        %1780 = vmatprep.mubr.bf16.mxu0 0
        %1781 = vmatmul.mubr.bf16.gmra.mxu0 %v1743
        %v1782 = vpop.f32.mrf.mxu0
        %v1783 = vadd.f32 0.0, %v1782
        %v1784 = vpop.f32.mrf.mxu0
        %v1785 = vpop.f32.mrf.mxu0
        %v1786 = vadd.f32 0.0, %v1785
        %v1787 = vpop.f32.mrf.mxu0
        %1788 = vdwg.mxu0
        %v1789 = vmul.f32 %v1783, 0.25
        %v1790 = vmul.f32 %v1786, 0.25
        %v1791 = vadd.f32 %v1789, %v1218
        %v1792 = vadd.f32 %v1790, %v1219
        %v1793 = vsel %vm1419, %v1791, -inf
        %1794 = vmax.xlane.f32.xlu0 %v1793
        %v1795 = vpop.xlane.xlu0 %1794
        %v1796 = vsel %vm1419, %v1792, -inf
        %1797 = vmax.xlane.f32.xlu0 %v1796
        %v1798 = vpop.xlane.xlu0 %1797
        %v1799 = vsub.f32 %v1791, %v1795
        %v1800 = vsub.f32 %v1792, %v1798
        %v1801 = vmul.f32 %v1799, 1.442695
        %v1802 = vpow.pop %v1801
        %v1803 = vmul.f32 %v1800, 1.442695
        %v1804 = vpow.pop %v1803
        %v1805 = vsel %vm1419, %v1802, 0.0
        %1806 = vadd.xlane.f32.xlu0 %v1805
        %v1807 = vpop.xlane.xlu0 %1806
        %v1808 = vsel %vm1419, %v1804, 0.0
        %1809 = vadd.xlane.f32.xlu0 %v1808
        %v1810 = vpop.xlane.xlu0 %1809
        %v1811 = vrcp.pop %v1807
        %v1812 = vrcp.pop %v1810
        %v1813 = vmul.f32 %v1802, %v1811
        %v1814 = vmul.f32 %v1804, %v1812
        %v1815 = vpack.c.bf16 %v1814, %v1813
        %v1816 = vpack.c.bf16 %v1737, %v1734
        %v1818 = vsel %vm1419, %v1815, 0
        %1820 = vmatprep.subr.bf16.mxu0 0
        %1821 = vmatpush1.bf16.msra.mxu0 0
        %1822 = vmatprep.subr.bf16.mxu0 0
        %1823 = vmatpush1.bf16.msra.mxu0 0
        %1824 = vmatprep.subr.bf16.mxu0 0
        %1825 = vmatpush1.bf16.msra.mxu0 0
        %1826 = vmatprep.subr.bf16.mxu0 0
        %1827 = vmatpush1.bf16.msra.mxu0 0
        %1828 = vmatprep.subr.bf16.mxu0 0
        %1829 = vmatpush1.bf16.msra.mxu0 0
        %1830 = vmatprep.subr.bf16.mxu0 0
        %1831 = vmatpush1.bf16.msra.mxu0 0
        %1832 = vmatprep.subr.bf16.mxu0 0
        %1833 = vmatpush1.bf16.msra.mxu0 0
        %1834 = vmatprep.subr.bf16.mxu0 0
        %1835 = vmatpush1.bf16.msra.mxu0 %v1816
        %1836 = vmatprep.subr.bf16.mxu0 0
        %1837 = vmatpush2.bf16.msra.mxu0 0
        %1838 = vmatprep.subr.bf16.mxu0 0
        %1839 = vmatpush2.bf16.msra.mxu0 0
        %1840 = vmatprep.subr.bf16.mxu0 0
        %1841 = vmatpush2.bf16.msra.mxu0 0
        %1842 = vmatprep.subr.bf16.mxu0 0
        %1843 = vmatpush2.bf16.msra.mxu0 0
        %1844 = vmatprep.subr.bf16.mxu0 0
        %1845 = vmatpush2.bf16.msra.mxu0 0
        %1846 = vmatprep.subr.bf16.mxu0 0
        %1847 = vmatpush2.bf16.msra.mxu0 0
        %1848 = vmatprep.subr.bf16.mxu0 0
        %1849 = vmatpush2.bf16.msra.mxu0 0
        %1850 = vmatprep.subr.bf16.mxu0 0
        %1851 = vmatpush2.bf16.msra.mxu0 0
        %1852 = vmatprep.mubr.bf16.mxu0 0
        %1853 = vmatmul.mubr.bf16.gmra.mxu0 %v1818
        %v1854 = vpop.f32.mrf.mxu0
        %v1855 = vadd.f32 0.0, %v1854
        %v1856 = vpop.f32.mrf.mxu0
        %v1857 = vpop.f32.mrf.mxu0
        %v1858 = vadd.f32 0.0, %v1857
        %v1859 = vpop.f32.mrf.mxu0
        %1860 = vdwg.mxu0
        %s1861 = scalar_lea.vmem %s1022, 8
        %v1862 = vld [vmem:[%s1861] sm:$0xf]
        %v1863 = vld [vmem:[%s1861 + $0x4] sm:$0xf]
        %v1864 = vpack.c.bf16 %v1858, %v1855
        %v1867 = vunpack.c.l.b16 %v1862
        %v1868 = vunpack.c.l.b16 %v1863
        %v1869 = vpack.c.b16 %v1868, %v1867
        %v1872 = vsel %vm1419, %v1864, 0
        %1874 = vmatprep.subr.bf16.mxu0 0
        %1875 = vmatpush1.bf16.msra.mxu0 0
        %1876 = vmatprep.subr.bf16.mxu0 0
        %1877 = vmatpush1.bf16.msra.mxu0 0
        %1878 = vmatprep.subr.bf16.mxu0 0
        %1879 = vmatpush1.bf16.msra.mxu0 0
        %1880 = vmatprep.subr.bf16.mxu0 0
        %1881 = vmatpush1.bf16.msra.mxu0 0
        %1882 = vmatprep.subr.bf16.mxu0 0
        %1883 = vmatpush1.bf16.msra.mxu0 0
        %1884 = vmatprep.subr.bf16.mxu0 0
        %1885 = vmatpush1.bf16.msra.mxu0 0
        %1886 = vmatprep.subr.bf16.mxu0 0
        %1887 = vmatpush1.bf16.msra.mxu0 0
        %1888 = vmatprep.subr.bf16.mxu0 0
        %1889 = vmatpush1.bf16.msra.mxu0 %v1869
        %1890 = vmatprep.subr.bf16.mxu0 0
        %1891 = vmatpush2.bf16.msra.mxu0 0
        %1892 = vmatprep.subr.bf16.mxu0 0
        %1893 = vmatpush2.bf16.msra.mxu0 0
        %1894 = vmatprep.subr.bf16.mxu0 0
        %1895 = vmatpush2.bf16.msra.mxu0 0
        %1896 = vmatprep.subr.bf16.mxu0 0
        %1897 = vmatpush2.bf16.msra.mxu0 0
        %1898 = vmatprep.subr.bf16.mxu0 0
        %1899 = vmatpush2.bf16.msra.mxu0 0
        %1900 = vmatprep.subr.bf16.mxu0 0
        %1901 = vmatpush2.bf16.msra.mxu0 0
        %1902 = vmatprep.subr.bf16.mxu0 0
        %1903 = vmatpush2.bf16.msra.mxu0 0
        %1904 = vmatprep.subr.bf16.mxu0 0
        %1905 = vmatpush2.bf16.msra.mxu0 0
        %1906 = vmatprep.mubr.bf16.mxu0 0
        %1907 = vmatmul.mubr.bf16.gmra.mxu0 %v1872
        %v1908 = vpop.f32.mrf.mxu0
        %v1909 = vadd.f32 0.0, %v1908
        %v1910 = vpop.f32.mrf.mxu0
        %v1911 = vpop.f32.mrf.mxu0
        %v1912 = vadd.f32 0.0, %v1911
        %v1913 = vpop.f32.mrf.mxu0
        %1914 = vdwg.mxu0
        %v1917 = vunpack.c.l.b16 %v1539
        %v1918 = vunpack.c.l.b16 %v1540
        %v1919 = vpack.c.b16 %v1918, %v1917
        %v1922 = vsel %vm1419, %v1541, 0
        %1924 = vmatprep.subr.bf16.mxu0 0
        %1925 = vmatpush1.bf16.msra.mxu0 0
        %1926 = vmatprep.subr.bf16.mxu0 0
        %1927 = vmatpush1.bf16.msra.mxu0 0
        %1928 = vmatprep.subr.bf16.mxu0 0
        %1929 = vmatpush1.bf16.msra.mxu0 0
        %1930 = vmatprep.subr.bf16.mxu0 0
        %1931 = vmatpush1.bf16.msra.mxu0 0
        %1932 = vmatprep.subr.bf16.mxu0 0
        %1933 = vmatpush1.bf16.msra.mxu0 0
        %1934 = vmatprep.subr.bf16.mxu0 0
        %1935 = vmatpush1.bf16.msra.mxu0 0
        %1936 = vmatprep.subr.bf16.mxu0 0
        %1937 = vmatpush1.bf16.msra.mxu0 0
        %1938 = vmatprep.subr.bf16.mxu0 0
        %1939 = vmatpush1.bf16.msra.mxu0 %v1919
        %1940 = vmatprep.subr.bf16.mxu0 0
        %1941 = vmatpush2.bf16.msra.mxu0 0
        %1942 = vmatprep.subr.bf16.mxu0 0
        %1943 = vmatpush2.bf16.msra.mxu0 0
        %1944 = vmatprep.subr.bf16.mxu0 0
        %1945 = vmatpush2.bf16.msra.mxu0 0
        %1946 = vmatprep.subr.bf16.mxu0 0
        %1947 = vmatpush2.bf16.msra.mxu0 0
        %1948 = vmatprep.subr.bf16.mxu0 0
        %1949 = vmatpush2.bf16.msra.mxu0 0
        %1950 = vmatprep.subr.bf16.mxu0 0
        %1951 = vmatpush2.bf16.msra.mxu0 0
        %1952 = vmatprep.subr.bf16.mxu0 0
        %1953 = vmatpush2.bf16.msra.mxu0 0
        %1954 = vmatprep.subr.bf16.mxu0 0
        %1955 = vmatpush2.bf16.msra.mxu0 0
        %1956 = vmatprep.mubr.bf16.mxu0 0
        %1957 = vmatmul.mubr.bf16.gmra.mxu0 %v1922
        %v1958 = vpop.f32.mrf.mxu0
        %v1959 = vadd.f32 %v1909, %v1958
        %v1960 = vpop.f32.mrf.mxu0
        %v1961 = vpop.f32.mrf.mxu0
        %v1962 = vadd.f32 %v1912, %v1961
        %v1963 = vpop.f32.mrf.mxu0
        %1964 = vdwg.mxu0
        %v1965 = vadd.f32 %v1216, %v1959
        %v1966 = vadd.f32 %v1217, %v1962
        %v1967 = vld [vmem:[%s1025] sm:$0x1]
        %v1969 = vlaneseq
        %v1970 = vshrl.u32 %v1969, 7
        %v1971 = vsub.s32 0, %v1970
        %v1972 = vrot.slane %v1967, %v1971
        %v1974 = vadd.f32 %v1965, %v1972
        %v1975 = vadd.f32 %v1966, %v1972
        %v1976 = vld [vmem:[%s1028] sm:$0x1]
        %v1977 = vld [vmem:[%s1031] sm:$0x1]
        %v1978 = vsel %vm1244, %v1974, 0.0
        %1979 = vadd.xlane.f32.xlu0 %v1978
        %v1980 = vpop.xlane.xlu0 %1979
        %v1981 = vsel %vm1244, %v1975, 0.0
        %1982 = vadd.xlane.f32.xlu0 %v1981
        %v1983 = vpop.xlane.xlu0 %1982
        %v1984 = vrcp.pop 32.0
        %v1985 = vmul.f32 %v1980, %v1984
        %v1986 = vmul.f32 %v1983, %v1984
        %v1987 = vsub.f32 %v1974, %v1985
        %v1988 = vsub.f32 %v1975, %v1986
        %v1989 = vmul.f32 %v1987, %v1987
        %v1990 = vmul.f32 %v1988, %v1988
        %v1991 = vsel %vm1244, %v1989, 0.0
        %1992 = vadd.xlane.f32.xlu0 %v1991
        %v1993 = vpop.xlane.xlu0 %1992
        %v1994 = vsel %vm1244, %v1990, 0.0
        %1995 = vadd.xlane.f32.xlu0 %v1994
        %v1996 = vpop.xlane.xlu0 %1995
        %v1997 = vmul.f32 %v1993, %v1984
        %v1998 = vmul.f32 %v1996, %v1984
        %v1999 = vadd.f32 %v1997, 1e-12
        %v2000 = vadd.f32 %v1998, 1e-12
        %v2001 = vrsqrt.pop %v1999
        %v2002 = vrsqrt.pop %v2000
        %v2003 = vmul.f32 %v1987, %v2001
        %v2004 = vmul.f32 %v1988, %v2002
        %v2006 = vlaneseq
        %v2007 = vshrl.u32 %v2006, 7
        %v2008 = vsub.s32 0, %v2007
        %v2009 = vrot.slane %v1976, %v2008
        %v2011 = vmul.f32 %v2003, %v2009
        %v2012 = vmul.f32 %v2004, %v2009
        %v2014 = vlaneseq
        %v2015 = vshrl.u32 %v2014, 7
        %v2016 = vsub.s32 0, %v2015
        %v2017 = vrot.slane %v1977, %v2016
        %v2019 = vadd.f32 %v2011, %v2017
        %v2020 = vadd.f32 %v2012, %v2017
        %v2021 = vld [vmem:[%s1036] sm:$0xf]
        %v2022 = vld [vmem:[%s1036 + $0x4] sm:$0xf]
        %v2023 = vld [vmem:[%s1036 + $0x8] sm:$0xf]
        %v2024 = vld [vmem:[%s1036 + $0xc] sm:$0xf]
        %v2025 = vpack.c.bf16 %v2020, %v2019
        %v2026 = vld [vmem:[%s1039] sm:$0x1]
        %v2028 = vlaneseq
        %v2029 = vshrl.u32 %v2028, 7
        %v2030 = vsub.s32 0, %v2029
        %v2031 = vrot.slane %v2026, %v2030
        %v2037 = vunpack.c.l.b16 %v2021
        %v2038 = vunpack.c.l.b16 %v2022
        %v2039 = vunpack.c.l.b16 %v2023
        %v2040 = vunpack.c.l.b16 %v2024
        %v2041 = vpack.c.b16 %v2038, %v2037
        %v2042 = vpack.c.b16 %v2040, %v2039
        %v2046 = vsel %vm1244, %v2025, 0
        %2048 = vmatprep.subr.bf16.mxu0 0
        %2049 = vmatpush1.bf16.msra.mxu0 0
        %2050 = vmatprep.subr.bf16.mxu0 0
        %2051 = vmatpush1.bf16.msra.mxu0 0
        %2052 = vmatprep.subr.bf16.mxu0 0
        %2053 = vmatpush1.bf16.msra.mxu0 0
        %2054 = vmatprep.subr.bf16.mxu0 0
        %2055 = vmatpush1.bf16.msra.mxu0 0
        %2056 = vmatprep.subr.bf16.mxu0 0
        %2057 = vmatpush1.bf16.msra.mxu0 0
        %2058 = vmatprep.subr.bf16.mxu0 0
        %2059 = vmatpush1.bf16.msra.mxu0 0
        %2060 = vmatprep.subr.bf16.mxu0 0
        %2061 = vmatpush1.bf16.msra.mxu0 %v2042
        %2062 = vmatprep.subr.bf16.mxu0 0
        %2063 = vmatpush1.bf16.msra.mxu0 %v2041
        %2064 = vmatprep.subr.bf16.mxu0 0
        %2065 = vmatpush2.bf16.msra.mxu0 0
        %2066 = vmatprep.subr.bf16.mxu0 0
        %2067 = vmatpush2.bf16.msra.mxu0 0
        %2068 = vmatprep.subr.bf16.mxu0 0
        %2069 = vmatpush2.bf16.msra.mxu0 0
        %2070 = vmatprep.subr.bf16.mxu0 0
        %2071 = vmatpush2.bf16.msra.mxu0 0
        %2072 = vmatprep.subr.bf16.mxu0 0
        %2073 = vmatpush2.bf16.msra.mxu0 0
        %2074 = vmatprep.subr.bf16.mxu0 0
        %2075 = vmatpush2.bf16.msra.mxu0 0
        %2076 = vmatprep.subr.bf16.mxu0 0
        %2077 = vmatpush2.bf16.msra.mxu0 0
        %2078 = vmatprep.subr.bf16.mxu0 0
        %2079 = vmatpush2.bf16.msra.mxu0 0
        %2080 = vmatprep.mubr.bf16.mxu0 0
        %2081 = vmatmul.mubr.bf16.gmra.mxu0 %v2046
        %v2082 = vpop.f32.mrf.mxu0
        %v2083 = vadd.f32 %v2031, %v2082
        %v2084 = vpop.f32.mrf.mxu0
        %v2085 = vpop.f32.mrf.mxu0
        %v2086 = vadd.f32 %v2031, %v2085
        %v2087 = vpop.f32.mrf.mxu0
        %2088 = vdwg.mxu0
        %v2089 = vmul.f32 %v2083, 0.5
        %v2090 = vmul.f32 %v2086, 0.5
        %v2091 = vmul.f32 %v2083, 0.044715
        %v2092 = vmul.f32 %v2086, 0.044715
        %v2093 = vmul.f32 %v2091, %v2083
        %v2094 = vmul.f32 %v2092, %v2086
        %v2095 = vmul.f32 %v2093, %v2083
        %v2096 = vmul.f32 %v2094, %v2086
        %v2097 = vadd.f32 %v2083, %v2095
        %v2098 = vadd.f32 %v2086, %v2096
        %v2099 = vmul.f32 %v2097, 0.7978846
        %v2100 = vmul.f32 %v2098, 0.7978846
        %v2101 = vtanh.pop %v2099
        %v2102 = vtanh.pop %v2100
        %v2103 = vadd.f32 %v2101, 1.0
        %v2104 = vadd.f32 %v2102, 1.0
        %v2105 = vmul.f32 %v2089, %v2103
        %v2106 = vmul.f32 %v2090, %v2104
        %v2107 = vld [vmem:[%s1044] sm:$0xf]
        %v2108 = vld [vmem:[%s1044 + $0x4] sm:$0xf]
        %v2109 = vld [vmem:[%s1044 + $0x8] sm:$0xf]
        %v2110 = vld [vmem:[%s1044 + $0xc] sm:$0xf]
        %v2111 = vld [vmem:[%s1044 + $0x10] sm:$0xf]
        %v2112 = vld [vmem:[%s1044 + $0x14] sm:$0xf]
        %v2113 = vld [vmem:[%s1044 + $0x18] sm:$0xf]
        %v2114 = vld [vmem:[%s1044 + $0x1c] sm:$0xf]
        %v2115 = vpack.c.bf16 %v2106, %v2105
        %v2116 = vld [vmem:[%s1047] sm:$0x1]
        %v2118 = vlaneseq
        %v2119 = vshrl.u32 %v2118, 7
        %v2120 = vsub.s32 0, %v2119
        %v2121 = vrot.slane %v2116, %v2120
        %v2131 = vunpack.c.l.b16 %v2107
        %v2132 = vunpack.c.l.b16 %v2108
        %v2133 = vunpack.c.l.b16 %v2109
        %v2134 = vunpack.c.l.b16 %v2110
        %v2135 = vunpack.c.l.b16 %v2111
        %v2136 = vunpack.c.l.b16 %v2112
        %v2137 = vunpack.c.l.b16 %v2113
        %v2138 = vunpack.c.l.b16 %v2114
        %v2139 = vpack.c.b16 %v2132, %v2131
        %v2140 = vpack.c.b16 %v2134, %v2133
        %v2141 = vpack.c.b16 %v2136, %v2135
        %v2142 = vpack.c.b16 %v2138, %v2137
        %vm2147 = vcmask 523264
        %v2149 = vsel %vm2147, %v2115, 0
        %2151 = vmatprep.subr.bf16.mxu0 0
        %2152 = vmatpush1.bf16.msra.mxu0 0
        %2153 = vmatprep.subr.bf16.mxu0 0
        %2154 = vmatpush1.bf16.msra.mxu0 0
        %2155 = vmatprep.subr.bf16.mxu0 0
        %2156 = vmatpush1.bf16.msra.mxu0 0
        %2157 = vmatprep.subr.bf16.mxu0 0
        %2158 = vmatpush1.bf16.msra.mxu0 0
        %2159 = vmatprep.subr.bf16.mxu0 0
        %2160 = vmatpush1.bf16.msra.mxu0 %v2142
        %2161 = vmatprep.subr.bf16.mxu0 0
        %2162 = vmatpush1.bf16.msra.mxu0 %v2141
        %2163 = vmatprep.subr.bf16.mxu0 0
        %2164 = vmatpush1.bf16.msra.mxu0 %v2140
        %2165 = vmatprep.subr.bf16.mxu0 0
        %2166 = vmatpush1.bf16.msra.mxu0 %v2139
        %2167 = vmatprep.subr.bf16.mxu0 0
        %2168 = vmatpush2.bf16.msra.mxu0 0
        %2169 = vmatprep.subr.bf16.mxu0 0
        %2170 = vmatpush2.bf16.msra.mxu0 0
        %2171 = vmatprep.subr.bf16.mxu0 0
        %2172 = vmatpush2.bf16.msra.mxu0 0
        %2173 = vmatprep.subr.bf16.mxu0 0
        %2174 = vmatpush2.bf16.msra.mxu0 0
        %2175 = vmatprep.subr.bf16.mxu0 0
        %2176 = vmatpush2.bf16.msra.mxu0 0
        %2177 = vmatprep.subr.bf16.mxu0 0
        %2178 = vmatpush2.bf16.msra.mxu0 0
        %2179 = vmatprep.subr.bf16.mxu0 0
        %2180 = vmatpush2.bf16.msra.mxu0 0
        %2181 = vmatprep.subr.bf16.mxu0 0
        %2182 = vmatpush2.bf16.msra.mxu0 0
        %2183 = vmatprep.mubr.bf16.mxu0 0
        %2184 = vmatmul.mubr.bf16.gmra.mxu0 %v2149
        %v2185 = vpop.f32.mrf.mxu0
        %v2186 = vadd.f32 %v2121, %v2185
        %v2187 = vpop.f32.mrf.mxu0
        %v2188 = vpop.f32.mrf.mxu0
        %v2189 = vadd.f32 %v2121, %v2188
        %v2190 = vpop.f32.mrf.mxu0
        %2191 = vdwg.mxu0
        %v2192 = vadd.f32 %v2019, %v2186
        %v2193 = vadd.f32 %v2020, %v2189
        %v2194 = vld [vmem:[%s1050] sm:$0x1]
        %v2195 = vld [vmem:[%s1053] sm:$0x1]
        %v2196 = vsel %vm1244, %v2192, 0.0
        %2197 = vadd.xlane.f32.xlu0 %v2196
        %v2198 = vpop.xlane.xlu0 %2197
        %v2199 = vsel %vm1244, %v2193, 0.0
        %2200 = vadd.xlane.f32.xlu0 %v2199
        %v2201 = vpop.xlane.xlu0 %2200
        %v2202 = vmul.f32 %v2198, %v1984
        %v2203 = vmul.f32 %v2201, %v1984
        %v2204 = vsub.f32 %v2192, %v2202
        %v2205 = vsub.f32 %v2193, %v2203
        %v2206 = vmul.f32 %v2204, %v2204
        %v2207 = vmul.f32 %v2205, %v2205
        %v2208 = vsel %vm1244, %v2206, 0.0
        %2209 = vadd.xlane.f32.xlu0 %v2208
        %v2210 = vpop.xlane.xlu0 %2209
        %v2211 = vsel %vm1244, %v2207, 0.0
        %2212 = vadd.xlane.f32.xlu0 %v2211
        %v2213 = vpop.xlane.xlu0 %2212
        %v2214 = vmul.f32 %v2210, %v1984
        %v2215 = vmul.f32 %v2213, %v1984
        %v2216 = vadd.f32 %v2214, 1e-12
        %v2217 = vadd.f32 %v2215, 1e-12
        %v2218 = vrsqrt.pop %v2216
        %v2219 = vrsqrt.pop %v2217
        %v2220 = vmul.f32 %v2204, %v2218
        %v2221 = vmul.f32 %v2205, %v2219
        %v2223 = vlaneseq
        %v2224 = vshrl.u32 %v2223, 7
        %v2225 = vsub.s32 0, %v2224
        %v2226 = vrot.slane %v2194, %v2225
        %v2228 = vmul.f32 %v2220, %v2226
        %v2229 = vmul.f32 %v2221, %v2226
        %v2231 = vlaneseq
        %v2232 = vshrl.u32 %v2231, 7
        %v2233 = vsub.s32 0, %v2232
        %v2234 = vrot.slane %v2195, %v2233
        %v2236 = vadd.f32 %v2228, %v2234
        %v2237 = vadd.f32 %v2229, %v2234
        %2238 = vst.msk [vmem:[#allocation2] sm:$0xff] %vm1244, %v2236
        %2239 = vst.msk [vmem:[#allocation2 + $0x8] sm:$0xff] %vm1244, %v2237
        %p2240 = scmp.eq.s32.totalorder %s39, 1
        // Predicated region
        $region133: #{bert_classifier_forward.1} parent=127 // pred_check
          %p2241 = pneg %p2240
        $region134: #{bert_classifier_forward.1} parent=127 // pred_check_branch
          %2243 = sbr.rel (%p2241) target = $region136
        $region135: #{bert_classifier_forward.1} parent=127 // pred_region
          %v2244 = vld [vmem:[%s22] sm:$0x3]
          %v2246 = vsel %vm1419, %v2244, 0
          %2248 = vmatprep.subr.mxu0 0.0
          %2249 = vmatpush1.msra.mxu0 0.0
          %2250 = vmatprep.subr.mxu0 0.0
          %2251 = vmatpush1.msra.mxu0 0.0
          %2252 = vmatprep.subr.mxu0 0.0
          %2253 = vmatpush1.msra.mxu0 0.0
          %2254 = vmatprep.subr.mxu0 0.0
          %2255 = vmatpush1.msra.mxu0 0.0
          %2256 = vmatprep.subr.mxu0 0.0
          %2257 = vmatpush1.msra.mxu0 0.0
          %2258 = vmatprep.subr.mxu0 0.0
          %2259 = vmatpush1.msra.mxu0 0.0
          %2260 = vmatprep.subr.mxu0 0.0
          %2261 = vmatpush1.msra.mxu0 0.0
          %2262 = vmatprep.subr.mxu0 0.0
          %2263 = vmatpush1.msra.mxu0 0.0
          %2264 = vmatprep.subr.mxu0 0.0
          %2265 = vmatpush1.msra.mxu0 0.0
          %2266 = vmatprep.subr.mxu0 0.0
          %2267 = vmatpush1.msra.mxu0 0.0
          %2268 = vmatprep.subr.mxu0 0.0
          %2269 = vmatpush1.msra.mxu0 0.0
          %2270 = vmatprep.subr.mxu0 0.0
          %2271 = vmatpush1.msra.mxu0 0.0
          %2272 = vmatprep.subr.mxu0 0.0
          %2273 = vmatpush1.msra.mxu0 0.0
          %2274 = vmatprep.subr.mxu0 0.0
          %2275 = vmatpush1.msra.mxu0 0.0
          %2276 = vmatprep.subr.mxu0 0.0
          %2277 = vmatpush1.msra.mxu0 %v2237
          %2278 = vmatprep.subr.mxu0 0.0
          %2279 = vmatpush1.msra.mxu0 %v2236
          %2280 = vmatprep.subr.mxu0 0.0
          %2281 = vmatpush2.msra.mxu0 0.0
          %2282 = vmatprep.subr.mxu0 0.0
          %2283 = vmatpush2.msra.mxu0 0.0
          %2284 = vmatprep.subr.mxu0 0.0
          %2285 = vmatpush2.msra.mxu0 0.0
          %2286 = vmatprep.subr.mxu0 0.0
          %2287 = vmatpush2.msra.mxu0 0.0
          %2288 = vmatprep.subr.mxu0 0.0
          %2289 = vmatpush2.msra.mxu0 0.0
          %2290 = vmatprep.subr.mxu0 0.0
          %2291 = vmatpush2.msra.mxu0 0.0
          %2292 = vmatprep.subr.mxu0 0.0
          %2293 = vmatpush2.msra.mxu0 0.0
          %2294 = vmatprep.subr.mxu0 0.0
          %2295 = vmatpush2.msra.mxu0 0.0
          %2296 = vmatprep.subr.mxu0 0.0
          %2297 = vmatpush2.msra.mxu0 0.0
          %2298 = vmatprep.subr.mxu0 0.0
          %2299 = vmatpush2.msra.mxu0 0.0
          %2300 = vmatprep.subr.mxu0 0.0
          %2301 = vmatpush2.msra.mxu0 0.0
          %2302 = vmatprep.subr.mxu0 0.0
          %2303 = vmatpush2.msra.mxu0 0.0
          %2304 = vmatprep.subr.mxu0 0.0
          %2305 = vmatpush2.msra.mxu0 0.0
          %2306 = vmatprep.subr.mxu0 0.0
          %2307 = vmatpush2.msra.mxu0 0.0
          %2308 = vmatprep.subr.mxu0 0.0
          %2309 = vmatpush2.msra.mxu0 0.0
          %2310 = vmatprep.subr.mxu0 0.0
          %2311 = vmatpush2.msra.mxu0 0.0
          %2312 = vmatprep.mubr.f32.mxu0 0.0
          %2313 = vmatmul.mubr.f32.gmra.mxu0 %v2246
          %v2314 = vpop.f32.mrf.mxu0
          %v2315 = vadd.f32 0.0, %v2314
          %v2316 = vpop.f32.mrf.mxu0
          %2317 = vdwg.mxu0
          %v2318 = vld [vmem:[%s23] sm:$0xf]
          %v2319 = vld [vmem:[%s23 + $0x4] sm:$0xf]
          %v2320 = vld [vmem:[%s23 + $0x8] sm:$0xf]
          %v2321 = vld [vmem:[%s23 + $0xc] sm:$0xf]
          %v2322 = vpack.c.bf16 %v2315, %v2315
          %v2323 = vld [vmem:[%s24] sm:$0x1]
          %v2325 = vlaneseq
          %v2326 = vshrl.u32 %v2325, 7
          %v2327 = vsub.s32 0, %v2326
          %v2328 = vrot.slane %v2323, %v2327
          %v2334 = vunpack.c.l.b16 %v2318
          %v2335 = vunpack.c.l.b16 %v2319
          %v2336 = vunpack.c.l.b16 %v2320
          %v2337 = vunpack.c.l.b16 %v2321
          %v2338 = vpack.c.b16 %v2335, %v2334
          %v2339 = vpack.c.b16 %v2337, %v2336
          %v2343 = vsel %vm1244, %v2322, 0
          %2345 = vmatprep.subr.bf16.mxu0 0
          %2346 = vmatpush1.bf16.msra.mxu0 0
          %2347 = vmatprep.subr.bf16.mxu0 0
          %2348 = vmatpush1.bf16.msra.mxu0 0
          %2349 = vmatprep.subr.bf16.mxu0 0
          %2350 = vmatpush1.bf16.msra.mxu0 0
          %2351 = vmatprep.subr.bf16.mxu0 0
          %2352 = vmatpush1.bf16.msra.mxu0 0
          %2353 = vmatprep.subr.bf16.mxu0 0
          %2354 = vmatpush1.bf16.msra.mxu0 0
          %2355 = vmatprep.subr.bf16.mxu0 0
          %2356 = vmatpush1.bf16.msra.mxu0 0
          %2357 = vmatprep.subr.bf16.mxu0 0
          %2358 = vmatpush1.bf16.msra.mxu0 %v2339
          %2359 = vmatprep.subr.bf16.mxu0 0
          %2360 = vmatpush1.bf16.msra.mxu0 %v2338
          %2361 = vmatprep.subr.bf16.mxu0 0
          %2362 = vmatpush2.bf16.msra.mxu0 0
          %2363 = vmatprep.subr.bf16.mxu0 0
          %2364 = vmatpush2.bf16.msra.mxu0 0
          %2365 = vmatprep.subr.bf16.mxu0 0
          %2366 = vmatpush2.bf16.msra.mxu0 0
          %2367 = vmatprep.subr.bf16.mxu0 0
          %2368 = vmatpush2.bf16.msra.mxu0 0
          %2369 = vmatprep.subr.bf16.mxu0 0
          %2370 = vmatpush2.bf16.msra.mxu0 0
          %2371 = vmatprep.subr.bf16.mxu0 0
          %2372 = vmatpush2.bf16.msra.mxu0 0
          %2373 = vmatprep.subr.bf16.mxu0 0
          %2374 = vmatpush2.bf16.msra.mxu0 0
          %2375 = vmatprep.subr.bf16.mxu0 0
          %2376 = vmatpush2.bf16.msra.mxu0 0
          %2377 = vmatprep.mubr.bf16.mxu0 0
          %2378 = vmatmul.mubr.bf16.gmra.mxu0 %v2343
          %v2379 = vpop.f32.mrf.mxu0
          %v2380 = vadd.f32 %v2328, %v2379
          %v2381 = vpop.f32.mrf.mxu0
          %v2382 = vpop.f32.mrf.mxu0
          %v2383 = vpop.f32.mrf.mxu0
          %2384 = vdwg.mxu0
          %v2385 = vtanh.pop %v2380
          %v2386 = vld [vmem:[%s25] sm:$0xf]
          %v2387 = vld [vmem:[%s25 + $0x4] sm:$0xf]
          %v2388 = vld [vmem:[%s25 + $0x8] sm:$0xf]
          %v2389 = vld [vmem:[%s25 + $0xc] sm:$0xf]
          %v2390 = vpack.c.bf16 %v2385, %v2385
          %v2391 = vld [vmem:[%s26] sm:$0x1]
          %v2393 = vlaneseq
          %v2394 = vshrl.u32 %v2393, 7
          %v2395 = vsub.s32 0, %v2394
          %v2396 = vrot.slane %v2391, %v2395
          %v2402 = vunpack.c.l.b16 %v2386
          %v2403 = vunpack.c.l.b16 %v2387
          %v2404 = vunpack.c.l.b16 %v2388
          %v2405 = vunpack.c.l.b16 %v2389
          %v2406 = vpack.c.b16 %v2403, %v2402
          %v2407 = vpack.c.b16 %v2405, %v2404
          %v2411 = vsel %vm1244, %v2390, 0
          %2413 = vmatprep.subr.bf16.mxu0 0
          %2414 = vmatpush1.bf16.msra.mxu0 0
          %2415 = vmatprep.subr.bf16.mxu0 0
          %2416 = vmatpush1.bf16.msra.mxu0 0
          %2417 = vmatprep.subr.bf16.mxu0 0
          %2418 = vmatpush1.bf16.msra.mxu0 0
          %2419 = vmatprep.subr.bf16.mxu0 0
          %2420 = vmatpush1.bf16.msra.mxu0 0
          %2421 = vmatprep.subr.bf16.mxu0 0
          %2422 = vmatpush1.bf16.msra.mxu0 0
          %2423 = vmatprep.subr.bf16.mxu0 0
          %2424 = vmatpush1.bf16.msra.mxu0 0
          %2425 = vmatprep.subr.bf16.mxu0 0
          %2426 = vmatpush1.bf16.msra.mxu0 %v2407
          %2427 = vmatprep.subr.bf16.mxu0 0
          %2428 = vmatpush1.bf16.msra.mxu0 %v2406
          %2429 = vmatprep.subr.bf16.mxu0 0
          %2430 = vmatpush2.bf16.msra.mxu0 0
          %2431 = vmatprep.subr.bf16.mxu0 0
          %2432 = vmatpush2.bf16.msra.mxu0 0
          %2433 = vmatprep.subr.bf16.mxu0 0
          %2434 = vmatpush2.bf16.msra.mxu0 0
          %2435 = vmatprep.subr.bf16.mxu0 0
          %2436 = vmatpush2.bf16.msra.mxu0 0
          %2437 = vmatprep.subr.bf16.mxu0 0
          %2438 = vmatpush2.bf16.msra.mxu0 0
          %2439 = vmatprep.subr.bf16.mxu0 0
          %2440 = vmatpush2.bf16.msra.mxu0 0
          %2441 = vmatprep.subr.bf16.mxu0 0
          %2442 = vmatpush2.bf16.msra.mxu0 0
          %2443 = vmatprep.subr.bf16.mxu0 0
          %2444 = vmatpush2.bf16.msra.mxu0 0
          %2445 = vmatprep.mubr.bf16.mxu0 0
          %2446 = vmatmul.mubr.bf16.gmra.mxu0 %v2411
          %v2447 = vpop.f32.mrf.mxu0
          %v2448 = vadd.f32 %v2396, %v2447
          %v2449 = vpop.f32.mrf.mxu0
          %v2450 = vpop.f32.mrf.mxu0
          %v2451 = vpop.f32.mrf.mxu0
          %2452 = vdwg.mxu0
          %2453 = vst [vmem:[#allocation3] sm:$0x3] %v2448
        $region136: #{bert_classifier_forward.1} parent=127 // pred_fallthru
          _
        // Predicated region
        $region137: #{bert_classifier_forward.1} parent=127 // pred_check
          %p2454 = pneg %p699
        $region138: #{bert_classifier_forward.1} parent=127 // pred_check_branch
          %2456 = sbr.rel (%p2454) target = $region140
        $region139: #{bert_classifier_forward.1} parent=127 // pred_region
          %s2458 = ssub.s32 32, 32
          %2459 = vsyncadd [#allocation4], %s2458
          %s2461 = sshll.u32 [#allocation3], 4
          %s2462 = int_to_ptr.vmem [resolvable:$true] %s2461
          %2464 = dma.vmem_to_hbm [thread:$0]  %s2462, 32, %s27, [#allocation4]
        $region140: #{bert_classifier_forward.1} parent=127 // pred_fallthru
          _
        // Predicated region
        $region141: #{bert_classifier_forward.1} parent=127 // pred_check
          %p2465 = pneg %p699
        $region142: #{bert_classifier_forward.1} parent=127 // pred_check_branch
          %2467 = sbr.rel (%p2465) target = $region144
        $region143: #{bert_classifier_forward.1} parent=127 // pred_region
          %2468 = dma.done [#allocation4], 32
        $region144: #{bert_classifier_forward.1} parent=127 // pred_fallthru
          _
      $region128: #{bert_classifier_forward.1} parent=5 // pred_fallthru
        _
      %p2469 = scmp.le.s32.totalorder 2, %s34
      // Predicated region
      $region145: #{bert_classifier_forward.1} parent=5 // pred_check
        %p2470 = pneg %p2469
      $region146: #{bert_classifier_forward.1} parent=5 // pred_check_branch
        %2472 = sbr.rel (%p2470) target = $region148
      $region147: #{bert_classifier_forward.1} parent=5 // pred_region
        %s2473 = ssub.s32 %s34, 2
      $region148: #{bert_classifier_forward.1} parent=5 // pred_fallthru
        _
    $region6: #{bert_classifier_forward.1} parent=1 // loop_footer
      %s38 = sadd.s32 1, %s34
    $region7: #{bert_classifier_forward.1} parent=1 // loop_footer_branch
      %33 = sbr.rel target = $region3
    $region8: #{bert_classifier_forward.1} parent=1 // loop_exit
      _
    %2474 = vsyncpa [#allocation4], 1
    %s2475 = scalar_lea.sflag [#allocation4], 1
    %2476 = vsyncpa %s2475, 1

</llo_original>
